<compile_context>
chip_gen: v6e
topology: v6e:2x2x1
jax: 0.10.0
libtpu: 0.0.40
codegen_flags: <defaults>
</compile_context>

<pallas_src>
import numpy as np
import jax
import jax.numpy as jnp
from jax import lax
from jax.experimental import pallas as pl
from jax.experimental.pallas import tpu as pltpu

BN_EPS = 1e-5
WEIGHT_DTYPE = jnp.bfloat16   # storage dtype of the big GEMM slabs (f32 accumulation in-kernel)


# ----------------------------------------------------------------- model dimensions

def _layer_dims(opts):
    conv_dims_in = [opts.part_embed_dim + opts.z_dim]
    conv_dims_out = []
    for i in range(opts.num_conv_layers):
        powers = min(3, opts.num_conv_layers - 1 - i)
        conv_dims_in.append(opts.conv_dim * (2 ** powers) * 3)
        conv_dims_out.append(opts.conv_dim * (2 ** powers))
    conv_dims_out.append(opts.c_dim)
    return conv_dims_in, conv_dims_out


# ----------------------------------------------------------------- fused Pallas kernel

def _bn_relu_flat(h, p, pt, gamma, beta, n_per_chan):
    """Training-mode BatchNorm2d + ReLU on a channels-last-flat activation.

    h:  (B, H*W*C) f32, column index = (h*W + w)*C + c
    p:  (H*W*C, C) 0/1 pooling matrix, pt = p.T  -> per-channel stats / broadcast via matmul,
        so no in-kernel reshape or transpose is ever needed.
    gamma, beta: (1, C)
    """
    s1 = jnp.sum(h, axis=0, keepdims=True)
    s2 = jnp.sum(h * h, axis=0, keepdims=True)
    sums = jnp.dot(jnp.concatenate([s1, s2], axis=0), p,
                   preferred_element_type=jnp.float32) / float(n_per_chan)   # (2, C)
    mean_c = sums[0:1, :]
    var_c = sums[1:2, :] - mean_c * mean_c            # biased variance (PyTorch train mode)
    scale_c = gamma * lax.rsqrt(var_c + BN_EPS)       # (1, C)  folded gamma / sqrt(var+eps)
    shift_c = beta - mean_c * scale_c                 # (1, C)
    sf = jnp.dot(jnp.concatenate([scale_c, shift_c], axis=0), pt,
                 preferred_element_type=jnp.float32)  # (2, H*W*C): broadcast back, lane-dense
    return jnp.maximum(h * sf[0:1, :] + sf[1:2, :], 0.0)


def _make_fused_kernel(n_layers):
    """Build the single fused kernel (n_layers = num_conv_layers + 1, >= 2).

    Ref order (positional):
      refs[0]                    : x0      (B, Din)        flattened embed||z
      refs[1 : n_layers]         : m_flat  (B, H_l*W_l*2C_l) for l = 0..n_layers-2 (channels-last)
      refs[n_layers : -n_layers] : parameters grouped per layer:
            layer 0            -> w0 (Din, H0*W0*C0), b0, p0, p0t, gamma0, beta0
            layers 1..n-2      -> wa, wb, brow, p, pt, gamma, beta
            layer n-1 (tanh)   -> wa, wb, brow
      refs[-n_layers:]           : y_out[l] (B, H_l*W_l*C_l)  channels-last flat outputs
    Everything lives in VMEM for the whole call; intermediates never touch HBM.
    """
    def kernel(*refs):
        f32, bf16 = jnp.float32, jnp.bfloat16
        x0 = refs[0]
        m_flat = refs[1:n_layers]
        outs = refs[len(refs) - n_layers:]
        prm = refs[n_layers:len(refs) - n_layers]
        batch = x0.shape[0]

        pi = 0
        y = None
        for l in range(n_layers):
            if l == 0:
                w, b, p, pt, ga, be = prm[pi:pi + 6]
                pi += 6
                h = jnp.dot(x0[...].astype(bf16), w[...],
                            preferred_element_type=f32) + b[...]
            else:
                if l < n_layers - 1:
                    wa, wb, b, p, pt, ga, be = prm[pi:pi + 7]
                    pi += 7
                else:
                    wa, wb, b = prm[pi:pi + 3]
                    pi += 3
                # ConvTranspose2d as a dense channels-last GEMM, split into the
                # [generated | m] input-channel groups (torch.cat never materialized).
                h = (jnp.dot(y.astype(bf16), wa[...], preferred_element_type=f32)
                     + jnp.dot(m_flat[l - 1][...].astype(bf16), wb[...],
                               preferred_element_type=f32)
                     + b[...])
            if l < n_layers - 1:
                n_per_chan = batch * (p.shape[0] // p.shape[1])   # B * H * W
                y = _bn_relu_flat(h, p[...], pt[...], ga[...], be[...], n_per_chan)
            else:
                y = jnp.tanh(h)
            outs[l][...] = y                                       # lane-dense store

    return kernel


# ----------------------------------------------------------------- parameters

def init_params(opts, key):
    """Parameters in the PyTorch module's layouts (Linear: (out,in); ConvT: (Cin,Cout,K,K)).

    Weights are snapped to bf16-representable values so the kernel's bf16 weight storage is
    exact and the f32 reference uses numerically identical weights."""
    conv_dims_in, conv_dims_out = _layer_dims(opts)
    k0 = opts.output_size // (2 ** opts.num_conv_layers)
    n_layers = opts.num_conv_layers + 1
    keys = iter(jax.random.split(key, 4 * n_layers + 4))

    def snap(x):
        return x.astype(jnp.bfloat16).astype(jnp.float32)

    params = {}
    dout0 = conv_dims_out[0] * k0 * k0
    params['lin_w'] = snap(0.1 * jax.random.normal(next(keys), (dout0, conv_dims_in[0]),
                                                   jnp.float32))
    params['lin_b'] = 0.1 * jax.random.normal(next(keys), (dout0,), jnp.float32)

    convT_w, convT_b = [None], [None]
    for i in range(1, n_layers):
        convT_w.append(snap(0.1 * jax.random.normal(
            next(keys), (conv_dims_in[i], conv_dims_out[i], 5, 5), jnp.float32)))
        convT_b.append(0.1 * jax.random.normal(next(keys), (conv_dims_out[i],), jnp.float32))
    params['convT_w'], params['convT_b'] = convT_w, convT_b

    bn_gamma, bn_beta = [], []
    for i in range(opts.num_conv_layers):
        bn_gamma.append(1.0 + 0.1 * jax.random.normal(next(keys), (conv_dims_out[i],),
                                                      jnp.float32))
        bn_beta.append(0.1 * jax.random.normal(next(keys), (conv_dims_out[i],), jnp.float32))
    params['bn_gamma'], params['bn_beta'] = bn_gamma, bn_beta
    return params


def _densify_convT(w_sub, h_in, w_in, h_out, w_out, stride=2, padding=2):
    """Dense GEMM matrix for ConvTranspose2d restricted to an input-channel group.

    in_flat[b, (ih*w_in+iw)*Cin + ci] @ D == convT(x)_flat[b, (oh*w_out+ow)*Cout + co]
    with oh = ih*stride - padding + kh, ow = iw*stride - padding + kw (PyTorch semantics,
    weight layout (Cin, Cout, K, K), no kernel flip)."""
    cin, cout, K, _ = w_sub.shape
    D = np.zeros((h_in * w_in * cin, h_out * w_out * cout), np.float32)
    for ih in range(h_in):
        for iw in range(w_in):
            r0 = (ih * w_in + iw) * cin
            for kh in range(K):
                oh = ih * stride - padding + kh
                if oh < 0 or oh >= h_out:
                    continue
                for kw in range(K):
                    ow = iw * stride - padding + kw
                    if ow < 0 or ow >= w_out:
                        continue
                    c0 = (oh * w_out + ow) * cout
                    D[r0:r0 + cin, c0:c0 + cout] += w_sub[:, :, kh, kw]
    return D


def prepare_params(params, opts):
    """One-time preprocessing of PyTorch-layout parameters into the flat operand list consumed
    by the fused kernel.  All weight-side permutations / flips / densification happen here,
    never per forward pass."""
    conv_dims_in, conv_dims_out = _layer_dims(opts)
    n_layers = opts.num_conv_layers + 1
    k0 = opts.output_size // (2 ** opts.num_conv_layers)
    assert opts.output_size == 4 * (2 ** opts.num_conv_layers), \
        "forward() hard-codes a 4x4 first feature map (as the PyTorch module does)"

    def chan_row(v):
        return jnp.asarray(np.asarray(v, np.float32)[None, :])

    ops = []

    # layer 0: Linear -- columns permuted from PyTorch (c, h, w) order to channels-last (h, w, c)
    c0, din = conv_dims_out[0], conv_dims_in[0]
    lin_w = np.asarray(params['lin_w'], np.float32)                       # (c0*k0*k0, din)
    lin_b = np.asarray(params['lin_b'], np.float32)
    w0 = lin_w.reshape(c0, k0, k0, din).transpose(1, 2, 0, 3).reshape(k0 * k0 * c0, din).T
    b0 = lin_b.reshape(c0, k0, k0).transpose(1, 2, 0).reshape(1, -1)
    p0 = np.tile(np.eye(c0, dtype=np.float32), (k0 * k0, 1))              # (k0*k0*c0, c0)
    ops += [jnp.asarray(w0, WEIGHT_DTYPE), jnp.asarray(b0),
            jnp.asarray(p0), jnp.asarray(np.ascontiguousarray(p0.T)),
            chan_row(params['bn_gamma'][0]), chan_row(params['bn_beta'][0])]

    # layers 1..n-1: ConvTranspose2d(k=5, s=2, p=2) densified per input-channel group
    for l in range(1, n_layers):
        h_in = k0 * (2 ** (l - 1))
        h_out = 2 * h_in
        cin, cout = conv_dims_in[l], conv_dims_out[l]
        cgen = conv_dims_out[l - 1]                  # generated channels of the previous layer
        assert cin == 3 * cgen                       # [generated | m] channel split
        w_t = np.asarray(params['convT_w'][l], np.float32)                # (cin, cout, 5, 5)
        b_t = np.asarray(params['convT_b'][l], np.float32)
        wa = _densify_convT(w_t[:cgen], h_in, h_in, h_out, h_out)
        wb = _densify_convT(w_t[cgen:], h_in, h_in, h_out, h_out)
        brow = np.tile(b_t, h_out * h_out)[None, :]
        ops += [jnp.asarray(wa, WEIGHT_DTYPE), jnp.asarray(wb, WEIGHT_DTYPE),
                jnp.asarray(brow)]
        if l < n_layers - 1:
            p = np.tile(np.eye(cout, dtype=np.float32), (h_out * h_out, 1))
            ops += [jnp.asarray(p), jnp.asarray(np.ascontiguousarray(p.T)),
                    chan_row(params['bn_gamma'][l]), chan_row(params['bn_beta'][l])]
    return ops


# ----------------------------------------------------------------- forward wrapper

def image_generator_forward(prepped_ops, embed, z, m, opts):
    """Faithful port of ImageGenerator.forward; returns the list `g` (NCHW, like PyTorch).

    The whole network runs inside one pallas_call; this wrapper only does layout plumbing
    (flatten to channels-last on the way in, un-flatten + concat with m[i] on the way out)."""
    conv_dims_in, conv_dims_out = _layer_dims(opts)
    n_layers = opts.num_conv_layers + 1
    assert len(m) == n_layers, "forward expects len(m) == num_conv_layers + 1"
    k0 = opts.output_size // (2 ** opts.num_conv_layers)
    sizes = [k0 * (2 ** l) for l in range(n_layers)]
    B = embed.shape[0]

    x0 = jnp.concatenate([embed, z], axis=1).reshape(B, -1)
    m_flat = [jnp.transpose(m[l], (0, 2, 3, 1)).reshape(B, -1) for l in range(n_layers - 1)]

    out_shape = tuple(
        jax.ShapeDtypeStruct((B, sizes[l] * sizes[l] * conv_dims_out[l]), jnp.float32)
        for l in range(n_layers))
    operands = [x0] + m_flat + list(prepped_ops)

    ys = pl.pallas_call(
        _make_fused_kernel(n_layers),
        out_shape=out_shape,
        in_specs=[pl.BlockSpec(memory_space=pltpu.MemorySpace.VMEM) for _ in operands],
        out_specs=tuple(pl.BlockSpec(memory_space=pltpu.MemorySpace.VMEM) for _ in out_shape),
    )(*operands)

    g = []
    for l in range(n_layers):
        s, c = sizes[l], conv_dims_out[l]
        gi = jnp.transpose(ys[l].reshape(B, s, s, c), (0, 3, 1, 2))       # back to NCHW
        if l < n_layers - 1:
            gi = jnp.concatenate([gi, m[l]], axis=1)                      # torch.cat([g, m], 1)
        g.append(gi)
    return g


# ----------------------------------------------------------------- pure-JAX reference

def reference_forward(params, embed, z, m, opts):
    """Pure-JAX f32 (HIGHEST matmul precision) re-implementation of the PyTorch forward,
    used only to validate the Pallas kernel numerically."""
    conv_dims_in, conv_dims_out = _layer_dims(opts)
    k0 = opts.output_size // (2 ** opts.num_conv_layers)
    B = embed.shape[0]
    embed_z = jnp.concatenate([embed, z], axis=1).reshape(B, -1)

    def bn_relu(x, gamma, beta):
        mean = jnp.mean(x, axis=(0, 2, 3), keepdims=True)
        var = jnp.mean((x - mean) ** 2, axis=(0, 2, 3), keepdims=True)
        y = (x - mean) * lax.rsqrt(var + BN_EPS)
        return jnp.maximum(y * gamma[None, :, None, None] + beta[None, :, None, None], 0.0)

    def conv_transpose(x, w_t, b, out_size, stride=2, padding=2):
        K = w_t.shape[2]
        out_pad = out_size - ((x.shape[2] - 1) * stride - 2 * padding + K)
        w_conv = jnp.transpose(w_t, (1, 0, 2, 3))[:, :, ::-1, ::-1]       # (Cout,Cin,K,K) flipped
        y = lax.conv_general_dilated(
            x, w_conv, window_strides=(1, 1),
            padding=[(K - 1 - padding, K - 1 - padding + out_pad)] * 2,
            lhs_dilation=(stride, stride),
            dimension_numbers=('NCHW', 'OIHW', 'NCHW'),
            precision=lax.Precision.HIGHEST)
        return y + b[None, :, None, None]

    g = []
    for i in range(len(m)):
        if i == 0:
            lin = jnp.dot(embed_z, params['lin_w'].T,
                          precision=lax.Precision.HIGHEST) + params['lin_b']
            gi = lin.reshape(B, conv_dims_out[0], k0, k0)
            gi = bn_relu(gi, params['bn_gamma'][0], params['bn_beta'][0])
            gi = jnp.concatenate([gi, m[0]], axis=1)
        else:
            y = conv_transpose(g[i - 1], params['convT_w'][i], params['convT_b'][i],
                               k0 * (2 ** i))
            if i == len(m) - 1:
                gi = jnp.tanh(y)
            else:
                gi = bn_relu(y, params['bn_gamma'][i], params['bn_beta'][i])
                gi = jnp.concatenate([gi, m[i]], axis=1)
        g.append(gi)
    return g


# ----------------------------------------------------------------- main

class Opts:
    part_embed_dim = 16
    z_dim = 16
    num_conv_layers = 2
    conv_dim = 4
    c_dim = 3
    output_size = 16   # = 4 * 2**num_conv_layers


if __name__ == "__main__":
    opts = Opts()
    conv_dims_in, conv_dims_out = _layer_dims(opts)

    key = jax.random.PRNGKey(0)
    k_embed, k_z, k_m0, k_m1, k_m2, k_params = jax.random.split(key, 6)

    B = 2
    embed = jax.random.normal(k_embed, (B, opts.part_embed_dim, 1, 1), jnp.float32)
    z = jax.random.normal(k_z, (B, opts.z_dim, 1, 1), jnp.float32)
    # m[i] supplies the 2*conv_dims_out[i] extra channels concatenated after layer i.
    m = [
        jax.random.normal(k_m0, (B, 2 * conv_dims_out[0], 4, 4), jnp.float32),
        jax.random.normal(k_m1, (B, 2 * conv_dims_out[1], 8, 8), jnp.float32),
        jax.random.normal(k_m2, (B, 2 * conv_dims_out[2], 16, 16), jnp.float32),  # unused (last layer)
    ]

    params = init_params(opts, k_params)
    prepped = prepare_params(params, opts)

    fwd = jax.jit(lambda ops, e, zz, mm: image_generator_forward(ops, e, zz, mm, opts))
    g = fwd(prepped, embed, z, m)
    g = [jax.block_until_ready(t) for t in g]

    # expected: g[0] (B,24,4,4), g[1] (B,12,8,8), g[2] (B,3,16,16)
    assert g[0].shape == (B, 3 * conv_dims_out[0], 4, 4)
    assert g[1].shape == (B, 3 * conv_dims_out[1], 8, 8)
    assert g[2].shape == (B, opts.c_dim, 16, 16)

    # numerical check against a pure-JAX f32 reference of the PyTorch forward
    # (tolerance covers the bf16 activation rounding on the MXU path).
    g_ref = reference_forward(params, embed, z, m, opts)
    for got, want in zip(g, g_ref):
        np.testing.assert_allclose(np.asarray(got), np.asarray(want), rtol=5e-2, atol=5e-2)

    print("KERNEL_OK")
</pallas_src>

<mosaic_0001>
module attributes {stable_mosaic.version = 11 : i64} {
  func.func @kernel(%arg0: memref<2x32xf32, #tpu.memory_space<vmem>>, %arg1: memref<2x256xf32, #tpu.memory_space<vmem>>, %arg2: memref<2x512xf32, #tpu.memory_space<vmem>>, %arg3: memref<32x128xbf16, #tpu.memory_space<vmem>>, %arg4: memref<1x128xf32, #tpu.memory_space<vmem>>, %arg5: memref<128x8xf32, #tpu.memory_space<vmem>>, %arg6: memref<8x128xf32, #tpu.memory_space<vmem>>, %arg7: memref<1x8xf32, #tpu.memory_space<vmem>>, %arg8: memref<1x8xf32, #tpu.memory_space<vmem>>, %arg9: memref<128x256xbf16, #tpu.memory_space<vmem>>, %arg10: memref<256x256xbf16, #tpu.memory_space<vmem>>, %arg11: memref<1x256xf32, #tpu.memory_space<vmem>>, %arg12: memref<256x4xf32, #tpu.memory_space<vmem>>, %arg13: memref<4x256xf32, #tpu.memory_space<vmem>>, %arg14: memref<1x4xf32, #tpu.memory_space<vmem>>, %arg15: memref<1x4xf32, #tpu.memory_space<vmem>>, %arg16: memref<256x768xbf16, #tpu.memory_space<vmem>>, %arg17: memref<512x768xbf16, #tpu.memory_space<vmem>>, %arg18: memref<1x768xf32, #tpu.memory_space<vmem>>, %arg19: memref<2x128xf32, #tpu.memory_space<vmem>>, %arg20: memref<2x256xf32, #tpu.memory_space<vmem>>, %arg21: memref<2x768xf32, #tpu.memory_space<vmem>>) attributes {dimension_semantics = [], scalar_prefetch = 0 : i64, scratch_operands = 0 : i64, tpu.core_type = #tpu.core_type<tc>} {
    %c0 = arith.constant 0 : index
    %c0_0 = arith.constant 0 : index
    %0 = vector.load %arg0[%c0, %c0_0] : memref<2x32xf32, #tpu.memory_space<vmem>>, vector<2x32xf32>
    %1 = arith.truncf %0 : vector<2x32xf32> to vector<2x32xbf16>
    %c0_1 = arith.constant 0 : index
    %c0_2 = arith.constant 0 : index
    %2 = vector.load %arg3[%c0_1, %c0_2] : memref<32x128xbf16, #tpu.memory_space<vmem>>, vector<32x128xbf16>
    %cst = arith.constant dense<0.000000e+00> : vector<2x128xf32>
    %3 = tpu.matmul %1, %2, %cst {dimension_numbers = #tpu.dot_dimension_numbers<[1], [0], [0], [1], [0, 0, 1, 1], [], []>} : vector<2x32xbf16>, vector<32x128xbf16>, vector<2x128xf32> -> vector<2x128xf32>
    %c0_3 = arith.constant 0 : index
    %c0_4 = arith.constant 0 : index
    %4 = vector.load %arg4[%c0_3, %c0_4] : memref<1x128xf32, #tpu.memory_space<vmem>>, vector<1x128xf32>
    %5 = vector.broadcast %4 : vector<1x128xf32> to vector<2x128xf32>
    %6 = arith.addf %3, %5 : vector<2x128xf32>
    %c0_5 = arith.constant 0 : index
    %c0_6 = arith.constant 0 : index
    %7 = vector.load %arg5[%c0_5, %c0_6] : memref<128x8xf32, #tpu.memory_space<vmem>>, vector<128x8xf32>
    %c0_7 = arith.constant 0 : index
    %c0_8 = arith.constant 0 : index
    %8 = vector.load %arg6[%c0_7, %c0_8] : memref<8x128xf32, #tpu.memory_space<vmem>>, vector<8x128xf32>
    %c0_9 = arith.constant 0 : index
    %c0_10 = arith.constant 0 : index
    %9 = vector.load %arg7[%c0_9, %c0_10] : memref<1x8xf32, #tpu.memory_space<vmem>>, vector<1x8xf32>
    %c0_11 = arith.constant 0 : index
    %c0_12 = arith.constant 0 : index
    %10 = vector.load %arg8[%c0_11, %c0_12] : memref<1x8xf32, #tpu.memory_space<vmem>>, vector<1x8xf32>
    %cst_13 = arith.constant dense<0.000000e+00> : vector<128xf32>
    %11 = vector.multi_reduction <add>, %6, %cst_13 [0] : vector<2x128xf32> to vector<128xf32>
    %12 = vector.shape_cast %11 : vector<128xf32> to vector<1x128xf32>
    %13 = arith.mulf %6, %6 : vector<2x128xf32>
    %cst_14 = arith.constant dense<0.000000e+00> : vector<128xf32>
    %14 = vector.multi_reduction <add>, %13, %cst_14 [0] : vector<2x128xf32> to vector<128xf32>
    %15 = vector.shape_cast %14 : vector<128xf32> to vector<1x128xf32>
    %16 = tpu.concatenate %12, %15 in 0 : vector<1x128xf32>, vector<1x128xf32> -> vector<2x128xf32>
    %cst_15 = arith.constant dense<0.000000e+00> : vector<2x8xf32>
    %17 = tpu.matmul %16, %7, %cst_15 {dimension_numbers = #tpu.dot_dimension_numbers<[1], [0], [0], [1], [0, 0, 1, 1], [], []>} : vector<2x128xf32>, vector<128x8xf32>, vector<2x8xf32> -> vector<2x8xf32>
    %cst_16 = arith.constant 3.200000e+01 : f32
    %18 = vector.broadcast %cst_16 : f32 to vector<2x8xf32>
    %19 = arith.divf %17, %18 : vector<2x8xf32>
    %20 = vector.extract_strided_slice %19 {offsets = [0, 0], sizes = [1, 8], strides = [1, 1]} : vector<2x8xf32> to vector<1x8xf32>
    %21 = vector.extract_strided_slice %19 {offsets = [1, 0], sizes = [1, 8], strides = [1, 1]} : vector<2x8xf32> to vector<1x8xf32>
    %22 = arith.mulf %20, %20 : vector<1x8xf32>
    %23 = arith.subf %21, %22 : vector<1x8xf32>
    %cst_17 = arith.constant 9.99999974E-6 : f32
    %24 = vector.broadcast %cst_17 : f32 to vector<1x8xf32>
    %25 = arith.addf %23, %24 : vector<1x8xf32>
    %26 = math.rsqrt %25 : vector<1x8xf32>
    %27 = arith.mulf %9, %26 : vector<1x8xf32>
    %28 = arith.mulf %20, %27 : vector<1x8xf32>
    %29 = arith.subf %10, %28 : vector<1x8xf32>
    %30 = tpu.concatenate %27, %29 in 0 : vector<1x8xf32>, vector<1x8xf32> -> vector<2x8xf32>
    %cst_18 = arith.constant dense<0.000000e+00> : vector<2x128xf32>
    %31 = tpu.matmul %30, %8, %cst_18 {dimension_numbers = #tpu.dot_dimension_numbers<[1], [0], [0], [1], [0, 0, 1, 1], [], []>} : vector<2x8xf32>, vector<8x128xf32>, vector<2x128xf32> -> vector<2x128xf32>
    %32 = vector.extract_strided_slice %31 {offsets = [0, 0], sizes = [1, 128], strides = [1, 1]} : vector<2x128xf32> to vector<1x128xf32>
    %33 = vector.broadcast %32 : vector<1x128xf32> to vector<2x128xf32>
    %34 = arith.mulf %6, %33 : vector<2x128xf32>
    %35 = vector.extract_strided_slice %31 {offsets = [1, 0], sizes = [1, 128], strides = [1, 1]} : vector<2x128xf32> to vector<1x128xf32>
    %36 = vector.broadcast %35 : vector<1x128xf32> to vector<2x128xf32>
    %37 = arith.addf %34, %36 : vector<2x128xf32>
    %cst_19 = arith.constant 0.000000e+00 : f32
    %38 = vector.broadcast %cst_19 : f32 to vector<2x128xf32>
    %39 = arith.maximumf %37, %38 : vector<2x128xf32>
    %c0_20 = arith.constant 0 : index
    %c0_21 = arith.constant 0 : index
    %40 = vector.load %arg19[%c0_20, %c0_21] : memref<2x128xf32, #tpu.memory_space<vmem>>, vector<2x128xf32>
    tpu.vector_store %arg19[%c0_20, %c0_21], %39 {strides = array<i32>} : memref<2x128xf32, #tpu.memory_space<vmem>>, vector<2x128xf32>,
    %41 = arith.truncf %39 : vector<2x128xf32> to vector<2x128xbf16>
    %c0_22 = arith.constant 0 : index
    %c0_23 = arith.constant 0 : index
    %42 = vector.load %arg9[%c0_22, %c0_23] : memref<128x256xbf16, #tpu.memory_space<vmem>>, vector<128x256xbf16>
    %cst_24 = arith.constant dense<0.000000e+00> : vector<2x256xf32>
    %43 = tpu.matmul %41, %42, %cst_24 {dimension_numbers = #tpu.dot_dimension_numbers<[1], [0], [0], [1], [0, 0, 1, 1], [], []>} : vector<2x128xbf16>, vector<128x256xbf16>, vector<2x256xf32> -> vector<2x256xf32>
    %c0_25 = arith.constant 0 : index
    %c0_26 = arith.constant 0 : index
    %44 = vector.load %arg1[%c0_25, %c0_26] : memref<2x256xf32, #tpu.memory_space<vmem>>, vector<2x256xf32>
    %45 = arith.truncf %44 : vector<2x256xf32> to vector<2x256xbf16>
    %c0_27 = arith.constant 0 : index
    %c0_28 = arith.constant 0 : index
    %46 = vector.load %arg10[%c0_27, %c0_28] : memref<256x256xbf16, #tpu.memory_space<vmem>>, vector<256x256xbf16>
    %cst_29 = arith.constant dense<0.000000e+00> : vector<2x256xf32>
    %47 = tpu.matmul %45, %46, %cst_29 {dimension_numbers = #tpu.dot_dimension_numbers<[1], [0], [0], [1], [0, 0, 1, 1], [], []>} : vector<2x256xbf16>, vector<256x256xbf16>, vector<2x256xf32> -> vector<2x256xf32>
    %48 = arith.addf %43, %47 : vector<2x256xf32>
    %c0_30 = arith.constant 0 : index
    %c0_31 = arith.constant 0 : index
    %49 = vector.load %arg11[%c0_30, %c0_31] : memref<1x256xf32, #tpu.memory_space<vmem>>, vector<1x256xf32>
    %50 = vector.broadcast %49 : vector<1x256xf32> to vector<2x256xf32>
    %51 = arith.addf %48, %50 : vector<2x256xf32>
    %c0_32 = arith.constant 0 : index
    %c0_33 = arith.constant 0 : index
    %52 = vector.load %arg12[%c0_32, %c0_33] : memref<256x4xf32, #tpu.memory_space<vmem>>, vector<256x4xf32>
    %c0_34 = arith.constant 0 : index
    %c0_35 = arith.constant 0 : index
    %53 = vector.load %arg13[%c0_34, %c0_35] : memref<4x256xf32, #tpu.memory_space<vmem>>, vector<4x256xf32>
    %c0_36 = arith.constant 0 : index
    %c0_37 = arith.constant 0 : index
    %54 = vector.load %arg14[%c0_36, %c0_37] : memref<1x4xf32, #tpu.memory_space<vmem>>, vector<1x4xf32>
    %c0_38 = arith.constant 0 : index
    %c0_39 = arith.constant 0 : index
    %55 = vector.load %arg15[%c0_38, %c0_39] : memref<1x4xf32, #tpu.memory_space<vmem>>, vector<1x4xf32>
    %cst_40 = arith.constant dense<0.000000e+00> : vector<256xf32>
    %56 = vector.multi_reduction <add>, %51, %cst_40 [0] : vector<2x256xf32> to vector<256xf32>
    %57 = vector.shape_cast %56 : vector<256xf32> to vector<1x256xf32>
    %58 = arith.mulf %51, %51 : vector<2x256xf32>
    %cst_41 = arith.constant dense<0.000000e+00> : vector<256xf32>
    %59 = vector.multi_reduction <add>, %58, %cst_41 [0] : vector<2x256xf32> to vector<256xf32>
    %60 = vector.shape_cast %59 : vector<256xf32> to vector<1x256xf32>
    %61 = tpu.concatenate %57, %60 in 0 : vector<1x256xf32>, vector<1x256xf32> -> vector<2x256xf32>
    %cst_42 = arith.constant dense<0.000000e+00> : vector<2x4xf32>
    %62 = tpu.matmul %61, %52, %cst_42 {dimension_numbers = #tpu.dot_dimension_numbers<[1], [0], [0], [1], [0, 0, 1, 1], [], []>} : vector<2x256xf32>, vector<256x4xf32>, vector<2x4xf32> -> vector<2x4xf32>
    %cst_43 = arith.constant 1.280000e+02 : f32
    %63 = vector.broadcast %cst_43 : f32 to vector<2x4xf32>
    %64 = arith.divf %62, %63 : vector<2x4xf32>
    %65 = vector.extract_strided_slice %64 {offsets = [0, 0], sizes = [1, 4], strides = [1, 1]} : vector<2x4xf32> to vector<1x4xf32>
    %66 = vector.extract_strided_slice %64 {offsets = [1, 0], sizes = [1, 4], strides = [1, 1]} : vector<2x4xf32> to vector<1x4xf32>
    %67 = arith.mulf %65, %65 : vector<1x4xf32>
    %68 = arith.subf %66, %67 : vector<1x4xf32>
    %cst_44 = arith.constant 9.99999974E-6 : f32
    %69 = vector.broadcast %cst_44 : f32 to vector<1x4xf32>
    %70 = arith.addf %68, %69 : vector<1x4xf32>
    %71 = math.rsqrt %70 : vector<1x4xf32>
    %72 = arith.mulf %54, %71 : vector<1x4xf32>
    %73 = arith.mulf %65, %72 : vector<1x4xf32>
    %74 = arith.subf %55, %73 : vector<1x4xf32>
    %75 = tpu.concatenate %72, %74 in 0 : vector<1x4xf32>, vector<1x4xf32> -> vector<2x4xf32>
    %cst_45 = arith.constant dense<0.000000e+00> : vector<2x256xf32>
    %76 = tpu.matmul %75, %53, %cst_45 {dimension_numbers = #tpu.dot_dimension_numbers<[1], [0], [0], [1], [0, 0, 1, 1], [], []>} : vector<2x4xf32>, vector<4x256xf32>, vector<2x256xf32> -> vector<2x256xf32>
    %77 = vector.extract_strided_slice %76 {offsets = [0, 0], sizes = [1, 256], strides = [1, 1]} : vector<2x256xf32> to vector<1x256xf32>
    %78 = vector.broadcast %77 : vector<1x256xf32> to vector<2x256xf32>
    %79 = arith.mulf %51, %78 : vector<2x256xf32>
    %80 = vector.extract_strided_slice %76 {offsets = [1, 0], sizes = [1, 256], strides = [1, 1]} : vector<2x256xf32> to vector<1x256xf32>
    %81 = vector.broadcast %80 : vector<1x256xf32> to vector<2x256xf32>
    %82 = arith.addf %79, %81 : vector<2x256xf32>
    %cst_46 = arith.constant 0.000000e+00 : f32
    %83 = vector.broadcast %cst_46 : f32 to vector<2x256xf32>
    %84 = arith.maximumf %82, %83 : vector<2x256xf32>
    %c0_47 = arith.constant 0 : index
    %c0_48 = arith.constant 0 : index
    %85 = vector.load %arg20[%c0_47, %c0_48] : memref<2x256xf32, #tpu.memory_space<vmem>>, vector<2x256xf32>
    tpu.vector_store %arg20[%c0_47, %c0_48], %84 {strides = array<i32>} : memref<2x256xf32, #tpu.memory_space<vmem>>, vector<2x256xf32>,
    %86 = arith.truncf %84 : vector<2x256xf32> to vector<2x256xbf16>
    %c0_49 = arith.constant 0 : index
    %c0_50 = arith.constant 0 : index
    %87 = vector.load %arg16[%c0_49, %c0_50] : memref<256x768xbf16, #tpu.memory_space<vmem>>, vector<256x768xbf16>
    %cst_51 = arith.constant dense<0.000000e+00> : vector<2x768xf32>
    %88 = tpu.matmul %86, %87, %cst_51 {dimension_numbers = #tpu.dot_dimension_numbers<[1], [0], [0], [1], [0, 0, 1, 1], [], []>} : vector<2x256xbf16>, vector<256x768xbf16>, vector<2x768xf32> -> vector<2x768xf32>
    %c0_52 = arith.constant 0 : index
    %c0_53 = arith.constant 0 : index
    %89 = vector.load %arg2[%c0_52, %c0_53] : memref<2x512xf32, #tpu.memory_space<vmem>>, vector<2x512xf32>
    %90 = arith.truncf %89 : vector<2x512xf32> to vector<2x512xbf16>
    %c0_54 = arith.constant 0 : index
    %c0_55 = arith.constant 0 : index
    %91 = vector.load %arg17[%c0_54, %c0_55] : memref<512x768xbf16, #tpu.memory_space<vmem>>, vector<512x768xbf16>
    %cst_56 = arith.constant dense<0.000000e+00> : vector<2x768xf32>
    %92 = tpu.matmul %90, %91, %cst_56 {dimension_numbers = #tpu.dot_dimension_numbers<[1], [0], [0], [1], [0, 0, 1, 1], [], []>} : vector<2x512xbf16>, vector<512x768xbf16>, vector<2x768xf32> -> vector<2x768xf32>
    %93 = arith.addf %88, %92 : vector<2x768xf32>
    %c0_57 = arith.constant 0 : index
    %c0_58 = arith.constant 0 : index
    %94 = vector.load %arg18[%c0_57, %c0_58] : memref<1x768xf32, #tpu.memory_space<vmem>>, vector<1x768xf32>
    %95 = vector.broadcast %94 : vector<1x768xf32> to vector<2x768xf32>
    %96 = arith.addf %93, %95 : vector<2x768xf32>
    %97 = math.tanh %96 : vector<2x768xf32>
    %c0_59 = arith.constant 0 : index
    %c0_60 = arith.constant 0 : index
    %98 = vector.load %arg21[%c0_59, %c0_60] : memref<2x768xf32, #tpu.memory_space<vmem>>, vector<2x768xf32>
    tpu.vector_store %arg21[%c0_59, %c0_60], %97 {strides = array<i32>} : memref<2x768xf32, #tpu.memory_space<vmem>>, vector<2x768xf32>,
    return
  }
}

</mosaic_0001>

<llo_original>
// kernel: _lambda_.1
$region0: #{_lambda_.1}
  #allocation0 [shape = 'u32[]', space=smem, size = 0x4, offset = 0x4, fixed_abs, tag = 'smem constant byte address 0x4 - core index']
  #allocation1 [shape = 'u32[144,128]{1,0:T(1,128)}', space=vmem, size = 0x12000, scoped, tag = 'internal scratch']
  %s0 = inlined_call_operand.vmem [shape: f32[2,32], index: 0, kind: input, shape index: {}]
  %s1 = inlined_call_operand.vmem [shape: f32[2,256], index: 1, kind: input, shape index: {}]
  %s2 = inlined_call_operand.vmem [shape: f32[2,512], index: 2, kind: input, shape index: {}]
  %s3 = inlined_call_operand.vmem [shape: bf16[32,128], index: 3, kind: input, shape index: {}]
  %s4 = inlined_call_operand.vmem [shape: f32[1,128], index: 4, kind: input, shape index: {}]
  %s5 = inlined_call_operand.vmem [shape: f32[128,8], index: 5, kind: input, shape index: {}]
  %s6 = inlined_call_operand.vmem [shape: f32[8,128], index: 6, kind: input, shape index: {}]
  %s7 = inlined_call_operand.vmem [shape: f32[1,8], index: 7, kind: input, shape index: {}]
  %s8 = inlined_call_operand.hbm [shape: f32[1,8], index: 8, kind: input, shape index: {}]
  %s9 = inlined_call_operand.hbm [shape: bf16[128,256], index: 9, kind: input, shape index: {}]
  %s10 = inlined_call_operand.hbm [shape: bf16[256,256], index: 10, kind: input, shape index: {}]
  %s11 = inlined_call_operand.vmem [shape: f32[1,256], index: 11, kind: input, shape index: {}]
  %s12 = inlined_call_operand.vmem [shape: f32[256,4], index: 12, kind: input, shape index: {}]
  %s13 = inlined_call_operand.vmem [shape: f32[4,256], index: 13, kind: input, shape index: {}]
  %s14 = inlined_call_operand.hbm [shape: f32[1,4], index: 14, kind: input, shape index: {}]
  %s15 = inlined_call_operand.hbm [shape: f32[1,4], index: 15, kind: input, shape index: {}]
  %s16 = inlined_call_operand.vmem [shape: bf16[256,768], index: 16, kind: input, shape index: {}]
  %s17 = inlined_call_operand.hbm [shape: bf16[512,768], index: 17, kind: input, shape index: {}]
  %s18 = inlined_call_operand.vmem [shape: f32[1,768], index: 18, kind: input, shape index: {}]
  %s19 = inlined_call_operand.vmem [shape: f32[2,128], index: 19, kind: output, shape index: {0}]
  %s20 = inlined_call_operand.vmem [shape: f32[2,256], index: 20, kind: output, shape index: {1}]
  %s21 = inlined_call_operand.vmem [shape: f32[2,768], index: 21, kind: output, shape index: {2}]
  %22 = xla_tuple %s19, %s20, %s21
  %s23 = sld [smem:[#allocation0]]
  $region126: #{_lambda_.1} parent=0
    _
  %s25 = ssub.s32 1, %s23
  %s26 = scalar_select 0, %s25, %s23
  $region1: #{_lambda_.1} parent=0
    #allocation2 [shape = 'u8[512]{0}', space=vmem, size = 0x400, scoped, tag = 'input window, operand 8, single buffered']
    #allocation3 [shape = 's32[1]{0}', space=sflag, size = 0x4, scoped, tag = 'scoped memory for _lambda_.1']
    #allocation4 [shape = 'u8[65536]{0}', space=vmem, size = 0x10000, scoped, tag = 'input window, operand 9, single buffered']
    #allocation5 [shape = 's32[1]{0}', space=sflag, size = 0x4, scoped, tag = 'scoped memory for _lambda_.1']
    #allocation6 [shape = 'u8[131072]{0}', space=vmem, size = 0x20000, scoped, tag = 'input window, operand 10, single buffered']
    #allocation7 [shape = 'u8[512]{0}', space=vmem, size = 0x400, scoped, tag = 'input window, operand 14, single buffered']
    #allocation8 [shape = 's32[1]{0}', space=sflag, size = 0x4, scoped, tag = 'scoped memory for _lambda_.1']
    #allocation9 [shape = 'u8[512]{0}', space=vmem, size = 0x400, scoped, tag = 'input window, operand 15, single buffered']
    #allocation10 [shape = 'u8[786432]{0}', space=vmem, size = 0xc0000, scoped, tag = 'input window, operand 17, single buffered']
    #allocation11 [shape = 's32[1]{0}', space=sflag, size = 0x4, scoped, tag = 'scoped memory for _lambda_.1']
    %27 = vsyncpa [#allocation3], 0
    %28 = vsyncpa [#allocation5], 0
    %29 = vsyncpa [#allocation8], 0
    %30 = vsyncpa [#allocation11], 0
    // Predicated region
    $region2: #{_lambda_.1} parent=1 // pred_check
      _
    $region3: #{_lambda_.1} parent=1 // pred_check_branch
      %32 = sbr.rel (0) target = $region5
    $region4: #{_lambda_.1} parent=1 // pred_region
      _
    $region5: #{_lambda_.1} parent=1 // pred_fallthru
      _
    // Predicated region
    $region6: #{_lambda_.1} parent=1 // pred_check
      _
    $region7: #{_lambda_.1} parent=1 // pred_check_branch
      %34 = sbr.rel (0) target = $region9
    $region8: #{_lambda_.1} parent=1 // pred_region
      _
    $region9: #{_lambda_.1} parent=1 // pred_fallthru
      _
    // Predicated region
    $region10: #{_lambda_.1} parent=1 // pred_check
      _
    $region11: #{_lambda_.1} parent=1 // pred_check_branch
      %36 = sbr.rel (0) target = $region13
    $region12: #{_lambda_.1} parent=1 // pred_region
      _
    $region13: #{_lambda_.1} parent=1 // pred_fallthru
      _
    // Predicated region
    $region14: #{_lambda_.1} parent=1 // pred_check
      _
    $region15: #{_lambda_.1} parent=1 // pred_check_branch
      %38 = sbr.rel (0) target = $region17
    $region16: #{_lambda_.1} parent=1 // pred_region
      _
    $region17: #{_lambda_.1} parent=1 // pred_fallthru
      _
    // Predicated region
    $region18: #{_lambda_.1} parent=1 // pred_check
      _
    $region19: #{_lambda_.1} parent=1 // pred_check_branch
      %40 = sbr.rel (0) target = $region21
    $region20: #{_lambda_.1} parent=1 // pred_region
      _
    $region21: #{_lambda_.1} parent=1 // pred_fallthru
      _
    // Predicated region
    $region22: #{_lambda_.1} parent=1 // pred_check
      _
    $region23: #{_lambda_.1} parent=1 // pred_check_branch
      %42 = sbr.rel (0) target = $region25
    $region24: #{_lambda_.1} parent=1 // pred_region
      _
    $region25: #{_lambda_.1} parent=1 // pred_fallthru
      _
    // Predicated region
    $region26: #{_lambda_.1} parent=1 // pred_check
      _
    $region27: #{_lambda_.1} parent=1 // pred_check_branch
      %44 = sbr.rel (0) target = $region29
    $region28: #{_lambda_.1} parent=1 // pred_region
      _
    $region29: #{_lambda_.1} parent=1 // pred_fallthru
      _
    // Predicated region
    $region30: #{_lambda_.1} parent=1 // pred_check
      _
    $region31: #{_lambda_.1} parent=1 // pred_check_branch
      %46 = sbr.rel (0) target = $region33
    $region32: #{_lambda_.1} parent=1 // pred_region
      _
    $region33: #{_lambda_.1} parent=1 // pred_fallthru
      _
    // Predicated region
    $region34: #{_lambda_.1} parent=1 // pred_check
      _
    $region35: #{_lambda_.1} parent=1 // pred_check_branch
      %48 = sbr.rel (0) target = $region37
    $region36: #{_lambda_.1} parent=1 // pred_region
      %s50 = ssub.s32 16, 16
      %51 = vsyncadd [#allocation3], %s50
      %s53 = sshll.u32 [#allocation2], 4
      %s54 = int_to_ptr.vmem [resolvable:$true] %s53
      %56 = dma.hbm_to_vmem [thread:$0]  %s8, 16, %s54, [#allocation3]
    $region37: #{_lambda_.1} parent=1 // pred_fallthru
      _
    // Predicated region
    $region38: #{_lambda_.1} parent=1 // pred_check
      _
    $region39: #{_lambda_.1} parent=1 // pred_check_branch
      %58 = sbr.rel (0) target = $region41
    $region40: #{_lambda_.1} parent=1 // pred_region
      %s60 = ssub.s32 2048, 2048
      %61 = vsyncadd [#allocation5], %s60
      %s62 = sshll.u32 [#allocation4], 4
      %s63 = int_to_ptr.vmem [resolvable:$true] %s62
      %68 = dma.hbm_to_vmem [thread:$0]  %s9, 2048, %s63, [#allocation5], 128, 128, 8
    $region41: #{_lambda_.1} parent=1 // pred_fallthru
      _
    // Predicated region
    $region42: #{_lambda_.1} parent=1 // pred_check
      _
    $region43: #{_lambda_.1} parent=1 // pred_check_branch
      %70 = sbr.rel (0) target = $region45
    $region44: #{_lambda_.1} parent=1 // pred_region
      %s72 = ssub.s32 4096, 4096
      %73 = vsyncadd [#allocation5], %s72
      %s74 = sshll.u32 [#allocation6], 4
      %s75 = int_to_ptr.vmem [resolvable:$true] %s74
      %80 = dma.hbm_to_vmem [thread:$0]  %s10, 4096, %s75, [#allocation5], 128, 128, 8
    $region45: #{_lambda_.1} parent=1 // pred_fallthru
      _
    // Predicated region
    $region46: #{_lambda_.1} parent=1 // pred_check
      _
    $region47: #{_lambda_.1} parent=1 // pred_check_branch
      %82 = sbr.rel (0) target = $region49
    $region48: #{_lambda_.1} parent=1 // pred_region
      _
    $region49: #{_lambda_.1} parent=1 // pred_fallthru
      _
    // Predicated region
    $region50: #{_lambda_.1} parent=1 // pred_check
      _
    $region51: #{_lambda_.1} parent=1 // pred_check_branch
      %84 = sbr.rel (0) target = $region53
    $region52: #{_lambda_.1} parent=1 // pred_region
      _
    $region53: #{_lambda_.1} parent=1 // pred_fallthru
      _
    // Predicated region
    $region54: #{_lambda_.1} parent=1 // pred_check
      _
    $region55: #{_lambda_.1} parent=1 // pred_check_branch
      %86 = sbr.rel (0) target = $region57
    $region56: #{_lambda_.1} parent=1 // pred_region
      _
    $region57: #{_lambda_.1} parent=1 // pred_fallthru
      _
    // Predicated region
    $region58: #{_lambda_.1} parent=1 // pred_check
      _
    $region59: #{_lambda_.1} parent=1 // pred_check_branch
      %88 = sbr.rel (0) target = $region61
    $region60: #{_lambda_.1} parent=1 // pred_region
      %s90 = ssub.s32 16, 16
      %91 = vsyncadd [#allocation8], %s90
      %s93 = sshll.u32 [#allocation7], 4
      %s94 = int_to_ptr.vmem [resolvable:$true] %s93
      %96 = dma.hbm_to_vmem [thread:$0]  %s14, 16, %s94, [#allocation8]
    $region61: #{_lambda_.1} parent=1 // pred_fallthru
      _
    // Predicated region
    $region62: #{_lambda_.1} parent=1 // pred_check
      _
    $region63: #{_lambda_.1} parent=1 // pred_check_branch
      %98 = sbr.rel (0) target = $region65
    $region64: #{_lambda_.1} parent=1 // pred_region
      %s100 = ssub.s32 16, 16
      %101 = vsyncadd [#allocation8], %s100
      %s103 = sshll.u32 [#allocation9], 4
      %s104 = int_to_ptr.vmem [resolvable:$true] %s103
      %106 = dma.hbm_to_vmem [thread:$0]  %s15, 16, %s104, [#allocation8]
    $region65: #{_lambda_.1} parent=1 // pred_fallthru
      _
    // Predicated region
    $region66: #{_lambda_.1} parent=1 // pred_check
      _
    $region67: #{_lambda_.1} parent=1 // pred_check_branch
      %108 = sbr.rel (0) target = $region69
    $region68: #{_lambda_.1} parent=1 // pred_region
      _
    $region69: #{_lambda_.1} parent=1 // pred_fallthru
      _
    // Predicated region
    $region70: #{_lambda_.1} parent=1 // pred_check
      _
    $region71: #{_lambda_.1} parent=1 // pred_check_branch
      %110 = sbr.rel (0) target = $region73
    $region72: #{_lambda_.1} parent=1 // pred_region
      %s112 = ssub.s32 24576, 24576
      %113 = vsyncadd [#allocation11], %s112
      %s114 = sshll.u32 [#allocation10], 4
      %s115 = int_to_ptr.vmem [resolvable:$true] %s114
      %120 = dma.hbm_to_vmem [thread:$0]  %s17, 24576, %s115, [#allocation11], 384, 384, 24
    $region73: #{_lambda_.1} parent=1 // pred_fallthru
      _
    // Predicated region
    $region74: #{_lambda_.1} parent=1 // pred_check
      _
    $region75: #{_lambda_.1} parent=1 // pred_check_branch
      %122 = sbr.rel (0) target = $region77
    $region76: #{_lambda_.1} parent=1 // pred_region
      _
    $region77: #{_lambda_.1} parent=1 // pred_fallthru
      _
    // Predicated region
    $region78: #{_lambda_.1} parent=1 // pred_check
      _
    $region79: #{_lambda_.1} parent=1 // pred_check_branch
      %124 = sbr.rel (0) target = $region81
    $region80: #{_lambda_.1} parent=1 // pred_region
      %125 = dma.done [#allocation3], 16
    $region81: #{_lambda_.1} parent=1 // pred_fallthru
      _
    // Predicated region
    $region82: #{_lambda_.1} parent=1 // pred_check
      _
    $region83: #{_lambda_.1} parent=1 // pred_check_branch
      %127 = sbr.rel (0) target = $region85
    $region84: #{_lambda_.1} parent=1 // pred_region
      %128 = dma.done [#allocation5], 2048
    $region85: #{_lambda_.1} parent=1 // pred_fallthru
      _
    // Predicated region
    $region86: #{_lambda_.1} parent=1 // pred_check
      _
    $region87: #{_lambda_.1} parent=1 // pred_check_branch
      %130 = sbr.rel (0) target = $region89
    $region88: #{_lambda_.1} parent=1 // pred_region
      %131 = dma.done [#allocation5], 4096
    $region89: #{_lambda_.1} parent=1 // pred_fallthru
      _
    // Predicated region
    $region90: #{_lambda_.1} parent=1 // pred_check
      _
    $region91: #{_lambda_.1} parent=1 // pred_check_branch
      %133 = sbr.rel (0) target = $region93
    $region92: #{_lambda_.1} parent=1 // pred_region
      %134 = dma.done [#allocation8], 16
    $region93: #{_lambda_.1} parent=1 // pred_fallthru
      _
    // Predicated region
    $region94: #{_lambda_.1} parent=1 // pred_check
      _
    $region95: #{_lambda_.1} parent=1 // pred_check_branch
      %136 = sbr.rel (0) target = $region97
    $region96: #{_lambda_.1} parent=1 // pred_region
      %137 = dma.done [#allocation8], 16
    $region97: #{_lambda_.1} parent=1 // pred_fallthru
      _
    // Predicated region
    $region98: #{_lambda_.1} parent=1 // pred_check
      _
    $region99: #{_lambda_.1} parent=1 // pred_check_branch
      %139 = sbr.rel (0) target = $region101
    $region100: #{_lambda_.1} parent=1 // pred_region
      %140 = dma.done [#allocation11], 24576
    $region101: #{_lambda_.1} parent=1 // pred_fallthru
      _
    %v142 = vld [vmem:[%s0] sm:$0x3]
    %v143 = vpack.c.bf16 %v142, %v142
    %v144 = vld [vmem:[%s3] sm:$0xf]
    %v145 = vld [vmem:[%s3 + $0x4] sm:$0xf]
    %v146 = vld [vmem:[%s3 + $0x8] sm:$0xf]
    %v147 = vld [vmem:[%s3 + $0xc] sm:$0xf]
    %v148 = vld [vmem:[%s4] sm:$0x1]
    %v150 = vlaneseq
    %v151 = vshrl.u32 %v150, 7
    %v152 = vsub.s32 0, %v151
    %v153 = vrot.slane %v148, %v152
    %v159 = vunpack.c.l.b16 %v144
    %v160 = vunpack.c.l.b16 %v145
    %v161 = vunpack.c.l.b16 %v146
    %v162 = vunpack.c.l.b16 %v147
    %v163 = vpack.c.b16 %v160, %v159
    %v164 = vpack.c.b16 %v162, %v161
    %vm167 = vcmask 261120
    %v169 = vsel %vm167, %v143, 0
    %171 = vmatprep.subr.bf16.mxu0 0
    %172 = vmatpush1.bf16.msra.mxu0 0
    %173 = vmatprep.subr.bf16.mxu0 0
    %174 = vmatpush1.bf16.msra.mxu0 0
    %175 = vmatprep.subr.bf16.mxu0 0
    %176 = vmatpush1.bf16.msra.mxu0 0
    %177 = vmatprep.subr.bf16.mxu0 0
    %178 = vmatpush1.bf16.msra.mxu0 0
    %179 = vmatprep.subr.bf16.mxu0 0
    %180 = vmatpush1.bf16.msra.mxu0 0
    %181 = vmatprep.subr.bf16.mxu0 0
    %182 = vmatpush1.bf16.msra.mxu0 0
    %183 = vmatprep.subr.bf16.mxu0 0
    %184 = vmatpush1.bf16.msra.mxu0 %v164
    %185 = vmatprep.subr.bf16.mxu0 0
    %186 = vmatpush1.bf16.msra.mxu0 %v163
    %187 = vmatprep.subr.bf16.mxu0 0
    %188 = vmatpush2.bf16.msra.mxu0 0
    %189 = vmatprep.subr.bf16.mxu0 0
    %190 = vmatpush2.bf16.msra.mxu0 0
    %191 = vmatprep.subr.bf16.mxu0 0
    %192 = vmatpush2.bf16.msra.mxu0 0
    %193 = vmatprep.subr.bf16.mxu0 0
    %194 = vmatpush2.bf16.msra.mxu0 0
    %195 = vmatprep.subr.bf16.mxu0 0
    %196 = vmatpush2.bf16.msra.mxu0 0
    %197 = vmatprep.subr.bf16.mxu0 0
    %198 = vmatpush2.bf16.msra.mxu0 0
    %199 = vmatprep.subr.bf16.mxu0 0
    %200 = vmatpush2.bf16.msra.mxu0 0
    %201 = vmatprep.subr.bf16.mxu0 0
    %202 = vmatpush2.bf16.msra.mxu0 0
    %203 = vmatprep.mubr.bf16.mxu0 0
    %204 = vmatmul.mubr.bf16.gmra.mxu0 %v169
    %v205 = vpop.f32.mrf.mxu0
    %v206 = vadd.f32 %v153, %v205
    %v207 = vpop.f32.mrf.mxu0
    %v208 = vpop.f32.mrf.mxu0
    %v209 = vpop.f32.mrf.mxu0
    %210 = vdwg.mxu0
    %v211 = vld [vmem:[%s5] sm:$0xff]
    %v212 = vld [vmem:[%s5 + $0x8] sm:$0xff]
    %v213 = vld [vmem:[%s5 + $0x10] sm:$0xff]
    %v214 = vld [vmem:[%s5 + $0x18] sm:$0xff]
    %v215 = vld [vmem:[%s5 + $0x20] sm:$0xff]
    %v216 = vld [vmem:[%s5 + $0x28] sm:$0xff]
    %v217 = vld [vmem:[%s5 + $0x30] sm:$0xff]
    %v218 = vld [vmem:[%s5 + $0x38] sm:$0xff]
    %v219 = vld [vmem:[%s5 + $0x40] sm:$0xff]
    %v220 = vld [vmem:[%s5 + $0x48] sm:$0xff]
    %v221 = vld [vmem:[%s5 + $0x50] sm:$0xff]
    %v222 = vld [vmem:[%s5 + $0x58] sm:$0xff]
    %v223 = vld [vmem:[%s5 + $0x60] sm:$0xff]
    %v224 = vld [vmem:[%s5 + $0x68] sm:$0xff]
    %v225 = vld [vmem:[%s5 + $0x70] sm:$0xff]
    %v226 = vld [vmem:[%s5 + $0x78] sm:$0xff]
    %v227 = vld [vmem:[%s6] sm:$0xff]
    %v228 = vld [vmem:[%s7] sm:$0x1]
    %v229 = vld [vmem:[#allocation2] sm:$0x1]
    %vm230 = vcmask 1041408
    %v231 = vsel %vm230, %v206, 0.0
    %v232 = vrot.slane %v231, 4
    %v233 = vadd.f32 %v231, %v232
    %v234 = vrot.slane %v233, 2
    %v235 = vadd.f32 %v233, %v234
    %v236 = vrot.slane %v235, 1
    %v237 = vadd.f32 %v235, %v236
    %v238 = vmul.f32 %v206, %v206
    %v239 = vsel %vm230, %v238, 0.0
    %v240 = vrot.slane %v239, 4
    %v241 = vadd.f32 %v239, %v240
    %v242 = vrot.slane %v241, 2
    %v243 = vadd.f32 %v241, %v242
    %v244 = vrot.slane %v243, 1
    %v245 = vadd.f32 %v243, %v244
    %vm246 = vcmask 1040384
    %v247 = vsel %vm246, %v237, %v245
    %248 = vmatprep.subr.mxu0 0.0
    %249 = vmatpush1.msra.mxu0 %v226
    %250 = vmatprep.subr.mxu0 0.0
    %251 = vmatpush1.msra.mxu0 %v225
    %252 = vmatprep.subr.mxu0 0.0
    %253 = vmatpush1.msra.mxu0 %v224
    %254 = vmatprep.subr.mxu0 0.0
    %255 = vmatpush1.msra.mxu0 %v223
    %256 = vmatprep.subr.mxu0 0.0
    %257 = vmatpush1.msra.mxu0 %v222
    %258 = vmatprep.subr.mxu0 0.0
    %259 = vmatpush1.msra.mxu0 %v221
    %260 = vmatprep.subr.mxu0 0.0
    %261 = vmatpush1.msra.mxu0 %v220
    %262 = vmatprep.subr.mxu0 0.0
    %263 = vmatpush1.msra.mxu0 %v219
    %264 = vmatprep.subr.mxu0 0.0
    %265 = vmatpush1.msra.mxu0 %v218
    %266 = vmatprep.subr.mxu0 0.0
    %267 = vmatpush1.msra.mxu0 %v217
    %268 = vmatprep.subr.mxu0 0.0
    %269 = vmatpush1.msra.mxu0 %v216
    %270 = vmatprep.subr.mxu0 0.0
    %271 = vmatpush1.msra.mxu0 %v215
    %272 = vmatprep.subr.mxu0 0.0
    %273 = vmatpush1.msra.mxu0 %v214
    %274 = vmatprep.subr.mxu0 0.0
    %275 = vmatpush1.msra.mxu0 %v213
    %276 = vmatprep.subr.mxu0 0.0
    %277 = vmatpush1.msra.mxu0 %v212
    %278 = vmatprep.subr.mxu0 0.0
    %279 = vmatpush1.msra.mxu0 %v211
    %280 = vmatprep.subr.mxu0 0.0
    %281 = vmatpush2.msra.mxu0 0.0
    %282 = vmatprep.subr.mxu0 0.0
    %283 = vmatpush2.msra.mxu0 0.0
    %284 = vmatprep.subr.mxu0 0.0
    %285 = vmatpush2.msra.mxu0 0.0
    %286 = vmatprep.subr.mxu0 0.0
    %287 = vmatpush2.msra.mxu0 0.0
    %288 = vmatprep.subr.mxu0 0.0
    %289 = vmatpush2.msra.mxu0 0.0
    %290 = vmatprep.subr.mxu0 0.0
    %291 = vmatpush2.msra.mxu0 0.0
    %292 = vmatprep.subr.mxu0 0.0
    %293 = vmatpush2.msra.mxu0 0.0
    %294 = vmatprep.subr.mxu0 0.0
    %295 = vmatpush2.msra.mxu0 0.0
    %296 = vmatprep.subr.mxu0 0.0
    %297 = vmatpush2.msra.mxu0 0.0
    %298 = vmatprep.subr.mxu0 0.0
    %299 = vmatpush2.msra.mxu0 0.0
    %300 = vmatprep.subr.mxu0 0.0
    %301 = vmatpush2.msra.mxu0 0.0
    %302 = vmatprep.subr.mxu0 0.0
    %303 = vmatpush2.msra.mxu0 0.0
    %304 = vmatprep.subr.mxu0 0.0
    %305 = vmatpush2.msra.mxu0 0.0
    %306 = vmatprep.subr.mxu0 0.0
    %307 = vmatpush2.msra.mxu0 0.0
    %308 = vmatprep.subr.mxu0 0.0
    %309 = vmatpush2.msra.mxu0 0.0
    %310 = vmatprep.subr.mxu0 0.0
    %311 = vmatpush2.msra.mxu0 0.0
    %312 = vmatprep.mubr.f32.mxu0 0.0
    %313 = vmatmul.mubr.f32.gmra.mxu0 %v247
    %v314 = vpop.f32.mrf.mxu0
    %v315 = vadd.f32 0.0, %v314
    %v316 = vpop.f32.mrf.mxu0
    %317 = vdwg.mxu0
    %v318 = vrcp.pop 32.0
    %v319 = vmul.f32 %v315, %v318
    %v320 = vmul.f32 %v319, %v319
    %v322 = vrot.slane %v320, 7
    %v324 = vsub.f32 %v319, %v322
    %v325 = vadd.f32 %v324, 1e-05
    %v326 = vrsqrt.pop %v325
    %v329 = vunpack.c.l.s4 1966171168
    %v330 = vunpack.c.0.s8 %v329
    %v331 = vlaneseq
    %v332 = vshrl.u32 %v331, 7
    %v333 = vsub.s32 %v330, %v332
    %v334 = vrot.slane %v326, %v333
    %v335 = vcombine.high %v334, %v334
    %v337 = vunpack.c.l.s4 1966171168
    %v338 = vunpack.c.0.s8 %v337
    %v339 = vlaneseq
    %v340 = vshrl.u32 %v339, 7
    %v341 = vsub.s32 %v338, %v340
    %v342 = vrot.slane %v335, %v341
    %v344 = vmul.f32 %v228, %v342
    %v345 = vmul.f32 %v319, %v344
    %v346 = vsub.f32 %v229, %v345
    %v348 = vlaneseq
    %v349 = vshrl.u32 %v348, 7
    %v350 = vsub.s32 0, %v349
    %v351 = vrot.slane %v346, %v350
    %v353 = vsel %vm246, %v344, %v351
    %vm354 = vcmask 64512
    %v356 = vsel %vm354, %v353, 0
    %358 = vmatprep.subr.mxu0 0.0
    %359 = vmatpush1.msra.mxu0 0.0
    %360 = vmatprep.subr.mxu0 0.0
    %361 = vmatpush1.msra.mxu0 0.0
    %362 = vmatprep.subr.mxu0 0.0
    %363 = vmatpush1.msra.mxu0 0.0
    %364 = vmatprep.subr.mxu0 0.0
    %365 = vmatpush1.msra.mxu0 0.0
    %366 = vmatprep.subr.mxu0 0.0
    %367 = vmatpush1.msra.mxu0 0.0
    %368 = vmatprep.subr.mxu0 0.0
    %369 = vmatpush1.msra.mxu0 0.0
    %370 = vmatprep.subr.mxu0 0.0
    %371 = vmatpush1.msra.mxu0 0.0
    %372 = vmatprep.subr.mxu0 0.0
    %373 = vmatpush1.msra.mxu0 0.0
    %374 = vmatprep.subr.mxu0 0.0
    %375 = vmatpush1.msra.mxu0 0.0
    %376 = vmatprep.subr.mxu0 0.0
    %377 = vmatpush1.msra.mxu0 0.0
    %378 = vmatprep.subr.mxu0 0.0
    %379 = vmatpush1.msra.mxu0 0.0
    %380 = vmatprep.subr.mxu0 0.0
    %381 = vmatpush1.msra.mxu0 0.0
    %382 = vmatprep.subr.mxu0 0.0
    %383 = vmatpush1.msra.mxu0 0.0
    %384 = vmatprep.subr.mxu0 0.0
    %385 = vmatpush1.msra.mxu0 0.0
    %386 = vmatprep.subr.mxu0 0.0
    %387 = vmatpush1.msra.mxu0 0.0
    %388 = vmatprep.subr.mxu0 0.0
    %389 = vmatpush1.msra.mxu0 %v227
    %390 = vmatprep.subr.mxu0 0.0
    %391 = vmatpush2.msra.mxu0 0.0
    %392 = vmatprep.subr.mxu0 0.0
    %393 = vmatpush2.msra.mxu0 0.0
    %394 = vmatprep.subr.mxu0 0.0
    %395 = vmatpush2.msra.mxu0 0.0
    %396 = vmatprep.subr.mxu0 0.0
    %397 = vmatpush2.msra.mxu0 0.0
    %398 = vmatprep.subr.mxu0 0.0
    %399 = vmatpush2.msra.mxu0 0.0
    %400 = vmatprep.subr.mxu0 0.0
    %401 = vmatpush2.msra.mxu0 0.0
    %402 = vmatprep.subr.mxu0 0.0
    %403 = vmatpush2.msra.mxu0 0.0
    %404 = vmatprep.subr.mxu0 0.0
    %405 = vmatpush2.msra.mxu0 0.0
    %406 = vmatprep.subr.mxu0 0.0
    %407 = vmatpush2.msra.mxu0 0.0
    %408 = vmatprep.subr.mxu0 0.0
    %409 = vmatpush2.msra.mxu0 0.0
    %410 = vmatprep.subr.mxu0 0.0
    %411 = vmatpush2.msra.mxu0 0.0
    %412 = vmatprep.subr.mxu0 0.0
    %413 = vmatpush2.msra.mxu0 0.0
    %414 = vmatprep.subr.mxu0 0.0
    %415 = vmatpush2.msra.mxu0 0.0
    %416 = vmatprep.subr.mxu0 0.0
    %417 = vmatpush2.msra.mxu0 0.0
    %418 = vmatprep.subr.mxu0 0.0
    %419 = vmatpush2.msra.mxu0 0.0
    %420 = vmatprep.subr.mxu0 0.0
    %421 = vmatpush2.msra.mxu0 0.0
    %422 = vmatprep.mubr.f32.mxu0 0.0
    %423 = vmatmul.mubr.f32.gmra.mxu0 %v356
    %v424 = vpop.f32.mrf.mxu0
    %v425 = vadd.f32 0.0, %v424
    %v426 = vpop.f32.mrf.mxu0
    %427 = vdwg.mxu0
    %v428 = vlaneseq
    %v429 = vshrl.u32 %v428, 7
    %v430 = vsub.s32 0, %v429
    %v431 = vrot.slane %v425, %v430
    %v432 = vmul.f32 %v206, %v431
    %v433 = vlaneseq
    %v434 = vshrl.u32 %v433, 7
    %v435 = vsub.s32 1, %v434
    %v436 = vrot.slane %v425, %v435
    %v437 = vadd.f32 %v432, %v436
    %v438 = vmax.f32 %v437, 0.0
    %439 = vst [vmem:[%s19] sm:$0x3] %v438
    %v440 = vpack.c.bf16 %v438, %v438
    %v441 = vld [vmem:[#allocation4] sm:$0xff]
    %v442 = vld [vmem:[#allocation4 + $0x8] sm:$0xff]
    %v443 = vld [vmem:[#allocation4 + $0x10] sm:$0xff]
    %v444 = vld [vmem:[#allocation4 + $0x18] sm:$0xff]
    %v445 = vld [vmem:[#allocation4 + $0x20] sm:$0xff]
    %v446 = vld [vmem:[#allocation4 + $0x28] sm:$0xff]
    %v447 = vld [vmem:[#allocation4 + $0x30] sm:$0xff]
    %v448 = vld [vmem:[#allocation4 + $0x38] sm:$0xff]
    %v449 = vld [vmem:[#allocation4 + $0x40] sm:$0xff]
    %v450 = vld [vmem:[#allocation4 + $0x48] sm:$0xff]
    %v451 = vld [vmem:[#allocation4 + $0x50] sm:$0xff]
    %v452 = vld [vmem:[#allocation4 + $0x58] sm:$0xff]
    %v453 = vld [vmem:[#allocation4 + $0x60] sm:$0xff]
    %v454 = vld [vmem:[#allocation4 + $0x68] sm:$0xff]
    %v455 = vld [vmem:[#allocation4 + $0x70] sm:$0xff]
    %v456 = vld [vmem:[#allocation4 + $0x78] sm:$0xff]
    %v457 = vld [vmem:[%s1] sm:$0xf]
    %v460 = vunpack.c.l.s4 1983009808
    %v461 = vunpack.c.0.s8 %v460
    %v462 = vlaneseq
    %v463 = vshrl.u32 %v462, 7
    %v464 = vsub.s32 %v461, %v463
    %v465 = vrot.slane %v457, %v464
    %v466 = vcombine.high %v465, %v465
    %v469 = vpack.c.bf16 %v465, %v465
    %v470 = vpack.c.bf16 %v466, %v466
    %v471 = vld [vmem:[#allocation6] sm:$0xff]
    %v472 = vld [vmem:[#allocation6 + $0x8] sm:$0xff]
    %v473 = vld [vmem:[#allocation6 + $0x10] sm:$0xff]
    %v474 = vld [vmem:[#allocation6 + $0x18] sm:$0xff]
    %v475 = vld [vmem:[#allocation6 + $0x20] sm:$0xff]
    %v476 = vld [vmem:[#allocation6 + $0x28] sm:$0xff]
    %v477 = vld [vmem:[#allocation6 + $0x30] sm:$0xff]
    %v478 = vld [vmem:[#allocation6 + $0x38] sm:$0xff]
    %v479 = vld [vmem:[#allocation6 + $0x40] sm:$0xff]
    %v480 = vld [vmem:[#allocation6 + $0x48] sm:$0xff]
    %v481 = vld [vmem:[#allocation6 + $0x50] sm:$0xff]
    %v482 = vld [vmem:[#allocation6 + $0x58] sm:$0xff]
    %v483 = vld [vmem:[#allocation6 + $0x60] sm:$0xff]
    %v484 = vld [vmem:[#allocation6 + $0x68] sm:$0xff]
    %v485 = vld [vmem:[#allocation6 + $0x70] sm:$0xff]
    %v486 = vld [vmem:[#allocation6 + $0x78] sm:$0xff]
    %v487 = vld [vmem:[#allocation6 + $0x80] sm:$0xff]
    %v488 = vld [vmem:[#allocation6 + $0x88] sm:$0xff]
    %v489 = vld [vmem:[#allocation6 + $0x90] sm:$0xff]
    %v490 = vld [vmem:[#allocation6 + $0x98] sm:$0xff]
    %v491 = vld [vmem:[#allocation6 + $0xa0] sm:$0xff]
    %v492 = vld [vmem:[#allocation6 + $0xa8] sm:$0xff]
    %v493 = vld [vmem:[#allocation6 + $0xb0] sm:$0xff]
    %v494 = vld [vmem:[#allocation6 + $0xb8] sm:$0xff]
    %v495 = vld [vmem:[#allocation6 + $0xc0] sm:$0xff]
    %v496 = vld [vmem:[#allocation6 + $0xc8] sm:$0xff]
    %v497 = vld [vmem:[#allocation6 + $0xd0] sm:$0xff]
    %v498 = vld [vmem:[#allocation6 + $0xd8] sm:$0xff]
    %v499 = vld [vmem:[#allocation6 + $0xe0] sm:$0xff]
    %v500 = vld [vmem:[#allocation6 + $0xe8] sm:$0xff]
    %v501 = vld [vmem:[#allocation6 + $0xf0] sm:$0xff]
    %v502 = vld [vmem:[#allocation6 + $0xf8] sm:$0xff]
    %v535 = vunpack.c.l.b16 %v471
    %v536 = vunpack.c.h.b16 %v471
    %v537 = vunpack.c.l.b16 %v472
    %v538 = vunpack.c.h.b16 %v472
    %v539 = vunpack.c.l.b16 %v473
    %v540 = vunpack.c.h.b16 %v473
    %v541 = vunpack.c.l.b16 %v474
    %v542 = vunpack.c.h.b16 %v474
    %v543 = vunpack.c.l.b16 %v475
    %v544 = vunpack.c.h.b16 %v475
    %v545 = vunpack.c.l.b16 %v476
    %v546 = vunpack.c.h.b16 %v476
    %v547 = vunpack.c.l.b16 %v477
    %v548 = vunpack.c.h.b16 %v477
    %v549 = vunpack.c.l.b16 %v478
    %v550 = vunpack.c.h.b16 %v478
    %v551 = vunpack.c.l.b16 %v479
    %v552 = vunpack.c.h.b16 %v479
    %v553 = vunpack.c.l.b16 %v480
    %v554 = vunpack.c.h.b16 %v480
    %v555 = vunpack.c.l.b16 %v481
    %v556 = vunpack.c.h.b16 %v481
    %v557 = vunpack.c.l.b16 %v482
    %v558 = vunpack.c.h.b16 %v482
    %v559 = vunpack.c.l.b16 %v483
    %v560 = vunpack.c.h.b16 %v483
    %v561 = vunpack.c.l.b16 %v484
    %v562 = vunpack.c.h.b16 %v484
    %v563 = vunpack.c.l.b16 %v485
    %v564 = vunpack.c.h.b16 %v485
    %v565 = vunpack.c.l.b16 %v486
    %v566 = vunpack.c.h.b16 %v486
    %v567 = vunpack.c.l.b16 %v487
    %v568 = vunpack.c.h.b16 %v487
    %v569 = vunpack.c.l.b16 %v488
    %v570 = vunpack.c.h.b16 %v488
    %v571 = vunpack.c.l.b16 %v489
    %v572 = vunpack.c.h.b16 %v489
    %v573 = vunpack.c.l.b16 %v490
    %v574 = vunpack.c.h.b16 %v490
    %v575 = vunpack.c.l.b16 %v491
    %v576 = vunpack.c.h.b16 %v491
    %v577 = vunpack.c.l.b16 %v492
    %v578 = vunpack.c.h.b16 %v492
    %v579 = vunpack.c.l.b16 %v493
    %v580 = vunpack.c.h.b16 %v493
    %v581 = vunpack.c.l.b16 %v494
    %v582 = vunpack.c.h.b16 %v494
    %v583 = vunpack.c.l.b16 %v495
    %v584 = vunpack.c.h.b16 %v495
    %v585 = vunpack.c.l.b16 %v496
    %v586 = vunpack.c.h.b16 %v496
    %v587 = vunpack.c.l.b16 %v497
    %v588 = vunpack.c.h.b16 %v497
    %v589 = vunpack.c.l.b16 %v498
    %v590 = vunpack.c.h.b16 %v498
    %v591 = vunpack.c.l.b16 %v499
    %v592 = vunpack.c.h.b16 %v499
    %v593 = vunpack.c.l.b16 %v500
    %v594 = vunpack.c.h.b16 %v500
    %v595 = vunpack.c.l.b16 %v501
    %v596 = vunpack.c.h.b16 %v501
    %v597 = vunpack.c.l.b16 %v502
    %v598 = vunpack.c.h.b16 %v502
    %v599 = vpack.c.b16 %v537, %v535
    %v600 = vpack.c.b16 %v538, %v536
    %v601 = vpack.c.b16 %v541, %v539
    %v602 = vpack.c.b16 %v542, %v540
    %v603 = vpack.c.b16 %v545, %v543
    %v604 = vpack.c.b16 %v546, %v544
    %v605 = vpack.c.b16 %v549, %v547
    %v606 = vpack.c.b16 %v550, %v548
    %v607 = vpack.c.b16 %v553, %v551
    %v608 = vpack.c.b16 %v554, %v552
    %v609 = vpack.c.b16 %v557, %v555
    %v610 = vpack.c.b16 %v558, %v556
    %v611 = vpack.c.b16 %v561, %v559
    %v612 = vpack.c.b16 %v562, %v560
    %v613 = vpack.c.b16 %v565, %v563
    %v614 = vpack.c.b16 %v566, %v564
    %v615 = vpack.c.b16 %v569, %v567
    %v616 = vpack.c.b16 %v570, %v568
    %v617 = vpack.c.b16 %v573, %v571
    %v618 = vpack.c.b16 %v574, %v572
    %v619 = vpack.c.b16 %v577, %v575
    %v620 = vpack.c.b16 %v578, %v576
    %v621 = vpack.c.b16 %v581, %v579
    %v622 = vpack.c.b16 %v582, %v580
    %v623 = vpack.c.b16 %v585, %v583
    %v624 = vpack.c.b16 %v586, %v584
    %v625 = vpack.c.b16 %v589, %v587
    %v626 = vpack.c.b16 %v590, %v588
    %v627 = vpack.c.b16 %v593, %v591
    %v628 = vpack.c.b16 %v594, %v592
    %v629 = vpack.c.b16 %v597, %v595
    %v630 = vpack.c.b16 %v598, %v596
    %663 = vmatprep.subr.bf16.mxu0 %v614
    %664 = vmatpush1.bf16.msra.mxu0 %v613
    %665 = vmatprep.subr.bf16.mxu0 %v612
    %666 = vmatpush1.bf16.msra.mxu0 %v611
    %667 = vmatprep.subr.bf16.mxu0 %v610
    %668 = vmatpush1.bf16.msra.mxu0 %v609
    %669 = vmatprep.subr.bf16.mxu0 %v608
    %670 = vmatpush1.bf16.msra.mxu0 %v607
    %671 = vmatprep.subr.bf16.mxu0 %v606
    %672 = vmatpush1.bf16.msra.mxu0 %v605
    %673 = vmatprep.subr.bf16.mxu0 %v604
    %674 = vmatpush1.bf16.msra.mxu0 %v603
    %675 = vmatprep.subr.bf16.mxu0 %v602
    %676 = vmatpush1.bf16.msra.mxu0 %v601
    %677 = vmatprep.subr.bf16.mxu0 %v600
    %678 = vmatpush1.bf16.msra.mxu0 %v599
    %679 = vmatprep.subr.bf16.mxu0 %v630
    %680 = vmatpush2.bf16.msra.mxu0 %v629
    %681 = vmatprep.subr.bf16.mxu0 %v628
    %682 = vmatpush2.bf16.msra.mxu0 %v627
    %683 = vmatprep.subr.bf16.mxu0 %v626
    %684 = vmatpush2.bf16.msra.mxu0 %v625
    %685 = vmatprep.subr.bf16.mxu0 %v624
    %686 = vmatpush2.bf16.msra.mxu0 %v623
    %687 = vmatprep.subr.bf16.mxu0 %v622
    %688 = vmatpush2.bf16.msra.mxu0 %v621
    %689 = vmatprep.subr.bf16.mxu0 %v620
    %690 = vmatpush2.bf16.msra.mxu0 %v619
    %691 = vmatprep.subr.bf16.mxu0 %v618
    %692 = vmatpush2.bf16.msra.mxu0 %v617
    %693 = vmatprep.subr.bf16.mxu0 %v616
    %694 = vmatpush2.bf16.msra.mxu0 %v615
    %695 = vmatprep.mubr.bf16.mxu0 %v470
    %696 = vmatmul.mubr.bf16.gmra.mxu0 %v469
    %v697 = vpop.f32.mrf.mxu0
    %v698 = vadd.f32 0.0, %v697
    %v699 = vpop.f32.mrf.mxu0
    %v700 = vadd.f32 0.0, %v699
    %v701 = vpop.f32.mrf.mxu0
    %v702 = vpop.f32.mrf.mxu0
    %703 = vdwg.mxu0
    %v720 = vunpack.c.l.b16 %v441
    %v721 = vunpack.c.h.b16 %v441
    %v722 = vunpack.c.l.b16 %v442
    %v723 = vunpack.c.h.b16 %v442
    %v724 = vunpack.c.l.b16 %v443
    %v725 = vunpack.c.h.b16 %v443
    %v726 = vunpack.c.l.b16 %v444
    %v727 = vunpack.c.h.b16 %v444
    %v728 = vunpack.c.l.b16 %v445
    %v729 = vunpack.c.h.b16 %v445
    %v730 = vunpack.c.l.b16 %v446
    %v731 = vunpack.c.h.b16 %v446
    %v732 = vunpack.c.l.b16 %v447
    %v733 = vunpack.c.h.b16 %v447
    %v734 = vunpack.c.l.b16 %v448
    %v735 = vunpack.c.h.b16 %v448
    %v736 = vunpack.c.l.b16 %v449
    %v737 = vunpack.c.h.b16 %v449
    %v738 = vunpack.c.l.b16 %v450
    %v739 = vunpack.c.h.b16 %v450
    %v740 = vunpack.c.l.b16 %v451
    %v741 = vunpack.c.h.b16 %v451
    %v742 = vunpack.c.l.b16 %v452
    %v743 = vunpack.c.h.b16 %v452
    %v744 = vunpack.c.l.b16 %v453
    %v745 = vunpack.c.h.b16 %v453
    %v746 = vunpack.c.l.b16 %v454
    %v747 = vunpack.c.h.b16 %v454
    %v748 = vunpack.c.l.b16 %v455
    %v749 = vunpack.c.h.b16 %v455
    %v750 = vunpack.c.l.b16 %v456
    %v751 = vunpack.c.h.b16 %v456
    %v752 = vpack.c.b16 %v722, %v720
    %v753 = vpack.c.b16 %v723, %v721
    %v754 = vpack.c.b16 %v726, %v724
    %v755 = vpack.c.b16 %v727, %v725
    %v756 = vpack.c.b16 %v730, %v728
    %v757 = vpack.c.b16 %v731, %v729
    %v758 = vpack.c.b16 %v734, %v732
    %v759 = vpack.c.b16 %v735, %v733
    %v760 = vpack.c.b16 %v738, %v736
    %v761 = vpack.c.b16 %v739, %v737
    %v762 = vpack.c.b16 %v742, %v740
    %v763 = vpack.c.b16 %v743, %v741
    %v764 = vpack.c.b16 %v746, %v744
    %v765 = vpack.c.b16 %v747, %v745
    %v766 = vpack.c.b16 %v750, %v748
    %v767 = vpack.c.b16 %v751, %v749
    %784 = vmatprep.subr.bf16.mxu0 %v767
    %785 = vmatpush1.bf16.msra.mxu0 %v766
    %786 = vmatprep.subr.bf16.mxu0 %v765
    %787 = vmatpush1.bf16.msra.mxu0 %v764
    %788 = vmatprep.subr.bf16.mxu0 %v763
    %789 = vmatpush1.bf16.msra.mxu0 %v762
    %790 = vmatprep.subr.bf16.mxu0 %v761
    %791 = vmatpush1.bf16.msra.mxu0 %v760
    %792 = vmatprep.subr.bf16.mxu0 %v759
    %793 = vmatpush1.bf16.msra.mxu0 %v758
    %794 = vmatprep.subr.bf16.mxu0 %v757
    %795 = vmatpush1.bf16.msra.mxu0 %v756
    %796 = vmatprep.subr.bf16.mxu0 %v755
    %797 = vmatpush1.bf16.msra.mxu0 %v754
    %798 = vmatprep.subr.bf16.mxu0 %v753
    %799 = vmatpush1.bf16.msra.mxu0 %v752
    %800 = vmatprep.subr.bf16.mxu0 0
    %801 = vmatpush2.bf16.msra.mxu0 0
    %802 = vmatprep.subr.bf16.mxu0 0
    %803 = vmatpush2.bf16.msra.mxu0 0
    %804 = vmatprep.subr.bf16.mxu0 0
    %805 = vmatpush2.bf16.msra.mxu0 0
    %806 = vmatprep.subr.bf16.mxu0 0
    %807 = vmatpush2.bf16.msra.mxu0 0
    %808 = vmatprep.subr.bf16.mxu0 0
    %809 = vmatpush2.bf16.msra.mxu0 0
    %810 = vmatprep.subr.bf16.mxu0 0
    %811 = vmatpush2.bf16.msra.mxu0 0
    %812 = vmatprep.subr.bf16.mxu0 0
    %813 = vmatpush2.bf16.msra.mxu0 0
    %814 = vmatprep.subr.bf16.mxu0 0
    %815 = vmatpush2.bf16.msra.mxu0 0
    %816 = vmatprep.mubr.bf16.mxu0 0
    %817 = vmatmul.mubr.bf16.gmra.mxu0 %v440
    %v818 = vpop.f32.mrf.mxu0
    %v819 = vadd.f32 %v698, %v818
    %v820 = vpop.f32.mrf.mxu0
    %v821 = vadd.f32 %v700, %v820
    %v822 = vpop.f32.mrf.mxu0
    %v823 = vpop.f32.mrf.mxu0
    %824 = vdwg.mxu0
    %v825 = vld [vmem:[%s11] sm:$0x3]
    %v827 = vlaneseq
    %v828 = vshrl.u32 %v827, 7
    %v829 = vsub.s32 0, %v828
    %v830 = vrot.slane %v825, %v829
    %v831 = vlaneseq
    %v832 = vshrl.u32 %v831, 7
    %v833 = vsub.s32 1, %v832
    %v834 = vrot.slane %v825, %v833
    %v837 = vadd.f32 %v819, %v830
    %v838 = vadd.f32 %v821, %v834
    %v839 = vld [vmem:[%s12] sm:$0xff]
    %v840 = vld [vmem:[%s12 + $0x8] sm:$0xff]
    %v841 = vld [vmem:[%s12 + $0x10] sm:$0xff]
    %v842 = vld [vmem:[%s12 + $0x18] sm:$0xff]
    %v843 = vld [vmem:[%s12 + $0x20] sm:$0xff]
    %v844 = vld [vmem:[%s12 + $0x28] sm:$0xff]
    %v845 = vld [vmem:[%s12 + $0x30] sm:$0xff]
    %v846 = vld [vmem:[%s12 + $0x38] sm:$0xff]
    %v847 = vld [vmem:[%s12 + $0x40] sm:$0xff]
    %v848 = vld [vmem:[%s12 + $0x48] sm:$0xff]
    %v849 = vld [vmem:[%s12 + $0x50] sm:$0xff]
    %v850 = vld [vmem:[%s12 + $0x58] sm:$0xff]
    %v851 = vld [vmem:[%s12 + $0x60] sm:$0xff]
    %v852 = vld [vmem:[%s12 + $0x68] sm:$0xff]
    %v853 = vld [vmem:[%s12 + $0x70] sm:$0xff]
    %v854 = vld [vmem:[%s12 + $0x78] sm:$0xff]
    %v855 = vld [vmem:[%s12 + $0x80] sm:$0xff]
    %v856 = vld [vmem:[%s12 + $0x88] sm:$0xff]
    %v857 = vld [vmem:[%s12 + $0x90] sm:$0xff]
    %v858 = vld [vmem:[%s12 + $0x98] sm:$0xff]
    %v859 = vld [vmem:[%s12 + $0xa0] sm:$0xff]
    %v860 = vld [vmem:[%s12 + $0xa8] sm:$0xff]
    %v861 = vld [vmem:[%s12 + $0xb0] sm:$0xff]
    %v862 = vld [vmem:[%s12 + $0xb8] sm:$0xff]
    %v863 = vld [vmem:[%s12 + $0xc0] sm:$0xff]
    %v864 = vld [vmem:[%s12 + $0xc8] sm:$0xff]
    %v865 = vld [vmem:[%s12 + $0xd0] sm:$0xff]
    %v866 = vld [vmem:[%s12 + $0xd8] sm:$0xff]
    %v867 = vld [vmem:[%s12 + $0xe0] sm:$0xff]
    %v868 = vld [vmem:[%s12 + $0xe8] sm:$0xff]
    %v869 = vld [vmem:[%s12 + $0xf0] sm:$0xff]
    %v870 = vld [vmem:[%s12 + $0xf8] sm:$0xff]
    %v871 = vld [vmem:[%s13] sm:$0xff]
    %v872 = vld [vmem:[#allocation7] sm:$0x1]
    %v873 = vld [vmem:[#allocation9] sm:$0x1]
    %v874 = vsel %vm230, %v837, 0.0
    %v875 = vrot.slane %v874, 4
    %v876 = vadd.f32 %v874, %v875
    %v877 = vrot.slane %v876, 2
    %v878 = vadd.f32 %v876, %v877
    %v879 = vrot.slane %v878, 1
    %v880 = vadd.f32 %v878, %v879
    %v881 = vsel %vm230, %v838, 0.0
    %v882 = vrot.slane %v881, 4
    %v883 = vadd.f32 %v881, %v882
    %v884 = vrot.slane %v883, 2
    %v885 = vadd.f32 %v883, %v884
    %v886 = vrot.slane %v885, 1
    %v887 = vadd.f32 %v885, %v886
    %v888 = vmul.f32 %v837, %v837
    %v889 = vmul.f32 %v838, %v838
    %v890 = vsel %vm230, %v888, 0.0
    %v891 = vrot.slane %v890, 4
    %v892 = vadd.f32 %v890, %v891
    %v893 = vrot.slane %v892, 2
    %v894 = vadd.f32 %v892, %v893
    %v895 = vrot.slane %v894, 1
    %v896 = vadd.f32 %v894, %v895
    %v897 = vsel %vm230, %v889, 0.0
    %v898 = vrot.slane %v897, 4
    %v899 = vadd.f32 %v897, %v898
    %v900 = vrot.slane %v899, 2
    %v901 = vadd.f32 %v899, %v900
    %v902 = vrot.slane %v901, 1
    %v903 = vadd.f32 %v901, %v902
    %v904 = vsel %vm246, %v880, %v896
    %v905 = vsel %vm246, %v887, %v903
    %906 = vmatprep.subr.mxu0 0.0
    %907 = vmatpush1.msra.mxu0 %v854
    %908 = vmatprep.subr.mxu0 0.0
    %909 = vmatpush1.msra.mxu0 %v853
    %910 = vmatprep.subr.mxu0 0.0
    %911 = vmatpush1.msra.mxu0 %v852
    %912 = vmatprep.subr.mxu0 0.0
    %913 = vmatpush1.msra.mxu0 %v851
    %914 = vmatprep.subr.mxu0 0.0
    %915 = vmatpush1.msra.mxu0 %v850
    %916 = vmatprep.subr.mxu0 0.0
    %917 = vmatpush1.msra.mxu0 %v849
    %918 = vmatprep.subr.mxu0 0.0
    %919 = vmatpush1.msra.mxu0 %v848
    %920 = vmatprep.subr.mxu0 0.0
    %921 = vmatpush1.msra.mxu0 %v847
    %922 = vmatprep.subr.mxu0 0.0
    %923 = vmatpush1.msra.mxu0 %v846
    %924 = vmatprep.subr.mxu0 0.0
    %925 = vmatpush1.msra.mxu0 %v845
    %926 = vmatprep.subr.mxu0 0.0
    %927 = vmatpush1.msra.mxu0 %v844
    %928 = vmatprep.subr.mxu0 0.0
    %929 = vmatpush1.msra.mxu0 %v843
    %930 = vmatprep.subr.mxu0 0.0
    %931 = vmatpush1.msra.mxu0 %v842
    %932 = vmatprep.subr.mxu0 0.0
    %933 = vmatpush1.msra.mxu0 %v841
    %934 = vmatprep.subr.mxu0 0.0
    %935 = vmatpush1.msra.mxu0 %v840
    %936 = vmatprep.subr.mxu0 0.0
    %937 = vmatpush1.msra.mxu0 %v839
    %938 = vmatprep.subr.mxu0 0.0
    %939 = vmatpush2.msra.mxu0 %v870
    %940 = vmatprep.subr.mxu0 0.0
    %941 = vmatpush2.msra.mxu0 %v869
    %942 = vmatprep.subr.mxu0 0.0
    %943 = vmatpush2.msra.mxu0 %v868
    %944 = vmatprep.subr.mxu0 0.0
    %945 = vmatpush2.msra.mxu0 %v867
    %946 = vmatprep.subr.mxu0 0.0
    %947 = vmatpush2.msra.mxu0 %v866
    %948 = vmatprep.subr.mxu0 0.0
    %949 = vmatpush2.msra.mxu0 %v865
    %950 = vmatprep.subr.mxu0 0.0
    %951 = vmatpush2.msra.mxu0 %v864
    %952 = vmatprep.subr.mxu0 0.0
    %953 = vmatpush2.msra.mxu0 %v863
    %954 = vmatprep.subr.mxu0 0.0
    %955 = vmatpush2.msra.mxu0 %v862
    %956 = vmatprep.subr.mxu0 0.0
    %957 = vmatpush2.msra.mxu0 %v861
    %958 = vmatprep.subr.mxu0 0.0
    %959 = vmatpush2.msra.mxu0 %v860
    %960 = vmatprep.subr.mxu0 0.0
    %961 = vmatpush2.msra.mxu0 %v859
    %962 = vmatprep.subr.mxu0 0.0
    %963 = vmatpush2.msra.mxu0 %v858
    %964 = vmatprep.subr.mxu0 0.0
    %965 = vmatpush2.msra.mxu0 %v857
    %966 = vmatprep.subr.mxu0 0.0
    %967 = vmatpush2.msra.mxu0 %v856
    %968 = vmatprep.subr.mxu0 0.0
    %969 = vmatpush2.msra.mxu0 %v855
    %970 = vmatprep.mubr.f32.mxu0 %v905
    %971 = vmatmul.mubr.f32.gmra.mxu0 %v904
    %v972 = vpop.f32.mrf.mxu0
    %v973 = vadd.f32 0.0, %v972
    %v974 = vpop.f32.mrf.mxu0
    %975 = vdwg.mxu0
    %v976 = vrcp.pop 128.0
    %v977 = vmul.f32 %v973, %v976
    %v978 = vmul.f32 %v977, %v977
    %v980 = vrot.slane %v978, 7
    %v982 = vsub.f32 %v977, %v980
    %v983 = vadd.f32 %v982, 1e-05
    %v984 = vrsqrt.pop %v983
    %v987 = vunpack.c.l.s4 1966171168
    %v988 = vunpack.c.0.s8 %v987
    %v989 = vlaneseq
    %v990 = vshrl.u32 %v989, 7
    %v991 = vsub.s32 %v988, %v990
    %v992 = vrot.slane %v984, %v991
    %v993 = vcombine.high %v992, %v992
    %v995 = vunpack.c.l.s4 1966171168
    %v996 = vunpack.c.0.s8 %v995
    %v997 = vlaneseq
    %v998 = vshrl.u32 %v997, 7
    %v999 = vsub.s32 %v996, %v998
    %v1000 = vrot.slane %v993, %v999
    %v1002 = vmul.f32 %v872, %v1000
    %v1003 = vmul.f32 %v977, %v1002
    %v1004 = vsub.f32 %v873, %v1003
    %v1006 = vlaneseq
    %v1007 = vshrl.u32 %v1006, 7
    %v1008 = vsub.s32 0, %v1007
    %v1009 = vrot.slane %v1004, %v1008
    %v1011 = vsel %vm246, %v1002, %v1009
    %v1013 = vcombine.high %v871, %v871
    %vm1014 = vcmask 31744
    %v1016 = vsel %vm1014, %v1011, 0
    %vm1018 = vcmask 1043456
    %v1019 = vsel %vm1018, %v871, 0
    %v1021 = vsel %vm1018, %v1013, 0
    %1023 = vmatprep.subr.mxu0 0.0
    %1024 = vmatpush1.msra.mxu0 0.0
    %1025 = vmatprep.subr.mxu0 0.0
    %1026 = vmatpush1.msra.mxu0 0.0
    %1027 = vmatprep.subr.mxu0 0.0
    %1028 = vmatpush1.msra.mxu0 0.0
    %1029 = vmatprep.subr.mxu0 0.0
    %1030 = vmatpush1.msra.mxu0 0.0
    %1031 = vmatprep.subr.mxu0 0.0
    %1032 = vmatpush1.msra.mxu0 0.0
    %1033 = vmatprep.subr.mxu0 0.0
    %1034 = vmatpush1.msra.mxu0 0.0
    %1035 = vmatprep.subr.mxu0 0.0
    %1036 = vmatpush1.msra.mxu0 0.0
    %1037 = vmatprep.subr.mxu0 0.0
    %1038 = vmatpush1.msra.mxu0 0.0
    %1039 = vmatprep.subr.mxu0 0.0
    %1040 = vmatpush1.msra.mxu0 0.0
    %1041 = vmatprep.subr.mxu0 0.0
    %1042 = vmatpush1.msra.mxu0 0.0
    %1043 = vmatprep.subr.mxu0 0.0
    %1044 = vmatpush1.msra.mxu0 0.0
    %1045 = vmatprep.subr.mxu0 0.0
    %1046 = vmatpush1.msra.mxu0 0.0
    %1047 = vmatprep.subr.mxu0 0.0
    %1048 = vmatpush1.msra.mxu0 0.0
    %1049 = vmatprep.subr.mxu0 0.0
    %1050 = vmatpush1.msra.mxu0 0.0
    %1051 = vmatprep.subr.mxu0 0.0
    %1052 = vmatpush1.msra.mxu0 0.0
    %1053 = vmatprep.subr.mxu0 %v1021
    %1054 = vmatpush1.msra.mxu0 %v1019
    %1055 = vmatprep.subr.mxu0 0.0
    %1056 = vmatpush2.msra.mxu0 0.0
    %1057 = vmatprep.subr.mxu0 0.0
    %1058 = vmatpush2.msra.mxu0 0.0
    %1059 = vmatprep.subr.mxu0 0.0
    %1060 = vmatpush2.msra.mxu0 0.0
    %1061 = vmatprep.subr.mxu0 0.0
    %1062 = vmatpush2.msra.mxu0 0.0
    %1063 = vmatprep.subr.mxu0 0.0
    %1064 = vmatpush2.msra.mxu0 0.0
    %1065 = vmatprep.subr.mxu0 0.0
    %1066 = vmatpush2.msra.mxu0 0.0
    %1067 = vmatprep.subr.mxu0 0.0
    %1068 = vmatpush2.msra.mxu0 0.0
    %1069 = vmatprep.subr.mxu0 0.0
    %1070 = vmatpush2.msra.mxu0 0.0
    %1071 = vmatprep.subr.mxu0 0.0
    %1072 = vmatpush2.msra.mxu0 0.0
    %1073 = vmatprep.subr.mxu0 0.0
    %1074 = vmatpush2.msra.mxu0 0.0
    %1075 = vmatprep.subr.mxu0 0.0
    %1076 = vmatpush2.msra.mxu0 0.0
    %1077 = vmatprep.subr.mxu0 0.0
    %1078 = vmatpush2.msra.mxu0 0.0
    %1079 = vmatprep.subr.mxu0 0.0
    %1080 = vmatpush2.msra.mxu0 0.0
    %1081 = vmatprep.subr.mxu0 0.0
    %1082 = vmatpush2.msra.mxu0 0.0
    %1083 = vmatprep.subr.mxu0 0.0
    %1084 = vmatpush2.msra.mxu0 0.0
    %1085 = vmatprep.subr.mxu0 0.0
    %1086 = vmatpush2.msra.mxu0 0.0
    %1087 = vmatprep.mubr.f32.mxu0 0.0
    %1088 = vmatmul.mubr.f32.gmra.mxu0 %v1016
    %v1089 = vpop.f32.mrf.mxu0
    %v1090 = vadd.f32 0.0, %v1089
    %v1091 = vpop.f32.mrf.mxu0
    %v1092 = vadd.f32 0.0, %v1091
    %1093 = vdwg.mxu0
    %v1094 = vlaneseq
    %v1095 = vshrl.u32 %v1094, 7
    %v1096 = vsub.s32 0, %v1095
    %v1097 = vrot.slane %v1090, %v1096
    %v1098 = vlaneseq
    %v1099 = vshrl.u32 %v1098, 7
    %v1100 = vsub.s32 0, %v1099
    %v1101 = vrot.slane %v1092, %v1100
    %v1102 = vmul.f32 %v837, %v1097
    %v1103 = vmul.f32 %v838, %v1101
    %v1104 = vlaneseq
    %v1105 = vshrl.u32 %v1104, 7
    %v1106 = vsub.s32 1, %v1105
    %v1107 = vrot.slane %v1090, %v1106
    %v1108 = vlaneseq
    %v1109 = vshrl.u32 %v1108, 7
    %v1110 = vsub.s32 1, %v1109
    %v1111 = vrot.slane %v1092, %v1110
    %v1112 = vadd.f32 %v1102, %v1107
    %v1113 = vadd.f32 %v1103, %v1111
    %v1114 = vmax.f32 %v1112, 0.0
    %v1115 = vmax.f32 %v1113, 0.0
    %v1118 = vcombine.low %v1114, %v1115
    %v1120 = vunpack.c.l.s4 1983009808
    %v1121 = vunpack.c.0.s8 %v1120
    %v1122 = vlaneseq
    %v1123 = vshrl.u32 %v1122, 7
    %v1124 = vsub.s32 %v1121, %v1123
    %v1125 = vrot.slane %v1118, %v1124
    %1127 = vst [vmem:[%s20] sm:$0xf] %v1125
    %v1128 = vpack.c.bf16 %v1114, %v1114
    %v1129 = vpack.c.bf16 %v1115, %v1115
    %v1130 = vld [vmem:[%s16] sm:$0xff]
    %v1131 = vld [vmem:[%s16 + $0x8] sm:$0xff]
    %v1132 = vld [vmem:[%s16 + $0x10] sm:$0xff]
    %v1133 = vld [vmem:[%s16 + $0x18] sm:$0xff]
    %v1134 = vld [vmem:[%s16 + $0x20] sm:$0xff]
    %v1135 = vld [vmem:[%s16 + $0x28] sm:$0xff]
    %v1136 = vld [vmem:[%s16 + $0x30] sm:$0xff]
    %v1137 = vld [vmem:[%s16 + $0x38] sm:$0xff]
    %v1138 = vld [vmem:[%s16 + $0x40] sm:$0xff]
    %v1139 = vld [vmem:[%s16 + $0x48] sm:$0xff]
    %v1140 = vld [vmem:[%s16 + $0x50] sm:$0xff]
    %v1141 = vld [vmem:[%s16 + $0x58] sm:$0xff]
    %v1142 = vld [vmem:[%s16 + $0x60] sm:$0xff]
    %v1143 = vld [vmem:[%s16 + $0x68] sm:$0xff]
    %v1144 = vld [vmem:[%s16 + $0x70] sm:$0xff]
    %v1145 = vld [vmem:[%s16 + $0x78] sm:$0xff]
    %v1146 = vld [vmem:[%s16 + $0x80] sm:$0xff]
    %v1147 = vld [vmem:[%s16 + $0x88] sm:$0xff]
    %v1148 = vld [vmem:[%s16 + $0x90] sm:$0xff]
    %v1149 = vld [vmem:[%s16 + $0x98] sm:$0xff]
    %v1150 = vld [vmem:[%s16 + $0xa0] sm:$0xff]
    %v1151 = vld [vmem:[%s16 + $0xa8] sm:$0xff]
    %v1152 = vld [vmem:[%s16 + $0xb0] sm:$0xff]
    %v1153 = vld [vmem:[%s16 + $0xb8] sm:$0xff]
    %v1154 = vld [vmem:[%s16 + $0xc0] sm:$0xff]
    %v1155 = vld [vmem:[%s16 + $0xc8] sm:$0xff]
    %v1156 = vld [vmem:[%s16 + $0xd0] sm:$0xff]
    %v1157 = vld [vmem:[%s16 + $0xd8] sm:$0xff]
    %v1158 = vld [vmem:[%s16 + $0xe0] sm:$0xff]
    %v1159 = vld [vmem:[%s16 + $0xe8] sm:$0xff]
    %v1160 = vld [vmem:[%s16 + $0xf0] sm:$0xff]
    %v1161 = vld [vmem:[%s16 + $0xf8] sm:$0xff]
    %v1162 = vld [vmem:[%s16 + $0x100] sm:$0xff]
    %v1163 = vld [vmem:[%s16 + $0x108] sm:$0xff]
    %v1164 = vld [vmem:[%s16 + $0x110] sm:$0xff]
    %v1165 = vld [vmem:[%s16 + $0x118] sm:$0xff]
    %v1166 = vld [vmem:[%s16 + $0x120] sm:$0xff]
    %v1167 = vld [vmem:[%s16 + $0x128] sm:$0xff]
    %v1168 = vld [vmem:[%s16 + $0x130] sm:$0xff]
    %v1169 = vld [vmem:[%s16 + $0x138] sm:$0xff]
    %v1170 = vld [vmem:[%s16 + $0x140] sm:$0xff]
    %v1171 = vld [vmem:[%s16 + $0x148] sm:$0xff]
    %v1172 = vld [vmem:[%s16 + $0x150] sm:$0xff]
    %v1173 = vld [vmem:[%s16 + $0x158] sm:$0xff]
    %v1174 = vld [vmem:[%s16 + $0x160] sm:$0xff]
    %v1175 = vld [vmem:[%s16 + $0x168] sm:$0xff]
    %v1176 = vld [vmem:[%s16 + $0x170] sm:$0xff]
    %v1177 = vld [vmem:[%s16 + $0x178] sm:$0xff]
    %v1178 = vld [vmem:[%s16 + $0x180] sm:$0xff]
    %v1179 = vld [vmem:[%s16 + $0x188] sm:$0xff]
    %v1180 = vld [vmem:[%s16 + $0x190] sm:$0xff]
    %v1181 = vld [vmem:[%s16 + $0x198] sm:$0xff]
    %v1182 = vld [vmem:[%s16 + $0x1a0] sm:$0xff]
    %v1183 = vld [vmem:[%s16 + $0x1a8] sm:$0xff]
    %v1184 = vld [vmem:[%s16 + $0x1b0] sm:$0xff]
    %v1185 = vld [vmem:[%s16 + $0x1b8] sm:$0xff]
    %v1186 = vld [vmem:[%s16 + $0x1c0] sm:$0xff]
    %v1187 = vld [vmem:[%s16 + $0x1c8] sm:$0xff]
    %v1188 = vld [vmem:[%s16 + $0x1d0] sm:$0xff]
    %v1189 = vld [vmem:[%s16 + $0x1d8] sm:$0xff]
    %v1190 = vld [vmem:[%s16 + $0x1e0] sm:$0xff]
    %v1191 = vld [vmem:[%s16 + $0x1e8] sm:$0xff]
    %v1192 = vld [vmem:[%s16 + $0x1f0] sm:$0xff]
    %v1193 = vld [vmem:[%s16 + $0x1f8] sm:$0xff]
    %v1194 = vld [vmem:[%s16 + $0x200] sm:$0xff]
    %v1195 = vld [vmem:[%s16 + $0x208] sm:$0xff]
    %v1196 = vld [vmem:[%s16 + $0x210] sm:$0xff]
    %v1197 = vld [vmem:[%s16 + $0x218] sm:$0xff]
    %v1198 = vld [vmem:[%s16 + $0x220] sm:$0xff]
    %v1199 = vld [vmem:[%s16 + $0x228] sm:$0xff]
    %v1200 = vld [vmem:[%s16 + $0x230] sm:$0xff]
    %v1201 = vld [vmem:[%s16 + $0x238] sm:$0xff]
    %v1202 = vld [vmem:[%s16 + $0x240] sm:$0xff]
    %v1203 = vld [vmem:[%s16 + $0x248] sm:$0xff]
    %v1204 = vld [vmem:[%s16 + $0x250] sm:$0xff]
    %v1205 = vld [vmem:[%s16 + $0x258] sm:$0xff]
    %v1206 = vld [vmem:[%s16 + $0x260] sm:$0xff]
    %v1207 = vld [vmem:[%s16 + $0x268] sm:$0xff]
    %v1208 = vld [vmem:[%s16 + $0x270] sm:$0xff]
    %v1209 = vld [vmem:[%s16 + $0x278] sm:$0xff]
    %v1210 = vld [vmem:[%s16 + $0x280] sm:$0xff]
    %v1211 = vld [vmem:[%s16 + $0x288] sm:$0xff]
    %v1212 = vld [vmem:[%s16 + $0x290] sm:$0xff]
    %v1213 = vld [vmem:[%s16 + $0x298] sm:$0xff]
    %v1214 = vld [vmem:[%s16 + $0x2a0] sm:$0xff]
    %v1215 = vld [vmem:[%s16 + $0x2a8] sm:$0xff]
    %v1216 = vld [vmem:[%s16 + $0x2b0] sm:$0xff]
    %v1217 = vld [vmem:[%s16 + $0x2b8] sm:$0xff]
    %v1218 = vld [vmem:[%s16 + $0x2c0] sm:$0xff]
    %v1219 = vld [vmem:[%s16 + $0x2c8] sm:$0xff]
    %v1220 = vld [vmem:[%s16 + $0x2d0] sm:$0xff]
    %v1221 = vld [vmem:[%s16 + $0x2d8] sm:$0xff]
    %v1222 = vld [vmem:[%s16 + $0x2e0] sm:$0xff]
    %v1223 = vld [vmem:[%s16 + $0x2e8] sm:$0xff]
    %v1224 = vld [vmem:[%s16 + $0x2f0] sm:$0xff]
    %v1225 = vld [vmem:[%s16 + $0x2f8] sm:$0xff]
    %v1226 = vld [vmem:[%s2] sm:$0xff]
    %v1228 = vcombine.high %v1226, %v1226
    %v1230 = vunpack.c.l.s4 1983009808
    %v1231 = vunpack.c.0.s8 %v1230
    %v1232 = vlaneseq
    %v1233 = vshrl.u32 %v1232, 7
    %v1234 = vsub.s32 %v1231, %v1233
    %v1235 = vrot.slane %v1226, %v1234
    %v1237 = vunpack.c.l.s4 1983009808
    %v1238 = vunpack.c.0.s8 %v1237
    %v1239 = vlaneseq
    %v1240 = vshrl.u32 %v1239, 7
    %v1241 = vsub.s32 %v1238, %v1240
    %v1242 = vrot.slane %v1228, %v1241
    %v1243 = vcombine.high %v1235, %v1235
    %v1244 = vcombine.high %v1242, %v1242
    %v1249 = vpack.c.bf16 %v1235, %v1235
    %v1250 = vpack.c.bf16 %v1243, %v1243
    %v1251 = vpack.c.bf16 %v1242, %v1242
    %v1252 = vpack.c.bf16 %v1244, %v1244
    %v1253 = vld [vmem:[#allocation10] sm:$0xff]
    %v1254 = vld [vmem:[#allocation10 + $0x8] sm:$0xff]
    %v1255 = vld [vmem:[#allocation10 + $0x10] sm:$0xff]
    %v1256 = vld [vmem:[#allocation10 + $0x18] sm:$0xff]
    %v1257 = vld [vmem:[#allocation10 + $0x20] sm:$0xff]
    %v1258 = vld [vmem:[#allocation10 + $0x28] sm:$0xff]
    %v1259 = vld [vmem:[#allocation10 + $0x30] sm:$0xff]
    %v1260 = vld [vmem:[#allocation10 + $0x38] sm:$0xff]
    %v1261 = vld [vmem:[#allocation10 + $0x40] sm:$0xff]
    %v1262 = vld [vmem:[#allocation10 + $0x48] sm:$0xff]
    %v1263 = vld [vmem:[#allocation10 + $0x50] sm:$0xff]
    %v1264 = vld [vmem:[#allocation10 + $0x58] sm:$0xff]
    %v1265 = vld [vmem:[#allocation10 + $0x60] sm:$0xff]
    %v1266 = vld [vmem:[#allocation10 + $0x68] sm:$0xff]
    %v1267 = vld [vmem:[#allocation10 + $0x70] sm:$0xff]
    %v1268 = vld [vmem:[#allocation10 + $0x78] sm:$0xff]
    %v1269 = vld [vmem:[#allocation10 + $0x80] sm:$0xff]
    %v1270 = vld [vmem:[#allocation10 + $0x88] sm:$0xff]
    %v1271 = vld [vmem:[#allocation10 + $0x90] sm:$0xff]
    %v1272 = vld [vmem:[#allocation10 + $0x98] sm:$0xff]
    %v1273 = vld [vmem:[#allocation10 + $0xa0] sm:$0xff]
    %v1274 = vld [vmem:[#allocation10 + $0xa8] sm:$0xff]
    %v1275 = vld [vmem:[#allocation10 + $0xb0] sm:$0xff]
    %v1276 = vld [vmem:[#allocation10 + $0xb8] sm:$0xff]
    %v1277 = vld [vmem:[#allocation10 + $0xc0] sm:$0xff]
    %v1278 = vld [vmem:[#allocation10 + $0xc8] sm:$0xff]
    %v1279 = vld [vmem:[#allocation10 + $0xd0] sm:$0xff]
    %v1280 = vld [vmem:[#allocation10 + $0xd8] sm:$0xff]
    %v1281 = vld [vmem:[#allocation10 + $0xe0] sm:$0xff]
    %v1282 = vld [vmem:[#allocation10 + $0xe8] sm:$0xff]
    %v1283 = vld [vmem:[#allocation10 + $0xf0] sm:$0xff]
    %v1284 = vld [vmem:[#allocation10 + $0xf8] sm:$0xff]
    %v1285 = vld [vmem:[#allocation10 + $0x100] sm:$0xff]
    %v1286 = vld [vmem:[#allocation10 + $0x108] sm:$0xff]
    %v1287 = vld [vmem:[#allocation10 + $0x110] sm:$0xff]
    %v1288 = vld [vmem:[#allocation10 + $0x118] sm:$0xff]
    %v1289 = vld [vmem:[#allocation10 + $0x120] sm:$0xff]
    %v1290 = vld [vmem:[#allocation10 + $0x128] sm:$0xff]
    %v1291 = vld [vmem:[#allocation10 + $0x130] sm:$0xff]
    %v1292 = vld [vmem:[#allocation10 + $0x138] sm:$0xff]
    %v1293 = vld [vmem:[#allocation10 + $0x140] sm:$0xff]
    %v1294 = vld [vmem:[#allocation10 + $0x148] sm:$0xff]
    %v1295 = vld [vmem:[#allocation10 + $0x150] sm:$0xff]
    %v1296 = vld [vmem:[#allocation10 + $0x158] sm:$0xff]
    %v1297 = vld [vmem:[#allocation10 + $0x160] sm:$0xff]
    %v1298 = vld [vmem:[#allocation10 + $0x168] sm:$0xff]
    %v1299 = vld [vmem:[#allocation10 + $0x170] sm:$0xff]
    %v1300 = vld [vmem:[#allocation10 + $0x178] sm:$0xff]
    %v1301 = vld [vmem:[#allocation10 + $0x180] sm:$0xff]
    %v1302 = vld [vmem:[#allocation10 + $0x188] sm:$0xff]
    %v1303 = vld [vmem:[#allocation10 + $0x190] sm:$0xff]
    %v1304 = vld [vmem:[#allocation10 + $0x198] sm:$0xff]
    %v1305 = vld [vmem:[#allocation10 + $0x1a0] sm:$0xff]
    %v1306 = vld [vmem:[#allocation10 + $0x1a8] sm:$0xff]
    %v1307 = vld [vmem:[#allocation10 + $0x1b0] sm:$0xff]
    %v1308 = vld [vmem:[#allocation10 + $0x1b8] sm:$0xff]
    %v1309 = vld [vmem:[#allocation10 + $0x1c0] sm:$0xff]
    %v1310 = vld [vmem:[#allocation10 + $0x1c8] sm:$0xff]
    %v1311 = vld [vmem:[#allocation10 + $0x1d0] sm:$0xff]
    %v1312 = vld [vmem:[#allocation10 + $0x1d8] sm:$0xff]
    %v1313 = vld [vmem:[#allocation10 + $0x1e0] sm:$0xff]
    %v1314 = vld [vmem:[#allocation10 + $0x1e8] sm:$0xff]
    %v1315 = vld [vmem:[#allocation10 + $0x1f0] sm:$0xff]
    %v1316 = vld [vmem:[#allocation10 + $0x1f8] sm:$0xff]
    %v1317 = vld [vmem:[#allocation10 + $0x200] sm:$0xff]
    %v1318 = vld [vmem:[#allocation10 + $0x208] sm:$0xff]
    %v1319 = vld [vmem:[#allocation10 + $0x210] sm:$0xff]
    %v1320 = vld [vmem:[#allocation10 + $0x218] sm:$0xff]
    %v1321 = vld [vmem:[#allocation10 + $0x220] sm:$0xff]
    %v1322 = vld [vmem:[#allocation10 + $0x228] sm:$0xff]
    %v1323 = vld [vmem:[#allocation10 + $0x230] sm:$0xff]
    %v1324 = vld [vmem:[#allocation10 + $0x238] sm:$0xff]
    %v1325 = vld [vmem:[#allocation10 + $0x240] sm:$0xff]
    %v1326 = vld [vmem:[#allocation10 + $0x248] sm:$0xff]
    %v1327 = vld [vmem:[#allocation10 + $0x250] sm:$0xff]
    %v1328 = vld [vmem:[#allocation10 + $0x258] sm:$0xff]
    %v1329 = vld [vmem:[#allocation10 + $0x260] sm:$0xff]
    %v1330 = vld [vmem:[#allocation10 + $0x268] sm:$0xff]
    %v1331 = vld [vmem:[#allocation10 + $0x270] sm:$0xff]
    %v1332 = vld [vmem:[#allocation10 + $0x278] sm:$0xff]
    %v1333 = vld [vmem:[#allocation10 + $0x280] sm:$0xff]
    %v1334 = vld [vmem:[#allocation10 + $0x288] sm:$0xff]
    %v1335 = vld [vmem:[#allocation10 + $0x290] sm:$0xff]
    %v1336 = vld [vmem:[#allocation10 + $0x298] sm:$0xff]
    %v1337 = vld [vmem:[#allocation10 + $0x2a0] sm:$0xff]
    %v1338 = vld [vmem:[#allocation10 + $0x2a8] sm:$0xff]
    %v1339 = vld [vmem:[#allocation10 + $0x2b0] sm:$0xff]
    %v1340 = vld [vmem:[#allocation10 + $0x2b8] sm:$0xff]
    %v1341 = vld [vmem:[#allocation10 + $0x2c0] sm:$0xff]
    %v1342 = vld [vmem:[#allocation10 + $0x2c8] sm:$0xff]
    %v1343 = vld [vmem:[#allocation10 + $0x2d0] sm:$0xff]
    %v1344 = vld [vmem:[#allocation10 + $0x2d8] sm:$0xff]
    %v1345 = vld [vmem:[#allocation10 + $0x2e0] sm:$0xff]
    %v1346 = vld [vmem:[#allocation10 + $0x2e8] sm:$0xff]
    %v1347 = vld [vmem:[#allocation10 + $0x2f0] sm:$0xff]
    %v1348 = vld [vmem:[#allocation10 + $0x2f8] sm:$0xff]
    %v1349 = vld [vmem:[#allocation10 + $0x300] sm:$0xff]
    %v1350 = vld [vmem:[#allocation10 + $0x308] sm:$0xff]
    %v1351 = vld [vmem:[#allocation10 + $0x310] sm:$0xff]
    %v1352 = vld [vmem:[#allocation10 + $0x318] sm:$0xff]
    %v1353 = vld [vmem:[#allocation10 + $0x320] sm:$0xff]
    %v1354 = vld [vmem:[#allocation10 + $0x328] sm:$0xff]
    %v1355 = vld [vmem:[#allocation10 + $0x330] sm:$0xff]
    %v1356 = vld [vmem:[#allocation10 + $0x338] sm:$0xff]
    %v1357 = vld [vmem:[#allocation10 + $0x340] sm:$0xff]
    %v1358 = vld [vmem:[#allocation10 + $0x348] sm:$0xff]
    %v1359 = vld [vmem:[#allocation10 + $0x350] sm:$0xff]
    %v1360 = vld [vmem:[#allocation10 + $0x358] sm:$0xff]
    %v1361 = vld [vmem:[#allocation10 + $0x360] sm:$0xff]
    %v1362 = vld [vmem:[#allocation10 + $0x368] sm:$0xff]
    %v1363 = vld [vmem:[#allocation10 + $0x370] sm:$0xff]
    %v1364 = vld [vmem:[#allocation10 + $0x378] sm:$0xff]
    %v1365 = vld [vmem:[#allocation10 + $0x380] sm:$0xff]
    %v1366 = vld [vmem:[#allocation10 + $0x388] sm:$0xff]
    %v1367 = vld [vmem:[#allocation10 + $0x390] sm:$0xff]
    %v1368 = vld [vmem:[#allocation10 + $0x398] sm:$0xff]
    %v1369 = vld [vmem:[#allocation10 + $0x3a0] sm:$0xff]
    %v1370 = vld [vmem:[#allocation10 + $0x3a8] sm:$0xff]
    %v1371 = vld [vmem:[#allocation10 + $0x3b0] sm:$0xff]
    %v1372 = vld [vmem:[#allocation10 + $0x3b8] sm:$0xff]
    %v1373 = vld [vmem:[#allocation10 + $0x3c0] sm:$0xff]
    %v1374 = vld [vmem:[#allocation10 + $0x3c8] sm:$0xff]
    %v1375 = vld [vmem:[#allocation10 + $0x3d0] sm:$0xff]
    %v1376 = vld [vmem:[#allocation10 + $0x3d8] sm:$0xff]
    %v1377 = vld [vmem:[#allocation10 + $0x3e0] sm:$0xff]
    %v1378 = vld [vmem:[#allocation10 + $0x3e8] sm:$0xff]
    %v1379 = vld [vmem:[#allocation10 + $0x3f0] sm:$0xff]
    %v1380 = vld [vmem:[#allocation10 + $0x3f8] sm:$0xff]
    %v1381 = vld [vmem:[#allocation10 + $0x400] sm:$0xff]
    %v1382 = vld [vmem:[#allocation10 + $0x408] sm:$0xff]
    %v1383 = vld [vmem:[#allocation10 + $0x410] sm:$0xff]
    %v1384 = vld [vmem:[#allocation10 + $0x418] sm:$0xff]
    %v1385 = vld [vmem:[#allocation10 + $0x420] sm:$0xff]
    %v1386 = vld [vmem:[#allocation10 + $0x428] sm:$0xff]
    %v1387 = vld [vmem:[#allocation10 + $0x430] sm:$0xff]
    %v1388 = vld [vmem:[#allocation10 + $0x438] sm:$0xff]
    %v1389 = vld [vmem:[#allocation10 + $0x440] sm:$0xff]
    %v1390 = vld [vmem:[#allocation10 + $0x448] sm:$0xff]
    %v1391 = vld [vmem:[#allocation10 + $0x450] sm:$0xff]
    %v1392 = vld [vmem:[#allocation10 + $0x458] sm:$0xff]
    %v1393 = vld [vmem:[#allocation10 + $0x460] sm:$0xff]
    %v1394 = vld [vmem:[#allocation10 + $0x468] sm:$0xff]
    %v1395 = vld [vmem:[#allocation10 + $0x470] sm:$0xff]
    %v1396 = vld [vmem:[#allocation10 + $0x478] sm:$0xff]
    %v1397 = vld [vmem:[#allocation10 + $0x480] sm:$0xff]
    %v1398 = vld [vmem:[#allocation10 + $0x488] sm:$0xff]
    %v1399 = vld [vmem:[#allocation10 + $0x490] sm:$0xff]
    %v1400 = vld [vmem:[#allocation10 + $0x498] sm:$0xff]
    %v1401 = vld [vmem:[#allocation10 + $0x4a0] sm:$0xff]
    %v1402 = vld [vmem:[#allocation10 + $0x4a8] sm:$0xff]
    %v1403 = vld [vmem:[#allocation10 + $0x4b0] sm:$0xff]
    %v1404 = vld [vmem:[#allocation10 + $0x4b8] sm:$0xff]
    %v1405 = vld [vmem:[#allocation10 + $0x4c0] sm:$0xff]
    %v1406 = vld [vmem:[#allocation10 + $0x4c8] sm:$0xff]
    %v1407 = vld [vmem:[#allocation10 + $0x4d0] sm:$0xff]
    %v1408 = vld [vmem:[#allocation10 + $0x4d8] sm:$0xff]
    %v1409 = vld [vmem:[#allocation10 + $0x4e0] sm:$0xff]
    %v1410 = vld [vmem:[#allocation10 + $0x4e8] sm:$0xff]
    %v1411 = vld [vmem:[#allocation10 + $0x4f0] sm:$0xff]
    %v1412 = vld [vmem:[#allocation10 + $0x4f8] sm:$0xff]
    %v1413 = vld [vmem:[#allocation10 + $0x500] sm:$0xff]
    %v1414 = vld [vmem:[#allocation10 + $0x508] sm:$0xff]
    %v1415 = vld [vmem:[#allocation10 + $0x510] sm:$0xff]
    %v1416 = vld [vmem:[#allocation10 + $0x518] sm:$0xff]
    %v1417 = vld [vmem:[#allocation10 + $0x520] sm:$0xff]
    %v1418 = vld [vmem:[#allocation10 + $0x528] sm:$0xff]
    %v1419 = vld [vmem:[#allocation10 + $0x530] sm:$0xff]
    %v1420 = vld [vmem:[#allocation10 + $0x538] sm:$0xff]
    %v1421 = vld [vmem:[#allocation10 + $0x540] sm:$0xff]
    %v1422 = vld [vmem:[#allocation10 + $0x548] sm:$0xff]
    %v1423 = vld [vmem:[#allocation10 + $0x550] sm:$0xff]
    %v1424 = vld [vmem:[#allocation10 + $0x558] sm:$0xff]
    %v1425 = vld [vmem:[#allocation10 + $0x560] sm:$0xff]
    %v1426 = vld [vmem:[#allocation10 + $0x568] sm:$0xff]
    %v1427 = vld [vmem:[#allocation10 + $0x570] sm:$0xff]
    %v1428 = vld [vmem:[#allocation10 + $0x578] sm:$0xff]
    %v1429 = vld [vmem:[#allocation10 + $0x580] sm:$0xff]
    %v1430 = vld [vmem:[#allocation10 + $0x588] sm:$0xff]
    %v1431 = vld [vmem:[#allocation10 + $0x590] sm:$0xff]
    %v1432 = vld [vmem:[#allocation10 + $0x598] sm:$0xff]
    %v1433 = vld [vmem:[#allocation10 + $0x5a0] sm:$0xff]
    %v1434 = vld [vmem:[#allocation10 + $0x5a8] sm:$0xff]
    %v1435 = vld [vmem:[#allocation10 + $0x5b0] sm:$0xff]
    %v1436 = vld [vmem:[#allocation10 + $0x5b8] sm:$0xff]
    %v1437 = vld [vmem:[#allocation10 + $0x5c0] sm:$0xff]
    %v1438 = vld [vmem:[#allocation10 + $0x5c8] sm:$0xff]
    %v1439 = vld [vmem:[#allocation10 + $0x5d0] sm:$0xff]
    %v1440 = vld [vmem:[#allocation10 + $0x5d8] sm:$0xff]
    %v1441 = vld [vmem:[#allocation10 + $0x5e0] sm:$0xff]
    %v1442 = vld [vmem:[#allocation10 + $0x5e8] sm:$0xff]
    %v1443 = vld [vmem:[#allocation10 + $0x5f0] sm:$0xff]
    %v1444 = vld [vmem:[#allocation10 + $0x5f8] sm:$0xff]
    %v1637 = vunpack.c.l.b16 %v1253
    %v1638 = vunpack.c.h.b16 %v1253
    %v1639 = vunpack.c.l.b16 %v1254
    %v1640 = vunpack.c.h.b16 %v1254
    %v1641 = vunpack.c.l.b16 %v1255
    %v1642 = vunpack.c.h.b16 %v1255
    %v1643 = vunpack.c.l.b16 %v1256
    %v1644 = vunpack.c.h.b16 %v1256
    %v1645 = vunpack.c.l.b16 %v1257
    %v1646 = vunpack.c.h.b16 %v1257
    %v1647 = vunpack.c.l.b16 %v1258
    %v1648 = vunpack.c.h.b16 %v1258
    %v1649 = vunpack.c.l.b16 %v1259
    %v1650 = vunpack.c.h.b16 %v1259
    %v1651 = vunpack.c.l.b16 %v1260
    %v1652 = vunpack.c.h.b16 %v1260
    %v1653 = vunpack.c.l.b16 %v1261
    %v1654 = vunpack.c.h.b16 %v1261
    %v1655 = vunpack.c.l.b16 %v1262
    %v1656 = vunpack.c.h.b16 %v1262
    %v1657 = vunpack.c.l.b16 %v1263
    %v1658 = vunpack.c.h.b16 %v1263
    %v1659 = vunpack.c.l.b16 %v1264
    %v1660 = vunpack.c.h.b16 %v1264
    %v1661 = vunpack.c.l.b16 %v1265
    %v1662 = vunpack.c.h.b16 %v1265
    %v1663 = vunpack.c.l.b16 %v1266
    %v1664 = vunpack.c.h.b16 %v1266
    %v1665 = vunpack.c.l.b16 %v1267
    %v1666 = vunpack.c.h.b16 %v1267
    %v1667 = vunpack.c.l.b16 %v1268
    %v1668 = vunpack.c.h.b16 %v1268
    %v1669 = vunpack.c.l.b16 %v1269
    %v1670 = vunpack.c.h.b16 %v1269
    %v1671 = vunpack.c.l.b16 %v1270
    %v1672 = vunpack.c.h.b16 %v1270
    %v1673 = vunpack.c.l.b16 %v1271
    %v1674 = vunpack.c.h.b16 %v1271
    %v1675 = vunpack.c.l.b16 %v1272
    %v1676 = vunpack.c.h.b16 %v1272
    %v1677 = vunpack.c.l.b16 %v1273
    %v1678 = vunpack.c.h.b16 %v1273
    %v1679 = vunpack.c.l.b16 %v1274
    %v1680 = vunpack.c.h.b16 %v1274
    %v1681 = vunpack.c.l.b16 %v1275
    %v1682 = vunpack.c.h.b16 %v1275
    %v1683 = vunpack.c.l.b16 %v1276
    %v1684 = vunpack.c.h.b16 %v1276
    %v1685 = vunpack.c.l.b16 %v1277
    %v1686 = vunpack.c.h.b16 %v1277
    %v1687 = vunpack.c.l.b16 %v1278
    %v1688 = vunpack.c.h.b16 %v1278
    %v1689 = vunpack.c.l.b16 %v1279
    %v1690 = vunpack.c.h.b16 %v1279
    %v1691 = vunpack.c.l.b16 %v1280
    %v1692 = vunpack.c.h.b16 %v1280
    %v1693 = vunpack.c.l.b16 %v1281
    %v1694 = vunpack.c.h.b16 %v1281
    %v1695 = vunpack.c.l.b16 %v1282
    %v1696 = vunpack.c.h.b16 %v1282
    %v1697 = vunpack.c.l.b16 %v1283
    %v1698 = vunpack.c.h.b16 %v1283
    %v1699 = vunpack.c.l.b16 %v1284
    %v1700 = vunpack.c.h.b16 %v1284
    %v1701 = vunpack.c.l.b16 %v1285
    %v1702 = vunpack.c.h.b16 %v1285
    %v1703 = vunpack.c.l.b16 %v1286
    %v1704 = vunpack.c.h.b16 %v1286
    %v1705 = vunpack.c.l.b16 %v1287
    %v1706 = vunpack.c.h.b16 %v1287
    %v1707 = vunpack.c.l.b16 %v1288
    %v1708 = vunpack.c.h.b16 %v1288
    %v1709 = vunpack.c.l.b16 %v1289
    %v1710 = vunpack.c.h.b16 %v1289
    %v1711 = vunpack.c.l.b16 %v1290
    %v1712 = vunpack.c.h.b16 %v1290
    %v1713 = vunpack.c.l.b16 %v1291
    %v1714 = vunpack.c.h.b16 %v1291
    %v1715 = vunpack.c.l.b16 %v1292
    %v1716 = vunpack.c.h.b16 %v1292
    %v1717 = vunpack.c.l.b16 %v1293
    %v1718 = vunpack.c.h.b16 %v1293
    %v1719 = vunpack.c.l.b16 %v1294
    %v1720 = vunpack.c.h.b16 %v1294
    %v1721 = vunpack.c.l.b16 %v1295
    %v1722 = vunpack.c.h.b16 %v1295
    %v1723 = vunpack.c.l.b16 %v1296
    %v1724 = vunpack.c.h.b16 %v1296
    %v1725 = vunpack.c.l.b16 %v1297
    %v1726 = vunpack.c.h.b16 %v1297
    %v1727 = vunpack.c.l.b16 %v1298
    %v1728 = vunpack.c.h.b16 %v1298
    %v1729 = vunpack.c.l.b16 %v1299
    %v1730 = vunpack.c.h.b16 %v1299
    %v1731 = vunpack.c.l.b16 %v1300
    %v1732 = vunpack.c.h.b16 %v1300
    %v1733 = vunpack.c.l.b16 %v1301
    %v1734 = vunpack.c.h.b16 %v1301
    %v1735 = vunpack.c.l.b16 %v1302
    %v1736 = vunpack.c.h.b16 %v1302
    %v1737 = vunpack.c.l.b16 %v1303
    %v1738 = vunpack.c.h.b16 %v1303
    %v1739 = vunpack.c.l.b16 %v1304
    %v1740 = vunpack.c.h.b16 %v1304
    %v1741 = vunpack.c.l.b16 %v1305
    %v1742 = vunpack.c.h.b16 %v1305
    %v1743 = vunpack.c.l.b16 %v1306
    %v1744 = vunpack.c.h.b16 %v1306
    %v1745 = vunpack.c.l.b16 %v1307
    %v1746 = vunpack.c.h.b16 %v1307
    %v1747 = vunpack.c.l.b16 %v1308
    %v1748 = vunpack.c.h.b16 %v1308
    %v1749 = vunpack.c.l.b16 %v1309
    %v1750 = vunpack.c.h.b16 %v1309
    %v1751 = vunpack.c.l.b16 %v1310
    %v1752 = vunpack.c.h.b16 %v1310
    %v1753 = vunpack.c.l.b16 %v1311
    %v1754 = vunpack.c.h.b16 %v1311
    %v1755 = vunpack.c.l.b16 %v1312
    %v1756 = vunpack.c.h.b16 %v1312
    %v1757 = vunpack.c.l.b16 %v1313
    %v1758 = vunpack.c.h.b16 %v1313
    %v1759 = vunpack.c.l.b16 %v1314
    %v1760 = vunpack.c.h.b16 %v1314
    %v1761 = vunpack.c.l.b16 %v1315
    %v1762 = vunpack.c.h.b16 %v1315
    %v1763 = vunpack.c.l.b16 %v1316
    %v1764 = vunpack.c.h.b16 %v1316
    %v1765 = vunpack.c.l.b16 %v1317
    %v1766 = vunpack.c.h.b16 %v1317
    %v1767 = vunpack.c.l.b16 %v1318
    %v1768 = vunpack.c.h.b16 %v1318
    %v1769 = vunpack.c.l.b16 %v1319
    %v1770 = vunpack.c.h.b16 %v1319
    %v1771 = vunpack.c.l.b16 %v1320
    %v1772 = vunpack.c.h.b16 %v1320
    %v1773 = vunpack.c.l.b16 %v1321
    %v1774 = vunpack.c.h.b16 %v1321
    %v1775 = vunpack.c.l.b16 %v1322
    %v1776 = vunpack.c.h.b16 %v1322
    %v1777 = vunpack.c.l.b16 %v1323
    %v1778 = vunpack.c.h.b16 %v1323
    %v1779 = vunpack.c.l.b16 %v1324
    %v1780 = vunpack.c.h.b16 %v1324
    %v1781 = vunpack.c.l.b16 %v1325
    %v1782 = vunpack.c.h.b16 %v1325
    %v1783 = vunpack.c.l.b16 %v1326
    %v1784 = vunpack.c.h.b16 %v1326
    %v1785 = vunpack.c.l.b16 %v1327
    %v1786 = vunpack.c.h.b16 %v1327
    %v1787 = vunpack.c.l.b16 %v1328
    %v1788 = vunpack.c.h.b16 %v1328
    %v1789 = vunpack.c.l.b16 %v1329
    %v1790 = vunpack.c.h.b16 %v1329
    %v1791 = vunpack.c.l.b16 %v1330
    %v1792 = vunpack.c.h.b16 %v1330
    %v1793 = vunpack.c.l.b16 %v1331
    %v1794 = vunpack.c.h.b16 %v1331
    %v1795 = vunpack.c.l.b16 %v1332
    %v1796 = vunpack.c.h.b16 %v1332
    %v1797 = vunpack.c.l.b16 %v1333
    %v1798 = vunpack.c.h.b16 %v1333
    %v1799 = vunpack.c.l.b16 %v1334
    %v1800 = vunpack.c.h.b16 %v1334
    %v1801 = vunpack.c.l.b16 %v1335
    %v1802 = vunpack.c.h.b16 %v1335
    %v1803 = vunpack.c.l.b16 %v1336
    %v1804 = vunpack.c.h.b16 %v1336
    %v1805 = vunpack.c.l.b16 %v1337
    %v1806 = vunpack.c.h.b16 %v1337
    %v1807 = vunpack.c.l.b16 %v1338
    %v1808 = vunpack.c.h.b16 %v1338
    %v1809 = vunpack.c.l.b16 %v1339
    %v1810 = vunpack.c.h.b16 %v1339
    %v1811 = vunpack.c.l.b16 %v1340
    %v1812 = vunpack.c.h.b16 %v1340
    %v1813 = vunpack.c.l.b16 %v1341
    %v1814 = vunpack.c.h.b16 %v1341
    %v1815 = vunpack.c.l.b16 %v1342
    %v1816 = vunpack.c.h.b16 %v1342
    %v1817 = vunpack.c.l.b16 %v1343
    %v1818 = vunpack.c.h.b16 %v1343
    %v1819 = vunpack.c.l.b16 %v1344
    %v1820 = vunpack.c.h.b16 %v1344
    %v1821 = vunpack.c.l.b16 %v1345
    %v1822 = vunpack.c.h.b16 %v1345
    %v1823 = vunpack.c.l.b16 %v1346
    %v1824 = vunpack.c.h.b16 %v1346
    %v1825 = vunpack.c.l.b16 %v1347
    %v1826 = vunpack.c.h.b16 %v1347
    %v1827 = vunpack.c.l.b16 %v1348
    %v1828 = vunpack.c.h.b16 %v1348
    %v1829 = vunpack.c.l.b16 %v1349
    %v1830 = vunpack.c.h.b16 %v1349
    %v1831 = vunpack.c.l.b16 %v1350
    %v1832 = vunpack.c.h.b16 %v1350
    %v1833 = vunpack.c.l.b16 %v1351
    %v1834 = vunpack.c.h.b16 %v1351
    %v1835 = vunpack.c.l.b16 %v1352
    %v1836 = vunpack.c.h.b16 %v1352
    %v1837 = vunpack.c.l.b16 %v1353
    %v1838 = vunpack.c.h.b16 %v1353
    %v1839 = vunpack.c.l.b16 %v1354
    %v1840 = vunpack.c.h.b16 %v1354
    %v1841 = vunpack.c.l.b16 %v1355
    %v1842 = vunpack.c.h.b16 %v1355
    %v1843 = vunpack.c.l.b16 %v1356
    %v1844 = vunpack.c.h.b16 %v1356
    %v1845 = vunpack.c.l.b16 %v1357
    %v1846 = vunpack.c.h.b16 %v1357
    %v1847 = vunpack.c.l.b16 %v1358
    %v1848 = vunpack.c.h.b16 %v1358
    %v1849 = vunpack.c.l.b16 %v1359
    %v1850 = vunpack.c.h.b16 %v1359
    %v1851 = vunpack.c.l.b16 %v1360
    %v1852 = vunpack.c.h.b16 %v1360
    %v1853 = vunpack.c.l.b16 %v1361
    %v1854 = vunpack.c.h.b16 %v1361
    %v1855 = vunpack.c.l.b16 %v1362
    %v1856 = vunpack.c.h.b16 %v1362
    %v1857 = vunpack.c.l.b16 %v1363
    %v1858 = vunpack.c.h.b16 %v1363
    %v1859 = vunpack.c.l.b16 %v1364
    %v1860 = vunpack.c.h.b16 %v1364
    %v1861 = vunpack.c.l.b16 %v1365
    %v1862 = vunpack.c.h.b16 %v1365
    %v1863 = vunpack.c.l.b16 %v1366
    %v1864 = vunpack.c.h.b16 %v1366
    %v1865 = vunpack.c.l.b16 %v1367
    %v1866 = vunpack.c.h.b16 %v1367
    %v1867 = vunpack.c.l.b16 %v1368
    %v1868 = vunpack.c.h.b16 %v1368
    %v1869 = vunpack.c.l.b16 %v1369
    %v1870 = vunpack.c.h.b16 %v1369
    %v1871 = vunpack.c.l.b16 %v1370
    %v1872 = vunpack.c.h.b16 %v1370
    %v1873 = vunpack.c.l.b16 %v1371
    %v1874 = vunpack.c.h.b16 %v1371
    %v1875 = vunpack.c.l.b16 %v1372
    %v1876 = vunpack.c.h.b16 %v1372
    %v1877 = vunpack.c.l.b16 %v1373
    %v1878 = vunpack.c.h.b16 %v1373
    %v1879 = vunpack.c.l.b16 %v1374
    %v1880 = vunpack.c.h.b16 %v1374
    %v1881 = vunpack.c.l.b16 %v1375
    %v1882 = vunpack.c.h.b16 %v1375
    %v1883 = vunpack.c.l.b16 %v1376
    %v1884 = vunpack.c.h.b16 %v1376
    %v1885 = vunpack.c.l.b16 %v1377
    %v1886 = vunpack.c.h.b16 %v1377
    %v1887 = vunpack.c.l.b16 %v1378
    %v1888 = vunpack.c.h.b16 %v1378
    %v1889 = vunpack.c.l.b16 %v1379
    %v1890 = vunpack.c.h.b16 %v1379
    %v1891 = vunpack.c.l.b16 %v1380
    %v1892 = vunpack.c.h.b16 %v1380
    %v1893 = vunpack.c.l.b16 %v1381
    %v1894 = vunpack.c.h.b16 %v1381
    %v1895 = vunpack.c.l.b16 %v1382
    %v1896 = vunpack.c.h.b16 %v1382
    %v1897 = vunpack.c.l.b16 %v1383
    %v1898 = vunpack.c.h.b16 %v1383
    %v1899 = vunpack.c.l.b16 %v1384
    %v1900 = vunpack.c.h.b16 %v1384
    %v1901 = vunpack.c.l.b16 %v1385
    %v1902 = vunpack.c.h.b16 %v1385
    %v1903 = vunpack.c.l.b16 %v1386
    %v1904 = vunpack.c.h.b16 %v1386
    %v1905 = vunpack.c.l.b16 %v1387
    %v1906 = vunpack.c.h.b16 %v1387
    %v1907 = vunpack.c.l.b16 %v1388
    %v1908 = vunpack.c.h.b16 %v1388
    %v1909 = vunpack.c.l.b16 %v1389
    %v1910 = vunpack.c.h.b16 %v1389
    %v1911 = vunpack.c.l.b16 %v1390
    %v1912 = vunpack.c.h.b16 %v1390
    %v1913 = vunpack.c.l.b16 %v1391
    %v1914 = vunpack.c.h.b16 %v1391
    %v1915 = vunpack.c.l.b16 %v1392
    %v1916 = vunpack.c.h.b16 %v1392
    %v1917 = vunpack.c.l.b16 %v1393
    %v1918 = vunpack.c.h.b16 %v1393
    %v1919 = vunpack.c.l.b16 %v1394
    %v1920 = vunpack.c.h.b16 %v1394
    %v1921 = vunpack.c.l.b16 %v1395
    %v1922 = vunpack.c.h.b16 %v1395
    %v1923 = vunpack.c.l.b16 %v1396
    %v1924 = vunpack.c.h.b16 %v1396
    %v1925 = vunpack.c.l.b16 %v1397
    %v1926 = vunpack.c.h.b16 %v1397
    %v1927 = vunpack.c.l.b16 %v1398
    %v1928 = vunpack.c.h.b16 %v1398
    %v1929 = vunpack.c.l.b16 %v1399
    %v1930 = vunpack.c.h.b16 %v1399
    %v1931 = vunpack.c.l.b16 %v1400
    %v1932 = vunpack.c.h.b16 %v1400
    %v1933 = vunpack.c.l.b16 %v1401
    %v1934 = vunpack.c.h.b16 %v1401
    %v1935 = vunpack.c.l.b16 %v1402
    %v1936 = vunpack.c.h.b16 %v1402
    %v1937 = vunpack.c.l.b16 %v1403
    %v1938 = vunpack.c.h.b16 %v1403
    %v1939 = vunpack.c.l.b16 %v1404
    %v1940 = vunpack.c.h.b16 %v1404
    %v1941 = vunpack.c.l.b16 %v1405
    %v1942 = vunpack.c.h.b16 %v1405
    %v1943 = vunpack.c.l.b16 %v1406
    %v1944 = vunpack.c.h.b16 %v1406
    %v1945 = vunpack.c.l.b16 %v1407
    %v1946 = vunpack.c.h.b16 %v1407
    %v1947 = vunpack.c.l.b16 %v1408
    %v1948 = vunpack.c.h.b16 %v1408
    %v1949 = vunpack.c.l.b16 %v1409
    %v1950 = vunpack.c.h.b16 %v1409
    %v1951 = vunpack.c.l.b16 %v1410
    %v1952 = vunpack.c.h.b16 %v1410
    %v1953 = vunpack.c.l.b16 %v1411
    %v1954 = vunpack.c.h.b16 %v1411
    %v1955 = vunpack.c.l.b16 %v1412
    %v1956 = vunpack.c.h.b16 %v1412
    %v1957 = vunpack.c.l.b16 %v1413
    %v1958 = vunpack.c.h.b16 %v1413
    %v1959 = vunpack.c.l.b16 %v1414
    %v1960 = vunpack.c.h.b16 %v1414
    %v1961 = vunpack.c.l.b16 %v1415
    %v1962 = vunpack.c.h.b16 %v1415
    %v1963 = vunpack.c.l.b16 %v1416
    %v1964 = vunpack.c.h.b16 %v1416
    %v1965 = vunpack.c.l.b16 %v1417
    %v1966 = vunpack.c.h.b16 %v1417
    %v1967 = vunpack.c.l.b16 %v1418
    %v1968 = vunpack.c.h.b16 %v1418
    %v1969 = vunpack.c.l.b16 %v1419
    %v1970 = vunpack.c.h.b16 %v1419
    %v1971 = vunpack.c.l.b16 %v1420
    %v1972 = vunpack.c.h.b16 %v1420
    %v1973 = vunpack.c.l.b16 %v1421
    %v1974 = vunpack.c.h.b16 %v1421
    %v1975 = vunpack.c.l.b16 %v1422
    %v1976 = vunpack.c.h.b16 %v1422
    %v1977 = vunpack.c.l.b16 %v1423
    %v1978 = vunpack.c.h.b16 %v1423
    %v1979 = vunpack.c.l.b16 %v1424
    %v1980 = vunpack.c.h.b16 %v1424
    %v1981 = vunpack.c.l.b16 %v1425
    %v1982 = vunpack.c.h.b16 %v1425
    %v1983 = vunpack.c.l.b16 %v1426
    %v1984 = vunpack.c.h.b16 %v1426
    %v1985 = vunpack.c.l.b16 %v1427
    %v1986 = vunpack.c.h.b16 %v1427
    %v1987 = vunpack.c.l.b16 %v1428
    %v1988 = vunpack.c.h.b16 %v1428
    %v1989 = vunpack.c.l.b16 %v1429
    %v1990 = vunpack.c.h.b16 %v1429
    %v1991 = vunpack.c.l.b16 %v1430
    %v1992 = vunpack.c.h.b16 %v1430
    %v1993 = vunpack.c.l.b16 %v1431
    %v1994 = vunpack.c.h.b16 %v1431
    %v1995 = vunpack.c.l.b16 %v1432
    %v1996 = vunpack.c.h.b16 %v1432
    %v1997 = vunpack.c.l.b16 %v1433
    %v1998 = vunpack.c.h.b16 %v1433
    %v1999 = vunpack.c.l.b16 %v1434
    %v2000 = vunpack.c.h.b16 %v1434
    %v2001 = vunpack.c.l.b16 %v1435
    %v2002 = vunpack.c.h.b16 %v1435
    %v2003 = vunpack.c.l.b16 %v1436
    %v2004 = vunpack.c.h.b16 %v1436
    %v2005 = vunpack.c.l.b16 %v1437
    %v2006 = vunpack.c.h.b16 %v1437
    %v2007 = vunpack.c.l.b16 %v1438
    %v2008 = vunpack.c.h.b16 %v1438
    %v2009 = vunpack.c.l.b16 %v1439
    %v2010 = vunpack.c.h.b16 %v1439
    %v2011 = vunpack.c.l.b16 %v1440
    %v2012 = vunpack.c.h.b16 %v1440
    %v2013 = vunpack.c.l.b16 %v1441
    %v2014 = vunpack.c.h.b16 %v1441
    %v2015 = vunpack.c.l.b16 %v1442
    %v2016 = vunpack.c.h.b16 %v1442
    %v2017 = vunpack.c.l.b16 %v1443
    %v2018 = vunpack.c.h.b16 %v1443
    %v2019 = vunpack.c.l.b16 %v1444
    %v2020 = vunpack.c.h.b16 %v1444
    %v2021 = vpack.c.b16 %v1643, %v1637
    %v2022 = vpack.c.b16 %v1644, %v1638
    %v2023 = vpack.c.b16 %v1645, %v1639
    %v2024 = vpack.c.b16 %v1646, %v1640
    %v2025 = vpack.c.b16 %v1647, %v1641
    %v2026 = vpack.c.b16 %v1648, %v1642
    %v2027 = vpack.c.b16 %v1655, %v1649
    %v2028 = vpack.c.b16 %v1656, %v1650
    %v2029 = vpack.c.b16 %v1657, %v1651
    %v2030 = vpack.c.b16 %v1658, %v1652
    %v2031 = vpack.c.b16 %v1659, %v1653
    %v2032 = vpack.c.b16 %v1660, %v1654
    %v2033 = vpack.c.b16 %v1667, %v1661
    %v2034 = vpack.c.b16 %v1668, %v1662
    %v2035 = vpack.c.b16 %v1669, %v1663
    %v2036 = vpack.c.b16 %v1670, %v1664
    %v2037 = vpack.c.b16 %v1671, %v1665
    %v2038 = vpack.c.b16 %v1672, %v1666
    %v2039 = vpack.c.b16 %v1679, %v1673
    %v2040 = vpack.c.b16 %v1680, %v1674
    %v2041 = vpack.c.b16 %v1681, %v1675
    %v2042 = vpack.c.b16 %v1682, %v1676
    %v2043 = vpack.c.b16 %v1683, %v1677
    %v2044 = vpack.c.b16 %v1684, %v1678
    %v2045 = vpack.c.b16 %v1691, %v1685
    %v2046 = vpack.c.b16 %v1692, %v1686
    %v2047 = vpack.c.b16 %v1693, %v1687
    %v2048 = vpack.c.b16 %v1694, %v1688
    %v2049 = vpack.c.b16 %v1695, %v1689
    %v2050 = vpack.c.b16 %v1696, %v1690
    %v2051 = vpack.c.b16 %v1703, %v1697
    %v2052 = vpack.c.b16 %v1704, %v1698
    %v2053 = vpack.c.b16 %v1705, %v1699
    %v2054 = vpack.c.b16 %v1706, %v1700
    %v2055 = vpack.c.b16 %v1707, %v1701
    %v2056 = vpack.c.b16 %v1708, %v1702
    %v2057 = vpack.c.b16 %v1715, %v1709
    %v2058 = vpack.c.b16 %v1716, %v1710
    %v2059 = vpack.c.b16 %v1717, %v1711
    %v2060 = vpack.c.b16 %v1718, %v1712
    %v2061 = vpack.c.b16 %v1719, %v1713
    %v2062 = vpack.c.b16 %v1720, %v1714
    %v2063 = vpack.c.b16 %v1727, %v1721
    %v2064 = vpack.c.b16 %v1728, %v1722
    %v2065 = vpack.c.b16 %v1729, %v1723
    %v2066 = vpack.c.b16 %v1730, %v1724
    %v2067 = vpack.c.b16 %v1731, %v1725
    %v2068 = vpack.c.b16 %v1732, %v1726
    %v2069 = vpack.c.b16 %v1739, %v1733
    %v2070 = vpack.c.b16 %v1740, %v1734
    %v2071 = vpack.c.b16 %v1741, %v1735
    %v2072 = vpack.c.b16 %v1742, %v1736
    %v2073 = vpack.c.b16 %v1743, %v1737
    %v2074 = vpack.c.b16 %v1744, %v1738
    %v2075 = vpack.c.b16 %v1751, %v1745
    %v2076 = vpack.c.b16 %v1752, %v1746
    %v2077 = vpack.c.b16 %v1753, %v1747
    %v2078 = vpack.c.b16 %v1754, %v1748
    %v2079 = vpack.c.b16 %v1755, %v1749
    %v2080 = vpack.c.b16 %v1756, %v1750
    %v2081 = vpack.c.b16 %v1763, %v1757
    %v2082 = vpack.c.b16 %v1764, %v1758
    %v2083 = vpack.c.b16 %v1765, %v1759
    %v2084 = vpack.c.b16 %v1766, %v1760
    %v2085 = vpack.c.b16 %v1767, %v1761
    %v2086 = vpack.c.b16 %v1768, %v1762
    %v2087 = vpack.c.b16 %v1775, %v1769
    %v2088 = vpack.c.b16 %v1776, %v1770
    %v2089 = vpack.c.b16 %v1777, %v1771
    %v2090 = vpack.c.b16 %v1778, %v1772
    %v2091 = vpack.c.b16 %v1779, %v1773
    %v2092 = vpack.c.b16 %v1780, %v1774
    %v2093 = vpack.c.b16 %v1787, %v1781
    %v2094 = vpack.c.b16 %v1788, %v1782
    %v2095 = vpack.c.b16 %v1789, %v1783
    %v2096 = vpack.c.b16 %v1790, %v1784
    %v2097 = vpack.c.b16 %v1791, %v1785
    %v2098 = vpack.c.b16 %v1792, %v1786
    %v2099 = vpack.c.b16 %v1799, %v1793
    %v2100 = vpack.c.b16 %v1800, %v1794
    %v2101 = vpack.c.b16 %v1801, %v1795
    %v2102 = vpack.c.b16 %v1802, %v1796
    %v2103 = vpack.c.b16 %v1803, %v1797
    %v2104 = vpack.c.b16 %v1804, %v1798
    %v2105 = vpack.c.b16 %v1811, %v1805
    %v2106 = vpack.c.b16 %v1812, %v1806
    %v2107 = vpack.c.b16 %v1813, %v1807
    %v2108 = vpack.c.b16 %v1814, %v1808
    %v2109 = vpack.c.b16 %v1815, %v1809
    %v2110 = vpack.c.b16 %v1816, %v1810
    %v2111 = vpack.c.b16 %v1823, %v1817
    %v2112 = vpack.c.b16 %v1824, %v1818
    %v2113 = vpack.c.b16 %v1825, %v1819
    %v2114 = vpack.c.b16 %v1826, %v1820
    %v2115 = vpack.c.b16 %v1827, %v1821
    %v2116 = vpack.c.b16 %v1828, %v1822
    %v2117 = vpack.c.b16 %v1835, %v1829
    %v2118 = vpack.c.b16 %v1836, %v1830
    %v2119 = vpack.c.b16 %v1837, %v1831
    %v2120 = vpack.c.b16 %v1838, %v1832
    %v2121 = vpack.c.b16 %v1839, %v1833
    %v2122 = vpack.c.b16 %v1840, %v1834
    %v2123 = vpack.c.b16 %v1847, %v1841
    %v2124 = vpack.c.b16 %v1848, %v1842
    %v2125 = vpack.c.b16 %v1849, %v1843
    %v2126 = vpack.c.b16 %v1850, %v1844
    %v2127 = vpack.c.b16 %v1851, %v1845
    %v2128 = vpack.c.b16 %v1852, %v1846
    %v2129 = vpack.c.b16 %v1859, %v1853
    %v2130 = vpack.c.b16 %v1860, %v1854
    %v2131 = vpack.c.b16 %v1861, %v1855
    %v2132 = vpack.c.b16 %v1862, %v1856
    %v2133 = vpack.c.b16 %v1863, %v1857
    %v2134 = vpack.c.b16 %v1864, %v1858
    %v2135 = vpack.c.b16 %v1871, %v1865
    %v2136 = vpack.c.b16 %v1872, %v1866
    %v2137 = vpack.c.b16 %v1873, %v1867
    %v2138 = vpack.c.b16 %v1874, %v1868
    %v2139 = vpack.c.b16 %v1875, %v1869
    %v2140 = vpack.c.b16 %v1876, %v1870
    %v2141 = vpack.c.b16 %v1883, %v1877
    %v2142 = vpack.c.b16 %v1884, %v1878
    %v2143 = vpack.c.b16 %v1885, %v1879
    %v2144 = vpack.c.b16 %v1886, %v1880
    %v2145 = vpack.c.b16 %v1887, %v1881
    %v2146 = vpack.c.b16 %v1888, %v1882
    %v2147 = vpack.c.b16 %v1895, %v1889
    %v2148 = vpack.c.b16 %v1896, %v1890
    %v2149 = vpack.c.b16 %v1897, %v1891
    %v2150 = vpack.c.b16 %v1898, %v1892
    %v2151 = vpack.c.b16 %v1899, %v1893
    %v2152 = vpack.c.b16 %v1900, %v1894
    %v2153 = vpack.c.b16 %v1907, %v1901
    %v2154 = vpack.c.b16 %v1908, %v1902
    %v2155 = vpack.c.b16 %v1909, %v1903
    %v2156 = vpack.c.b16 %v1910, %v1904
    %v2157 = vpack.c.b16 %v1911, %v1905
    %v2158 = vpack.c.b16 %v1912, %v1906
    %v2159 = vpack.c.b16 %v1919, %v1913
    %v2160 = vpack.c.b16 %v1920, %v1914
    %v2161 = vpack.c.b16 %v1921, %v1915
    %v2162 = vpack.c.b16 %v1922, %v1916
    %v2163 = vpack.c.b16 %v1923, %v1917
    %v2164 = vpack.c.b16 %v1924, %v1918
    %v2165 = vpack.c.b16 %v1931, %v1925
    %v2166 = vpack.c.b16 %v1932, %v1926
    %v2167 = vpack.c.b16 %v1933, %v1927
    %v2168 = vpack.c.b16 %v1934, %v1928
    %v2169 = vpack.c.b16 %v1935, %v1929
    %v2170 = vpack.c.b16 %v1936, %v1930
    %v2171 = vpack.c.b16 %v1943, %v1937
    %v2172 = vpack.c.b16 %v1944, %v1938
    %v2173 = vpack.c.b16 %v1945, %v1939
    %v2174 = vpack.c.b16 %v1946, %v1940
    %v2175 = vpack.c.b16 %v1947, %v1941
    %v2176 = vpack.c.b16 %v1948, %v1942
    %v2177 = vpack.c.b16 %v1955, %v1949
    %v2178 = vpack.c.b16 %v1956, %v1950
    %v2179 = vpack.c.b16 %v1957, %v1951
    %v2180 = vpack.c.b16 %v1958, %v1952
    %v2181 = vpack.c.b16 %v1959, %v1953
    %v2182 = vpack.c.b16 %v1960, %v1954
    %v2183 = vpack.c.b16 %v1967, %v1961
    %v2184 = vpack.c.b16 %v1968, %v1962
    %v2185 = vpack.c.b16 %v1969, %v1963
    %v2186 = vpack.c.b16 %v1970, %v1964
    %v2187 = vpack.c.b16 %v1971, %v1965
    %v2188 = vpack.c.b16 %v1972, %v1966
    %v2189 = vpack.c.b16 %v1979, %v1973
    %v2190 = vpack.c.b16 %v1980, %v1974
    %v2191 = vpack.c.b16 %v1981, %v1975
    %v2192 = vpack.c.b16 %v1982, %v1976
    %v2193 = vpack.c.b16 %v1983, %v1977
    %v2194 = vpack.c.b16 %v1984, %v1978
    %v2195 = vpack.c.b16 %v1991, %v1985
    %v2196 = vpack.c.b16 %v1992, %v1986
    %v2197 = vpack.c.b16 %v1993, %v1987
    %v2198 = vpack.c.b16 %v1994, %v1988
    %v2199 = vpack.c.b16 %v1995, %v1989
    %v2200 = vpack.c.b16 %v1996, %v1990
    %v2201 = vpack.c.b16 %v2003, %v1997
    %v2202 = vpack.c.b16 %v2004, %v1998
    %v2203 = vpack.c.b16 %v2005, %v1999
    %v2204 = vpack.c.b16 %v2006, %v2000
    %v2205 = vpack.c.b16 %v2007, %v2001
    %v2206 = vpack.c.b16 %v2008, %v2002
    %v2207 = vpack.c.b16 %v2015, %v2009
    %v2208 = vpack.c.b16 %v2016, %v2010
    %v2209 = vpack.c.b16 %v2017, %v2011
    %v2210 = vpack.c.b16 %v2018, %v2012
    %v2211 = vpack.c.b16 %v2019, %v2013
    %v2212 = vpack.c.b16 %v2020, %v2014
    %2405 = vmatprep.subr.bf16.mxu0 %v2064
    %2406 = vmatpush1.bf16.msra.mxu0 %v2063
    %2407 = vmatprep.subr.bf16.mxu0 %v2058
    %2408 = vmatpush1.bf16.msra.mxu0 %v2057
    %2409 = vmatprep.subr.bf16.mxu0 %v2052
    %2410 = vmatpush1.bf16.msra.mxu0 %v2051
    %2411 = vmatprep.subr.bf16.mxu0 %v2046
    %2412 = vmatpush1.bf16.msra.mxu0 %v2045
    %2413 = vmatprep.subr.bf16.mxu0 %v2040
    %2414 = vmatpush1.bf16.msra.mxu0 %v2039
    %2415 = vmatprep.subr.bf16.mxu0 %v2034
    %2416 = vmatpush1.bf16.msra.mxu0 %v2033
    %2417 = vmatprep.subr.bf16.mxu0 %v2028
    %2418 = vmatpush1.bf16.msra.mxu0 %v2027
    %2419 = vmatprep.subr.bf16.mxu0 %v2022
    %2420 = vmatpush1.bf16.msra.mxu0 %v2021
    %2421 = vmatprep.subr.bf16.mxu0 %v2112
    %2422 = vmatpush2.bf16.msra.mxu0 %v2111
    %2423 = vmatprep.subr.bf16.mxu0 %v2106
    %2424 = vmatpush2.bf16.msra.mxu0 %v2105
    %2425 = vmatprep.subr.bf16.mxu0 %v2100
    %2426 = vmatpush2.bf16.msra.mxu0 %v2099
    %2427 = vmatprep.subr.bf16.mxu0 %v2094
    %2428 = vmatpush2.bf16.msra.mxu0 %v2093
    %2429 = vmatprep.subr.bf16.mxu0 %v2088
    %2430 = vmatpush2.bf16.msra.mxu0 %v2087
    %2431 = vmatprep.subr.bf16.mxu0 %v2082
    %2432 = vmatpush2.bf16.msra.mxu0 %v2081
    %2433 = vmatprep.subr.bf16.mxu0 %v2076
    %2434 = vmatpush2.bf16.msra.mxu0 %v2075
    %2435 = vmatprep.subr.bf16.mxu0 %v2070
    %2436 = vmatpush2.bf16.msra.mxu0 %v2069
    %2437 = vmatprep.mubr.bf16.mxu0 %v1250
    %2438 = vmatmul.mubr.bf16.gmra.mxu0 %v1249
    %v2439 = vpop.f32.mrf.mxu0
    %v2440 = vadd.f32 0.0, %v2439
    %v2441 = vpop.f32.mrf.mxu0
    %v2442 = vadd.f32 0.0, %v2441
    %v2443 = vpop.f32.mrf.mxu0
    %v2444 = vpop.f32.mrf.mxu0
    %2445 = vdwg.mxu0
    %2446 = vmatprep.subr.bf16.mxu0 %v2160
    %2447 = vmatpush1.bf16.msra.mxu0 %v2159
    %2448 = vmatprep.subr.bf16.mxu0 %v2154
    %2449 = vmatpush1.bf16.msra.mxu0 %v2153
    %2450 = vmatprep.subr.bf16.mxu0 %v2148
    %2451 = vmatpush1.bf16.msra.mxu0 %v2147
    %2452 = vmatprep.subr.bf16.mxu0 %v2142
    %2453 = vmatpush1.bf16.msra.mxu0 %v2141
    %2454 = vmatprep.subr.bf16.mxu0 %v2136
    %2455 = vmatpush1.bf16.msra.mxu0 %v2135
    %2456 = vmatprep.subr.bf16.mxu0 %v2130
    %2457 = vmatpush1.bf16.msra.mxu0 %v2129
    %2458 = vmatprep.subr.bf16.mxu0 %v2124
    %2459 = vmatpush1.bf16.msra.mxu0 %v2123
    %2460 = vmatprep.subr.bf16.mxu0 %v2118
    %2461 = vmatpush1.bf16.msra.mxu0 %v2117
    %2462 = vmatprep.subr.bf16.mxu0 %v2208
    %2463 = vmatpush2.bf16.msra.mxu0 %v2207
    %2464 = vmatprep.subr.bf16.mxu0 %v2202
    %2465 = vmatpush2.bf16.msra.mxu0 %v2201
    %2466 = vmatprep.subr.bf16.mxu0 %v2196
    %2467 = vmatpush2.bf16.msra.mxu0 %v2195
    %2468 = vmatprep.subr.bf16.mxu0 %v2190
    %2469 = vmatpush2.bf16.msra.mxu0 %v2189
    %2470 = vmatprep.subr.bf16.mxu0 %v2184
    %2471 = vmatpush2.bf16.msra.mxu0 %v2183
    %2472 = vmatprep.subr.bf16.mxu0 %v2178
    %2473 = vmatpush2.bf16.msra.mxu0 %v2177
    %2474 = vmatprep.subr.bf16.mxu0 %v2172
    %2475 = vmatpush2.bf16.msra.mxu0 %v2171
    %2476 = vmatprep.subr.bf16.mxu0 %v2166
    %2477 = vmatpush2.bf16.msra.mxu0 %v2165
    %2478 = vmatprep.mubr.bf16.mxu0 %v1252
    %2479 = vmatmul.mubr.bf16.gmra.mxu0 %v1251
    %v2480 = vpop.f32.mrf.mxu0
    %v2481 = vadd.f32 %v2440, %v2480
    %v2482 = vpop.f32.mrf.mxu0
    %v2483 = vadd.f32 %v2442, %v2482
    %v2484 = vpop.f32.mrf.mxu0
    %v2485 = vpop.f32.mrf.mxu0
    %2486 = vdwg.mxu0
    %2487 = vmatprep.subr.bf16.mxu0 %v2066
    %2488 = vmatpush1.bf16.msra.mxu0 %v2065
    %2489 = vmatprep.subr.bf16.mxu0 %v2060
    %2490 = vmatpush1.bf16.msra.mxu0 %v2059
    %2491 = vmatprep.subr.bf16.mxu0 %v2054
    %2492 = vmatpush1.bf16.msra.mxu0 %v2053
    %2493 = vmatprep.subr.bf16.mxu0 %v2048
    %2494 = vmatpush1.bf16.msra.mxu0 %v2047
    %2495 = vmatprep.subr.bf16.mxu0 %v2042
    %2496 = vmatpush1.bf16.msra.mxu0 %v2041
    %2497 = vmatprep.subr.bf16.mxu0 %v2036
    %2498 = vmatpush1.bf16.msra.mxu0 %v2035
    %2499 = vmatprep.subr.bf16.mxu0 %v2030
    %2500 = vmatpush1.bf16.msra.mxu0 %v2029
    %2501 = vmatprep.subr.bf16.mxu0 %v2024
    %2502 = vmatpush1.bf16.msra.mxu0 %v2023
    %2503 = vmatprep.subr.bf16.mxu0 %v2114
    %2504 = vmatpush2.bf16.msra.mxu0 %v2113
    %2505 = vmatprep.subr.bf16.mxu0 %v2108
    %2506 = vmatpush2.bf16.msra.mxu0 %v2107
    %2507 = vmatprep.subr.bf16.mxu0 %v2102
    %2508 = vmatpush2.bf16.msra.mxu0 %v2101
    %2509 = vmatprep.subr.bf16.mxu0 %v2096
    %2510 = vmatpush2.bf16.msra.mxu0 %v2095
    %2511 = vmatprep.subr.bf16.mxu0 %v2090
    %2512 = vmatpush2.bf16.msra.mxu0 %v2089
    %2513 = vmatprep.subr.bf16.mxu0 %v2084
    %2514 = vmatpush2.bf16.msra.mxu0 %v2083
    %2515 = vmatprep.subr.bf16.mxu0 %v2078
    %2516 = vmatpush2.bf16.msra.mxu0 %v2077
    %2517 = vmatprep.subr.bf16.mxu0 %v2072
    %2518 = vmatpush2.bf16.msra.mxu0 %v2071
    %2519 = vmatprep.mubr.bf16.mxu0 %v1250
    %2520 = vmatmul.mubr.bf16.gmra.mxu0 %v1249
    %v2521 = vpop.f32.mrf.mxu0
    %v2522 = vadd.f32 0.0, %v2521
    %v2523 = vpop.f32.mrf.mxu0
    %v2524 = vadd.f32 0.0, %v2523
    %v2525 = vpop.f32.mrf.mxu0
    %v2526 = vpop.f32.mrf.mxu0
    %2527 = vdwg.mxu0
    %2528 = vmatprep.subr.bf16.mxu0 %v2162
    %2529 = vmatpush1.bf16.msra.mxu0 %v2161
    %2530 = vmatprep.subr.bf16.mxu0 %v2156
    %2531 = vmatpush1.bf16.msra.mxu0 %v2155
    %2532 = vmatprep.subr.bf16.mxu0 %v2150
    %2533 = vmatpush1.bf16.msra.mxu0 %v2149
    %2534 = vmatprep.subr.bf16.mxu0 %v2144
    %2535 = vmatpush1.bf16.msra.mxu0 %v2143
    %2536 = vmatprep.subr.bf16.mxu0 %v2138
    %2537 = vmatpush1.bf16.msra.mxu0 %v2137
    %2538 = vmatprep.subr.bf16.mxu0 %v2132
    %2539 = vmatpush1.bf16.msra.mxu0 %v2131
    %2540 = vmatprep.subr.bf16.mxu0 %v2126
    %2541 = vmatpush1.bf16.msra.mxu0 %v2125
    %2542 = vmatprep.subr.bf16.mxu0 %v2120
    %2543 = vmatpush1.bf16.msra.mxu0 %v2119
    %2544 = vmatprep.subr.bf16.mxu0 %v2210
    %2545 = vmatpush2.bf16.msra.mxu0 %v2209
    %2546 = vmatprep.subr.bf16.mxu0 %v2204
    %2547 = vmatpush2.bf16.msra.mxu0 %v2203
    %2548 = vmatprep.subr.bf16.mxu0 %v2198
    %2549 = vmatpush2.bf16.msra.mxu0 %v2197
    %2550 = vmatprep.subr.bf16.mxu0 %v2192
    %2551 = vmatpush2.bf16.msra.mxu0 %v2191
    %2552 = vmatprep.subr.bf16.mxu0 %v2186
    %2553 = vmatpush2.bf16.msra.mxu0 %v2185
    %2554 = vmatprep.subr.bf16.mxu0 %v2180
    %2555 = vmatpush2.bf16.msra.mxu0 %v2179
    %2556 = vmatprep.subr.bf16.mxu0 %v2174
    %2557 = vmatpush2.bf16.msra.mxu0 %v2173
    %2558 = vmatprep.subr.bf16.mxu0 %v2168
    %2559 = vmatpush2.bf16.msra.mxu0 %v2167
    %2560 = vmatprep.mubr.bf16.mxu0 %v1252
    %2561 = vmatmul.mubr.bf16.gmra.mxu0 %v1251
    %v2562 = vpop.f32.mrf.mxu0
    %v2563 = vadd.f32 %v2522, %v2562
    %v2564 = vpop.f32.mrf.mxu0
    %v2565 = vadd.f32 %v2524, %v2564
    %v2566 = vpop.f32.mrf.mxu0
    %v2567 = vpop.f32.mrf.mxu0
    %2568 = vdwg.mxu0
    %2569 = vmatprep.subr.bf16.mxu0 %v2068
    %2570 = vmatpush1.bf16.msra.mxu0 %v2067
    %2571 = vmatprep.subr.bf16.mxu0 %v2062
    %2572 = vmatpush1.bf16.msra.mxu0 %v2061
    %2573 = vmatprep.subr.bf16.mxu0 %v2056
    %2574 = vmatpush1.bf16.msra.mxu0 %v2055
    %2575 = vmatprep.subr.bf16.mxu0 %v2050
    %2576 = vmatpush1.bf16.msra.mxu0 %v2049
    %2577 = vmatprep.subr.bf16.mxu0 %v2044
    %2578 = vmatpush1.bf16.msra.mxu0 %v2043
    %2579 = vmatprep.subr.bf16.mxu0 %v2038
    %2580 = vmatpush1.bf16.msra.mxu0 %v2037
    %2581 = vmatprep.subr.bf16.mxu0 %v2032
    %2582 = vmatpush1.bf16.msra.mxu0 %v2031
    %2583 = vmatprep.subr.bf16.mxu0 %v2026
    %2584 = vmatpush1.bf16.msra.mxu0 %v2025
    %2585 = vmatprep.subr.bf16.mxu0 %v2116
    %2586 = vmatpush2.bf16.msra.mxu0 %v2115
    %2587 = vmatprep.subr.bf16.mxu0 %v2110
    %2588 = vmatpush2.bf16.msra.mxu0 %v2109
    %2589 = vmatprep.subr.bf16.mxu0 %v2104
    %2590 = vmatpush2.bf16.msra.mxu0 %v2103
    %2591 = vmatprep.subr.bf16.mxu0 %v2098
    %2592 = vmatpush2.bf16.msra.mxu0 %v2097
    %2593 = vmatprep.subr.bf16.mxu0 %v2092
    %2594 = vmatpush2.bf16.msra.mxu0 %v2091
    %2595 = vmatprep.subr.bf16.mxu0 %v2086
    %2596 = vmatpush2.bf16.msra.mxu0 %v2085
    %2597 = vmatprep.subr.bf16.mxu0 %v2080
    %2598 = vmatpush2.bf16.msra.mxu0 %v2079
    %2599 = vmatprep.subr.bf16.mxu0 %v2074
    %2600 = vmatpush2.bf16.msra.mxu0 %v2073
    %2601 = vmatprep.mubr.bf16.mxu0 %v1250
    %2602 = vmatmul.mubr.bf16.gmra.mxu0 %v1249
    %v2603 = vpop.f32.mrf.mxu0
    %v2604 = vadd.f32 0.0, %v2603
    %v2605 = vpop.f32.mrf.mxu0
    %v2606 = vadd.f32 0.0, %v2605
    %v2607 = vpop.f32.mrf.mxu0
    %v2608 = vpop.f32.mrf.mxu0
    %2609 = vdwg.mxu0
    %2610 = vmatprep.subr.bf16.mxu0 %v2164
    %2611 = vmatpush1.bf16.msra.mxu0 %v2163
    %2612 = vmatprep.subr.bf16.mxu0 %v2158
    %2613 = vmatpush1.bf16.msra.mxu0 %v2157
    %2614 = vmatprep.subr.bf16.mxu0 %v2152
    %2615 = vmatpush1.bf16.msra.mxu0 %v2151
    %2616 = vmatprep.subr.bf16.mxu0 %v2146
    %2617 = vmatpush1.bf16.msra.mxu0 %v2145
    %2618 = vmatprep.subr.bf16.mxu0 %v2140
    %2619 = vmatpush1.bf16.msra.mxu0 %v2139
    %2620 = vmatprep.subr.bf16.mxu0 %v2134
    %2621 = vmatpush1.bf16.msra.mxu0 %v2133
    %2622 = vmatprep.subr.bf16.mxu0 %v2128
    %2623 = vmatpush1.bf16.msra.mxu0 %v2127
    %2624 = vmatprep.subr.bf16.mxu0 %v2122
    %2625 = vmatpush1.bf16.msra.mxu0 %v2121
    %2626 = vmatprep.subr.bf16.mxu0 %v2212
    %2627 = vmatpush2.bf16.msra.mxu0 %v2211
    %2628 = vmatprep.subr.bf16.mxu0 %v2206
    %2629 = vmatpush2.bf16.msra.mxu0 %v2205
    %2630 = vmatprep.subr.bf16.mxu0 %v2200
    %2631 = vmatpush2.bf16.msra.mxu0 %v2199
    %2632 = vmatprep.subr.bf16.mxu0 %v2194
    %2633 = vmatpush2.bf16.msra.mxu0 %v2193
    %2634 = vmatprep.subr.bf16.mxu0 %v2188
    %2635 = vmatpush2.bf16.msra.mxu0 %v2187
    %2636 = vmatprep.subr.bf16.mxu0 %v2182
    %2637 = vmatpush2.bf16.msra.mxu0 %v2181
    %2638 = vmatprep.subr.bf16.mxu0 %v2176
    %2639 = vmatpush2.bf16.msra.mxu0 %v2175
    %2640 = vmatprep.subr.bf16.mxu0 %v2170
    %2641 = vmatpush2.bf16.msra.mxu0 %v2169
    %2642 = vmatprep.mubr.bf16.mxu0 %v1252
    %2643 = vmatmul.mubr.bf16.gmra.mxu0 %v1251
    %v2644 = vpop.f32.mrf.mxu0
    %v2645 = vadd.f32 %v2604, %v2644
    %v2646 = vpop.f32.mrf.mxu0
    %v2647 = vadd.f32 %v2606, %v2646
    %v2648 = vpop.f32.mrf.mxu0
    %v2649 = vpop.f32.mrf.mxu0
    %2650 = vdwg.mxu0
    %v2747 = vunpack.c.l.b16 %v1130
    %v2748 = vunpack.c.h.b16 %v1130
    %v2749 = vunpack.c.l.b16 %v1131
    %v2750 = vunpack.c.h.b16 %v1131
    %v2751 = vunpack.c.l.b16 %v1132
    %v2752 = vunpack.c.h.b16 %v1132
    %v2753 = vunpack.c.l.b16 %v1133
    %v2754 = vunpack.c.h.b16 %v1133
    %v2755 = vunpack.c.l.b16 %v1134
    %v2756 = vunpack.c.h.b16 %v1134
    %v2757 = vunpack.c.l.b16 %v1135
    %v2758 = vunpack.c.h.b16 %v1135
    %v2759 = vunpack.c.l.b16 %v1136
    %v2760 = vunpack.c.h.b16 %v1136
    %v2761 = vunpack.c.l.b16 %v1137
    %v2762 = vunpack.c.h.b16 %v1137
    %v2763 = vunpack.c.l.b16 %v1138
    %v2764 = vunpack.c.h.b16 %v1138
    %v2765 = vunpack.c.l.b16 %v1139
    %v2766 = vunpack.c.h.b16 %v1139
    %v2767 = vunpack.c.l.b16 %v1140
    %v2768 = vunpack.c.h.b16 %v1140
    %v2769 = vunpack.c.l.b16 %v1141
    %v2770 = vunpack.c.h.b16 %v1141
    %v2771 = vunpack.c.l.b16 %v1142
    %v2772 = vunpack.c.h.b16 %v1142
    %v2773 = vunpack.c.l.b16 %v1143
    %v2774 = vunpack.c.h.b16 %v1143
    %v2775 = vunpack.c.l.b16 %v1144
    %v2776 = vunpack.c.h.b16 %v1144
    %v2777 = vunpack.c.l.b16 %v1145
    %v2778 = vunpack.c.h.b16 %v1145
    %v2779 = vunpack.c.l.b16 %v1146
    %v2780 = vunpack.c.h.b16 %v1146
    %v2781 = vunpack.c.l.b16 %v1147
    %v2782 = vunpack.c.h.b16 %v1147
    %v2783 = vunpack.c.l.b16 %v1148
    %v2784 = vunpack.c.h.b16 %v1148
    %v2785 = vunpack.c.l.b16 %v1149
    %v2786 = vunpack.c.h.b16 %v1149
    %v2787 = vunpack.c.l.b16 %v1150
    %v2788 = vunpack.c.h.b16 %v1150
    %v2789 = vunpack.c.l.b16 %v1151
    %v2790 = vunpack.c.h.b16 %v1151
    %v2791 = vunpack.c.l.b16 %v1152
    %v2792 = vunpack.c.h.b16 %v1152
    %v2793 = vunpack.c.l.b16 %v1153
    %v2794 = vunpack.c.h.b16 %v1153
    %v2795 = vunpack.c.l.b16 %v1154
    %v2796 = vunpack.c.h.b16 %v1154
    %v2797 = vunpack.c.l.b16 %v1155
    %v2798 = vunpack.c.h.b16 %v1155
    %v2799 = vunpack.c.l.b16 %v1156
    %v2800 = vunpack.c.h.b16 %v1156
    %v2801 = vunpack.c.l.b16 %v1157
    %v2802 = vunpack.c.h.b16 %v1157
    %v2803 = vunpack.c.l.b16 %v1158
    %v2804 = vunpack.c.h.b16 %v1158
    %v2805 = vunpack.c.l.b16 %v1159
    %v2806 = vunpack.c.h.b16 %v1159
    %v2807 = vunpack.c.l.b16 %v1160
    %v2808 = vunpack.c.h.b16 %v1160
    %v2809 = vunpack.c.l.b16 %v1161
    %v2810 = vunpack.c.h.b16 %v1161
    %v2811 = vunpack.c.l.b16 %v1162
    %v2812 = vunpack.c.h.b16 %v1162
    %v2813 = vunpack.c.l.b16 %v1163
    %v2814 = vunpack.c.h.b16 %v1163
    %v2815 = vunpack.c.l.b16 %v1164
    %v2816 = vunpack.c.h.b16 %v1164
    %v2817 = vunpack.c.l.b16 %v1165
    %v2818 = vunpack.c.h.b16 %v1165
    %v2819 = vunpack.c.l.b16 %v1166
    %v2820 = vunpack.c.h.b16 %v1166
    %v2821 = vunpack.c.l.b16 %v1167
    %v2822 = vunpack.c.h.b16 %v1167
    %v2823 = vunpack.c.l.b16 %v1168
    %v2824 = vunpack.c.h.b16 %v1168
    %v2825 = vunpack.c.l.b16 %v1169
    %v2826 = vunpack.c.h.b16 %v1169
    %v2827 = vunpack.c.l.b16 %v1170
    %v2828 = vunpack.c.h.b16 %v1170
    %v2829 = vunpack.c.l.b16 %v1171
    %v2830 = vunpack.c.h.b16 %v1171
    %v2831 = vunpack.c.l.b16 %v1172
    %v2832 = vunpack.c.h.b16 %v1172
    %v2833 = vunpack.c.l.b16 %v1173
    %v2834 = vunpack.c.h.b16 %v1173
    %v2835 = vunpack.c.l.b16 %v1174
    %v2836 = vunpack.c.h.b16 %v1174
    %v2837 = vunpack.c.l.b16 %v1175
    %v2838 = vunpack.c.h.b16 %v1175
    %v2839 = vunpack.c.l.b16 %v1176
    %v2840 = vunpack.c.h.b16 %v1176
    %v2841 = vunpack.c.l.b16 %v1177
    %v2842 = vunpack.c.h.b16 %v1177
    %v2843 = vunpack.c.l.b16 %v1178
    %v2844 = vunpack.c.h.b16 %v1178
    %v2845 = vunpack.c.l.b16 %v1179
    %v2846 = vunpack.c.h.b16 %v1179
    %v2847 = vunpack.c.l.b16 %v1180
    %v2848 = vunpack.c.h.b16 %v1180
    %v2849 = vunpack.c.l.b16 %v1181
    %v2850 = vunpack.c.h.b16 %v1181
    %v2851 = vunpack.c.l.b16 %v1182
    %v2852 = vunpack.c.h.b16 %v1182
    %v2853 = vunpack.c.l.b16 %v1183
    %v2854 = vunpack.c.h.b16 %v1183
    %v2855 = vunpack.c.l.b16 %v1184
    %v2856 = vunpack.c.h.b16 %v1184
    %v2857 = vunpack.c.l.b16 %v1185
    %v2858 = vunpack.c.h.b16 %v1185
    %v2859 = vunpack.c.l.b16 %v1186
    %v2860 = vunpack.c.h.b16 %v1186
    %v2861 = vunpack.c.l.b16 %v1187
    %v2862 = vunpack.c.h.b16 %v1187
    %v2863 = vunpack.c.l.b16 %v1188
    %v2864 = vunpack.c.h.b16 %v1188
    %v2865 = vunpack.c.l.b16 %v1189
    %v2866 = vunpack.c.h.b16 %v1189
    %v2867 = vunpack.c.l.b16 %v1190
    %v2868 = vunpack.c.h.b16 %v1190
    %v2869 = vunpack.c.l.b16 %v1191
    %v2870 = vunpack.c.h.b16 %v1191
    %v2871 = vunpack.c.l.b16 %v1192
    %v2872 = vunpack.c.h.b16 %v1192
    %v2873 = vunpack.c.l.b16 %v1193
    %v2874 = vunpack.c.h.b16 %v1193
    %v2875 = vunpack.c.l.b16 %v1194
    %v2876 = vunpack.c.h.b16 %v1194
    %v2877 = vunpack.c.l.b16 %v1195
    %v2878 = vunpack.c.h.b16 %v1195
    %v2879 = vunpack.c.l.b16 %v1196
    %v2880 = vunpack.c.h.b16 %v1196
    %v2881 = vunpack.c.l.b16 %v1197
    %v2882 = vunpack.c.h.b16 %v1197
    %v2883 = vunpack.c.l.b16 %v1198
    %v2884 = vunpack.c.h.b16 %v1198
    %v2885 = vunpack.c.l.b16 %v1199
    %v2886 = vunpack.c.h.b16 %v1199
    %v2887 = vunpack.c.l.b16 %v1200
    %v2888 = vunpack.c.h.b16 %v1200
    %v2889 = vunpack.c.l.b16 %v1201
    %v2890 = vunpack.c.h.b16 %v1201
    %v2891 = vunpack.c.l.b16 %v1202
    %v2892 = vunpack.c.h.b16 %v1202
    %v2893 = vunpack.c.l.b16 %v1203
    %v2894 = vunpack.c.h.b16 %v1203
    %v2895 = vunpack.c.l.b16 %v1204
    %v2896 = vunpack.c.h.b16 %v1204
    %v2897 = vunpack.c.l.b16 %v1205
    %v2898 = vunpack.c.h.b16 %v1205
    %v2899 = vunpack.c.l.b16 %v1206
    %v2900 = vunpack.c.h.b16 %v1206
    %v2901 = vunpack.c.l.b16 %v1207
    %v2902 = vunpack.c.h.b16 %v1207
    %v2903 = vunpack.c.l.b16 %v1208
    %v2904 = vunpack.c.h.b16 %v1208
    %v2905 = vunpack.c.l.b16 %v1209
    %v2906 = vunpack.c.h.b16 %v1209
    %v2907 = vunpack.c.l.b16 %v1210
    %v2908 = vunpack.c.h.b16 %v1210
    %v2909 = vunpack.c.l.b16 %v1211
    %v2910 = vunpack.c.h.b16 %v1211
    %v2911 = vunpack.c.l.b16 %v1212
    %v2912 = vunpack.c.h.b16 %v1212
    %v2913 = vunpack.c.l.b16 %v1213
    %v2914 = vunpack.c.h.b16 %v1213
    %v2915 = vunpack.c.l.b16 %v1214
    %v2916 = vunpack.c.h.b16 %v1214
    %v2917 = vunpack.c.l.b16 %v1215
    %v2918 = vunpack.c.h.b16 %v1215
    %v2919 = vunpack.c.l.b16 %v1216
    %v2920 = vunpack.c.h.b16 %v1216
    %v2921 = vunpack.c.l.b16 %v1217
    %v2922 = vunpack.c.h.b16 %v1217
    %v2923 = vunpack.c.l.b16 %v1218
    %v2924 = vunpack.c.h.b16 %v1218
    %v2925 = vunpack.c.l.b16 %v1219
    %v2926 = vunpack.c.h.b16 %v1219
    %v2927 = vunpack.c.l.b16 %v1220
    %v2928 = vunpack.c.h.b16 %v1220
    %v2929 = vunpack.c.l.b16 %v1221
    %v2930 = vunpack.c.h.b16 %v1221
    %v2931 = vunpack.c.l.b16 %v1222
    %v2932 = vunpack.c.h.b16 %v1222
    %v2933 = vunpack.c.l.b16 %v1223
    %v2934 = vunpack.c.h.b16 %v1223
    %v2935 = vunpack.c.l.b16 %v1224
    %v2936 = vunpack.c.h.b16 %v1224
    %v2937 = vunpack.c.l.b16 %v1225
    %v2938 = vunpack.c.h.b16 %v1225
    %v2939 = vpack.c.b16 %v2753, %v2747
    %v2940 = vpack.c.b16 %v2754, %v2748
    %v2941 = vpack.c.b16 %v2755, %v2749
    %v2942 = vpack.c.b16 %v2756, %v2750
    %v2943 = vpack.c.b16 %v2757, %v2751
    %v2944 = vpack.c.b16 %v2758, %v2752
    %v2945 = vpack.c.b16 %v2765, %v2759
    %v2946 = vpack.c.b16 %v2766, %v2760
    %v2947 = vpack.c.b16 %v2767, %v2761
    %v2948 = vpack.c.b16 %v2768, %v2762
    %v2949 = vpack.c.b16 %v2769, %v2763
    %v2950 = vpack.c.b16 %v2770, %v2764
    %v2951 = vpack.c.b16 %v2777, %v2771
    %v2952 = vpack.c.b16 %v2778, %v2772
    %v2953 = vpack.c.b16 %v2779, %v2773
    %v2954 = vpack.c.b16 %v2780, %v2774
    %v2955 = vpack.c.b16 %v2781, %v2775
    %v2956 = vpack.c.b16 %v2782, %v2776
    %v2957 = vpack.c.b16 %v2789, %v2783
    %v2958 = vpack.c.b16 %v2790, %v2784
    %v2959 = vpack.c.b16 %v2791, %v2785
    %v2960 = vpack.c.b16 %v2792, %v2786
    %v2961 = vpack.c.b16 %v2793, %v2787
    %v2962 = vpack.c.b16 %v2794, %v2788
    %v2963 = vpack.c.b16 %v2801, %v2795
    %v2964 = vpack.c.b16 %v2802, %v2796
    %v2965 = vpack.c.b16 %v2803, %v2797
    %v2966 = vpack.c.b16 %v2804, %v2798
    %v2967 = vpack.c.b16 %v2805, %v2799
    %v2968 = vpack.c.b16 %v2806, %v2800
    %v2969 = vpack.c.b16 %v2813, %v2807
    %v2970 = vpack.c.b16 %v2814, %v2808
    %v2971 = vpack.c.b16 %v2815, %v2809
    %v2972 = vpack.c.b16 %v2816, %v2810
    %v2973 = vpack.c.b16 %v2817, %v2811
    %v2974 = vpack.c.b16 %v2818, %v2812
    %v2975 = vpack.c.b16 %v2825, %v2819
    %v2976 = vpack.c.b16 %v2826, %v2820
    %v2977 = vpack.c.b16 %v2827, %v2821
    %v2978 = vpack.c.b16 %v2828, %v2822
    %v2979 = vpack.c.b16 %v2829, %v2823
    %v2980 = vpack.c.b16 %v2830, %v2824
    %v2981 = vpack.c.b16 %v2837, %v2831
    %v2982 = vpack.c.b16 %v2838, %v2832
    %v2983 = vpack.c.b16 %v2839, %v2833
    %v2984 = vpack.c.b16 %v2840, %v2834
    %v2985 = vpack.c.b16 %v2841, %v2835
    %v2986 = vpack.c.b16 %v2842, %v2836
    %v2987 = vpack.c.b16 %v2849, %v2843
    %v2988 = vpack.c.b16 %v2850, %v2844
    %v2989 = vpack.c.b16 %v2851, %v2845
    %v2990 = vpack.c.b16 %v2852, %v2846
    %v2991 = vpack.c.b16 %v2853, %v2847
    %v2992 = vpack.c.b16 %v2854, %v2848
    %v2993 = vpack.c.b16 %v2861, %v2855
    %v2994 = vpack.c.b16 %v2862, %v2856
    %v2995 = vpack.c.b16 %v2863, %v2857
    %v2996 = vpack.c.b16 %v2864, %v2858
    %v2997 = vpack.c.b16 %v2865, %v2859
    %v2998 = vpack.c.b16 %v2866, %v2860
    %v2999 = vpack.c.b16 %v2873, %v2867
    %v3000 = vpack.c.b16 %v2874, %v2868
    %v3001 = vpack.c.b16 %v2875, %v2869
    %v3002 = vpack.c.b16 %v2876, %v2870
    %v3003 = vpack.c.b16 %v2877, %v2871
    %v3004 = vpack.c.b16 %v2878, %v2872
    %v3005 = vpack.c.b16 %v2885, %v2879
    %v3006 = vpack.c.b16 %v2886, %v2880
    %v3007 = vpack.c.b16 %v2887, %v2881
    %v3008 = vpack.c.b16 %v2888, %v2882
    %v3009 = vpack.c.b16 %v2889, %v2883
    %v3010 = vpack.c.b16 %v2890, %v2884
    %v3011 = vpack.c.b16 %v2897, %v2891
    %v3012 = vpack.c.b16 %v2898, %v2892
    %v3013 = vpack.c.b16 %v2899, %v2893
    %v3014 = vpack.c.b16 %v2900, %v2894
    %v3015 = vpack.c.b16 %v2901, %v2895
    %v3016 = vpack.c.b16 %v2902, %v2896
    %v3017 = vpack.c.b16 %v2909, %v2903
    %v3018 = vpack.c.b16 %v2910, %v2904
    %v3019 = vpack.c.b16 %v2911, %v2905
    %v3020 = vpack.c.b16 %v2912, %v2906
    %v3021 = vpack.c.b16 %v2913, %v2907
    %v3022 = vpack.c.b16 %v2914, %v2908
    %v3023 = vpack.c.b16 %v2921, %v2915
    %v3024 = vpack.c.b16 %v2922, %v2916
    %v3025 = vpack.c.b16 %v2923, %v2917
    %v3026 = vpack.c.b16 %v2924, %v2918
    %v3027 = vpack.c.b16 %v2925, %v2919
    %v3028 = vpack.c.b16 %v2926, %v2920
    %v3029 = vpack.c.b16 %v2933, %v2927
    %v3030 = vpack.c.b16 %v2934, %v2928
    %v3031 = vpack.c.b16 %v2935, %v2929
    %v3032 = vpack.c.b16 %v2936, %v2930
    %v3033 = vpack.c.b16 %v2937, %v2931
    %v3034 = vpack.c.b16 %v2938, %v2932
    %3131 = vmatprep.subr.bf16.mxu0 %v2982
    %3132 = vmatpush1.bf16.msra.mxu0 %v2981
    %3133 = vmatprep.subr.bf16.mxu0 %v2976
    %3134 = vmatpush1.bf16.msra.mxu0 %v2975
    %3135 = vmatprep.subr.bf16.mxu0 %v2970
    %3136 = vmatpush1.bf16.msra.mxu0 %v2969
    %3137 = vmatprep.subr.bf16.mxu0 %v2964
    %3138 = vmatpush1.bf16.msra.mxu0 %v2963
    %3139 = vmatprep.subr.bf16.mxu0 %v2958
    %3140 = vmatpush1.bf16.msra.mxu0 %v2957
    %3141 = vmatprep.subr.bf16.mxu0 %v2952
    %3142 = vmatpush1.bf16.msra.mxu0 %v2951
    %3143 = vmatprep.subr.bf16.mxu0 %v2946
    %3144 = vmatpush1.bf16.msra.mxu0 %v2945
    %3145 = vmatprep.subr.bf16.mxu0 %v2940
    %3146 = vmatpush1.bf16.msra.mxu0 %v2939
    %3147 = vmatprep.subr.bf16.mxu0 %v3030
    %3148 = vmatpush2.bf16.msra.mxu0 %v3029
    %3149 = vmatprep.subr.bf16.mxu0 %v3024
    %3150 = vmatpush2.bf16.msra.mxu0 %v3023
    %3151 = vmatprep.subr.bf16.mxu0 %v3018
    %3152 = vmatpush2.bf16.msra.mxu0 %v3017
    %3153 = vmatprep.subr.bf16.mxu0 %v3012
    %3154 = vmatpush2.bf16.msra.mxu0 %v3011
    %3155 = vmatprep.subr.bf16.mxu0 %v3006
    %3156 = vmatpush2.bf16.msra.mxu0 %v3005
    %3157 = vmatprep.subr.bf16.mxu0 %v3000
    %3158 = vmatpush2.bf16.msra.mxu0 %v2999
    %3159 = vmatprep.subr.bf16.mxu0 %v2994
    %3160 = vmatpush2.bf16.msra.mxu0 %v2993
    %3161 = vmatprep.subr.bf16.mxu0 %v2988
    %3162 = vmatpush2.bf16.msra.mxu0 %v2987
    %3163 = vmatprep.mubr.bf16.mxu0 %v1129
    %3164 = vmatmul.mubr.bf16.gmra.mxu0 %v1128
    %v3165 = vpop.f32.mrf.mxu0
    %v3166 = vadd.f32 %v2481, %v3165
    %v3167 = vpop.f32.mrf.mxu0
    %v3168 = vadd.f32 %v2483, %v3167
    %v3169 = vpop.f32.mrf.mxu0
    %v3170 = vpop.f32.mrf.mxu0
    %3171 = vdwg.mxu0
    %3172 = vmatprep.subr.bf16.mxu0 %v2984
    %3173 = vmatpush1.bf16.msra.mxu0 %v2983
    %3174 = vmatprep.subr.bf16.mxu0 %v2978
    %3175 = vmatpush1.bf16.msra.mxu0 %v2977
    %3176 = vmatprep.subr.bf16.mxu0 %v2972
    %3177 = vmatpush1.bf16.msra.mxu0 %v2971
    %3178 = vmatprep.subr.bf16.mxu0 %v2966
    %3179 = vmatpush1.bf16.msra.mxu0 %v2965
    %3180 = vmatprep.subr.bf16.mxu0 %v2960
    %3181 = vmatpush1.bf16.msra.mxu0 %v2959
    %3182 = vmatprep.subr.bf16.mxu0 %v2954
    %3183 = vmatpush1.bf16.msra.mxu0 %v2953
    %3184 = vmatprep.subr.bf16.mxu0 %v2948
    %3185 = vmatpush1.bf16.msra.mxu0 %v2947
    %3186 = vmatprep.subr.bf16.mxu0 %v2942
    %3187 = vmatpush1.bf16.msra.mxu0 %v2941
    %3188 = vmatprep.subr.bf16.mxu0 %v3032
    %3189 = vmatpush2.bf16.msra.mxu0 %v3031
    %3190 = vmatprep.subr.bf16.mxu0 %v3026
    %3191 = vmatpush2.bf16.msra.mxu0 %v3025
    %3192 = vmatprep.subr.bf16.mxu0 %v3020
    %3193 = vmatpush2.bf16.msra.mxu0 %v3019
    %3194 = vmatprep.subr.bf16.mxu0 %v3014
    %3195 = vmatpush2.bf16.msra.mxu0 %v3013
    %3196 = vmatprep.subr.bf16.mxu0 %v3008
    %3197 = vmatpush2.bf16.msra.mxu0 %v3007
    %3198 = vmatprep.subr.bf16.mxu0 %v3002
    %3199 = vmatpush2.bf16.msra.mxu0 %v3001
    %3200 = vmatprep.subr.bf16.mxu0 %v2996
    %3201 = vmatpush2.bf16.msra.mxu0 %v2995
    %3202 = vmatprep.subr.bf16.mxu0 %v2990
    %3203 = vmatpush2.bf16.msra.mxu0 %v2989
    %3204 = vmatprep.mubr.bf16.mxu0 %v1129
    %3205 = vmatmul.mubr.bf16.gmra.mxu0 %v1128
    %v3206 = vpop.f32.mrf.mxu0
    %v3207 = vadd.f32 %v2563, %v3206
    %v3208 = vpop.f32.mrf.mxu0
    %v3209 = vadd.f32 %v2565, %v3208
    %v3210 = vpop.f32.mrf.mxu0
    %v3211 = vpop.f32.mrf.mxu0
    %3212 = vdwg.mxu0
    %3213 = vmatprep.subr.bf16.mxu0 %v2986
    %3214 = vmatpush1.bf16.msra.mxu0 %v2985
    %3215 = vmatprep.subr.bf16.mxu0 %v2980
    %3216 = vmatpush1.bf16.msra.mxu0 %v2979
    %3217 = vmatprep.subr.bf16.mxu0 %v2974
    %3218 = vmatpush1.bf16.msra.mxu0 %v2973
    %3219 = vmatprep.subr.bf16.mxu0 %v2968
    %3220 = vmatpush1.bf16.msra.mxu0 %v2967
    %3221 = vmatprep.subr.bf16.mxu0 %v2962
    %3222 = vmatpush1.bf16.msra.mxu0 %v2961
    %3223 = vmatprep.subr.bf16.mxu0 %v2956
    %3224 = vmatpush1.bf16.msra.mxu0 %v2955
    %3225 = vmatprep.subr.bf16.mxu0 %v2950
    %3226 = vmatpush1.bf16.msra.mxu0 %v2949
    %3227 = vmatprep.subr.bf16.mxu0 %v2944
    %3228 = vmatpush1.bf16.msra.mxu0 %v2943
    %3229 = vmatprep.subr.bf16.mxu0 %v3034
    %3230 = vmatpush2.bf16.msra.mxu0 %v3033
    %3231 = vmatprep.subr.bf16.mxu0 %v3028
    %3232 = vmatpush2.bf16.msra.mxu0 %v3027
    %3233 = vmatprep.subr.bf16.mxu0 %v3022
    %3234 = vmatpush2.bf16.msra.mxu0 %v3021
    %3235 = vmatprep.subr.bf16.mxu0 %v3016
    %3236 = vmatpush2.bf16.msra.mxu0 %v3015
    %3237 = vmatprep.subr.bf16.mxu0 %v3010
    %3238 = vmatpush2.bf16.msra.mxu0 %v3009
    %3239 = vmatprep.subr.bf16.mxu0 %v3004
    %3240 = vmatpush2.bf16.msra.mxu0 %v3003
    %3241 = vmatprep.subr.bf16.mxu0 %v2998
    %3242 = vmatpush2.bf16.msra.mxu0 %v2997
    %3243 = vmatprep.subr.bf16.mxu0 %v2992
    %3244 = vmatpush2.bf16.msra.mxu0 %v2991
    %3245 = vmatprep.mubr.bf16.mxu0 %v1129
    %3246 = vmatmul.mubr.bf16.gmra.mxu0 %v1128
    %v3247 = vpop.f32.mrf.mxu0
    %v3248 = vadd.f32 %v2645, %v3247
    %v3249 = vpop.f32.mrf.mxu0
    %v3250 = vadd.f32 %v2647, %v3249
    %v3251 = vpop.f32.mrf.mxu0
    %v3252 = vpop.f32.mrf.mxu0
    %3253 = vdwg.mxu0
    %v3254 = vld [vmem:[%s18] sm:$0x3f]
    %v3256 = vlaneseq
    %v3257 = vshrl.u32 %v3256, 7
    %v3258 = vsub.s32 0, %v3257
    %v3259 = vrot.slane %v3254, %v3258
    %v3260 = vlaneseq
    %v3261 = vshrl.u32 %v3260, 7
    %v3262 = vsub.s32 1, %v3261
    %v3263 = vrot.slane %v3254, %v3262
    %v3264 = vlaneseq
    %v3265 = vshrl.u32 %v3264, 7
    %v3266 = vsub.s32 2, %v3265
    %v3267 = vrot.slane %v3254, %v3266
    %v3268 = vlaneseq
    %v3269 = vshrl.u32 %v3268, 7
    %v3270 = vsub.s32 3, %v3269
    %v3271 = vrot.slane %v3254, %v3270
    %v3272 = vlaneseq
    %v3273 = vshrl.u32 %v3272, 7
    %v3274 = vsub.s32 4, %v3273
    %v3275 = vrot.slane %v3254, %v3274
    %v3276 = vlaneseq
    %v3277 = vshrl.u32 %v3276, 7
    %v3278 = vsub.s32 5, %v3277
    %v3279 = vrot.slane %v3254, %v3278
    %v3286 = vadd.f32 %v3166, %v3259
    %v3287 = vadd.f32 %v3168, %v3263
    %v3288 = vadd.f32 %v3207, %v3267
    %v3289 = vadd.f32 %v3209, %v3271
    %v3290 = vadd.f32 %v3248, %v3275
    %v3291 = vadd.f32 %v3250, %v3279
    %v3292 = vtanh.pop %v3286
    %v3293 = vtanh.pop %v3287
    %v3294 = vtanh.pop %v3288
    %v3295 = vtanh.pop %v3289
    %v3296 = vtanh.pop %v3290
    %v3297 = vtanh.pop %v3291
    %v3304 = vcombine.low %v3292, %v3293
    %v3305 = vcombine.low %v3294, %v3295
    %v3307 = vunpack.c.l.s4 1983009808
    %v3308 = vunpack.c.0.s8 %v3307
    %v3309 = vlaneseq
    %v3310 = vshrl.u32 %v3309, 7
    %v3311 = vsub.s32 %v3308, %v3310
    %v3312 = vrot.slane %v3304, %v3311
    %v3314 = vunpack.c.l.s4 1983009808
    %v3315 = vunpack.c.0.s8 %v3314
    %v3316 = vlaneseq
    %v3317 = vshrl.u32 %v3316, 7
    %v3318 = vsub.s32 %v3315, %v3317
    %v3319 = vrot.slane %v3305, %v3318
    %v3320 = vcombine.low %v3312, %v3319
    %v3321 = vcombine.low %v3296, %v3297
    %v3323 = vunpack.c.l.s4 1983009808
    %v3324 = vunpack.c.0.s8 %v3323
    %v3325 = vlaneseq
    %v3326 = vshrl.u32 %v3325, 7
    %v3327 = vsub.s32 %v3324, %v3326
    %v3328 = vrot.slane %v3321, %v3327
    %3331 = vst [vmem:[%s21] sm:$0xff] %v3320
    %3332 = vst [vmem:[%s21 + $0x8] sm:$0xf] %v3328
    // Predicated region
    $region102: #{_lambda_.1} parent=1 // pred_check
      _
    $region103: #{_lambda_.1} parent=1 // pred_check_branch
      %3334 = sbr.rel (0) target = $region105
    $region104: #{_lambda_.1} parent=1 // pred_region
      _
    $region105: #{_lambda_.1} parent=1 // pred_fallthru
      _
    // Predicated region
    $region106: #{_lambda_.1} parent=1 // pred_check
      _
    $region107: #{_lambda_.1} parent=1 // pred_check_branch
      %3336 = sbr.rel (0) target = $region109
    $region108: #{_lambda_.1} parent=1 // pred_region
      _
    $region109: #{_lambda_.1} parent=1 // pred_fallthru
      _
    // Predicated region
    $region110: #{_lambda_.1} parent=1 // pred_check
      _
    $region111: #{_lambda_.1} parent=1 // pred_check_branch
      %3338 = sbr.rel (0) target = $region113
    $region112: #{_lambda_.1} parent=1 // pred_region
      _
    $region113: #{_lambda_.1} parent=1 // pred_fallthru
      _
    // Predicated region
    $region114: #{_lambda_.1} parent=1 // pred_check
      _
    $region115: #{_lambda_.1} parent=1 // pred_check_branch
      %3340 = sbr.rel (0) target = $region117
    $region116: #{_lambda_.1} parent=1 // pred_region
      _
    $region117: #{_lambda_.1} parent=1 // pred_fallthru
      _
    // Predicated region
    $region118: #{_lambda_.1} parent=1 // pred_check
      _
    $region119: #{_lambda_.1} parent=1 // pred_check_branch
      %3342 = sbr.rel (0) target = $region121
    $region120: #{_lambda_.1} parent=1 // pred_region
      _
    $region121: #{_lambda_.1} parent=1 // pred_fallthru
      _
    // Predicated region
    $region122: #{_lambda_.1} parent=1 // pred_check
      _
    $region123: #{_lambda_.1} parent=1 // pred_check_branch
      %3344 = sbr.rel (0) target = $region125
    $region124: #{_lambda_.1} parent=1 // pred_region
      _
    $region125: #{_lambda_.1} parent=1 // pred_fallthru
      _
    %3345 = vsyncpa [#allocation3], 1
    %3346 = vsyncpa [#allocation5], 1
    %3347 = vsyncpa [#allocation8], 1
    %3348 = vsyncpa [#allocation11], 1

</llo_original>
